<compile_context>
chip_gen: v7x
topology: tpu7x:2x2x1
jax: 0.10.0
libtpu: 0.0.40
codegen_flags: <defaults>
</compile_context>

<pallas_src>
import functools

import numpy as np

import jax
import jax.numpy as jnp
from jax.experimental import pallas as pl
from jax.experimental.pallas import tpu as pltpu


def _round_up(x, m):
    return (x + m - 1) // m * m


def _vmem_capacity_bytes():
    try:
        return int(pltpu.get_tpu_info().vmem_capacity_bytes)
    except Exception:
        return 64 * 1024 * 1024  # smallest across v5e/v6e/v7x -> safe default


# ---------------------------------------------------------------------------
# Kernel 1: merged-phase polyphase transposed-conv + partial BN statistics.
#   xm_ref : (1, Cin, TR)            main flat-input block (lane-dense)
#   xh_ref : (1, Cin, HALO)          halo block (next HALO elements of the stream)
#   w_ref  : (n_taps, Cout_t, Cin)   per-(phase, tap) weight matrices
#   y_ref  : (1, nph, Cout_t, TR)    conv output tile (bf16 store, lane-dense)
#   st_ref : (1, 1, nph, Cout_t, 2)  per-tile [sum, centered M2] (f32)
# Static metadata (closed over): taps[ph] = ((w_index, flat_offset), ...).
# ---------------------------------------------------------------------------
def _convt_stats_kernel(xm_ref, xh_ref, w_ref, y_ref, st_ref, *, taps, tr, wp, wop, lo):
    rt = pl.program_id(1)
    xcat = jnp.concatenate([xm_ref[0], xh_ref[0]], axis=-1)        # (Cin, TR+HALO)

    # Validity mask: drop flat-padding ("garbage") columns and tail padding.
    pos = rt * tr + jax.lax.broadcasted_iota(jnp.int32, (1, tr), 1)
    mask = jnp.logical_and(pos % wp < wop, pos < lo).astype(jnp.float32)   # (1, TR)
    cnt = jnp.maximum(jnp.sum(mask, axis=1, keepdims=True), 1.0)           # (1, 1)

    for ph in range(len(taps)):
        acc = None
        for (wi, off) in taps[ph]:
            contrib = jnp.dot(w_ref[wi], xcat[:, off:off + tr],
                              preferred_element_type=jnp.float32)          # (Cout_t, TR)
            acc = contrib if acc is None else acc + contrib
        if acc is None:
            acc = jnp.zeros(y_ref.shape[2:], jnp.float32)

        y_ref[0, ph] = acc.astype(y_ref.dtype)

        am = acc * mask
        ssum = jnp.sum(am, axis=1, keepdims=True)                          # (Cout_t, 1)
        dev = (acc - ssum / cnt) * mask
        m2 = jnp.sum(dev * dev, axis=1, keepdims=True)                     # (Cout_t, 1)
        st_ref[0, 0, ph] = jnp.concatenate([ssum, m2], axis=1)             # one store


# ---------------------------------------------------------------------------
# Kernel 2: fused BatchNorm(scale/shift) + ReLU epilogue, in place (bf16).
# ---------------------------------------------------------------------------
def _bn_relu_kernel(y_ref, scale_ref, shift_ref, o_ref):
    x = y_ref[0].astype(jnp.float32)                                       # (nph, Cout, TR)
    o_ref[0] = jnp.maximum(x * scale_ref[...] + shift_ref[...], 0.0).astype(o_ref.dtype)


@functools.partial(
    jax.jit,
    static_argnames=("stride", "padding", "output_padding", "eps", "inner", "mxu_dtype"),
)
def decoder_block(x_nchw, weight, gamma, beta, *, stride, padding,
                  output_padding=0, eps=1e-5, inner=True, mxu_dtype=jnp.bfloat16):
    """Forward pass of DecoderBlock.

    x_nchw : (N, Cin, H, W)      NCHW (PyTorch convention).
    weight : (Cin, Cout, K, K)   nn.ConvTranspose2d weight (bias=False).
    gamma, beta : (Cout,)        BatchNorm2d affine parameters.
    Returns (N, Cout, Ho, Wo) NCHW in x's dtype.
    """
    N, Cin, H, W = x_nchw.shape
    wc_in, Cout, KH, KW = weight.shape
    assert wc_in == Cin and KH == KW, "square kernel expected"
    K, s = KH, stride
    out_dtype = x_nchw.dtype

    Ho = (H - 1) * s - 2 * padding + K + output_padding
    Wo = (W - 1) * s - 2 * padding + K + output_padding
    # TODO(synk): phases with unequal output extents (Ho or Wo not divisible by
    # stride) would need ragged per-phase handling; not needed for this module's configs.
    assert Ho % s == 0 and Wo % s == 0, "Ho/Wo must be divisible by stride"
    Hop, Wop = Ho // s, Wo // s
    nph = s * s

    # ---- polyphase geometry (square kernel / stride / padding) --------------
    r = [(p + padding) % s for p in range(s)]
    c = [(p + padding) // s for p in range(s)]
    tcnt = [len(range(r[p], K, s)) for p in range(s)]
    T = max(tcnt) if max(tcnt) > 0 else 1
    pad_lo = max(0, T - 1 - min(c))
    pad_hi_h = max(0, max(c) + Hop - H)
    pad_hi_w = max(0, max(c) + Wop - W)
    A = [c[p] - (T - 1) + pad_lo for p in range(s)]

    Hp, Wp = H + pad_lo + pad_hi_h, W + pad_lo + pad_hi_w
    Lo = Hop * Wp                                # per-image flat output length (incl. garbage cols)
    max_off = (max(A) + T - 1) * Wp + (max(A) + T - 1)

    # ---- per-(phase, tap) weight matrices + static tap routing ---------------
    w_list, taps = [], []
    for p in range(s):
        for q in range(s):
            ph_taps = []
            for u in range(T):
                th = T - 1 - u
                if th >= tcnt[p]:
                    continue
                for v in range(T):
                    tw = T - 1 - v
                    if tw >= tcnt[q]:
                        continue
                    kh, kw = r[p] + s * th, r[q] + s * tw
                    off = (A[p] + u) * Wp + (A[q] + v)
                    ph_taps.append((len(w_list), off))
                    w_list.append(weight[:, :, kh, kw].T)          # (Cout, Cin)
            taps.append(tuple(ph_taps))
    taps = tuple(taps)
    if w_list:
        w_taps = jnp.stack(w_list, axis=0).astype(mxu_dtype)       # (n_taps, Cout, Cin)
    else:
        w_taps = jnp.zeros((1, Cout, Cin), mxu_dtype)
    n_taps = w_taps.shape[0]

    # ---- generation-aware tile sizing ----------------------------------------
    itm = jnp.dtype(mxu_dtype).itemsize
    store_dtype = jnp.float32 if jnp.dtype(mxu_dtype) == jnp.dtype(jnp.float32) else jnp.bfloat16
    st_itm = jnp.dtype(store_dtype).itemsize

    cout_t = 256 if (Cout > 256 and Cout % 256 == 0) else Cout
    n_ct = Cout // cout_t

    HALO = _round_up(max(max_off, 1), 128)
    vmem_phys = _vmem_capacity_bytes()
    ws_budget = min(24 * 2 ** 20, vmem_phys // 3)

    def _k1_bytes(tr):
        inp = 2 * Cin * (tr + HALO) * itm                    # double-buffered main + halo
        wgt = 2 * n_taps * cout_t * Cin * itm                # double-buffered weights
        yout = 2 * nph * cout_t * tr * st_itm                # double-buffered y tile
        acc = cout_t * tr * 4                                # live f32 accumulator
        tmp = Cin * (tr + HALO) * itm + T * T * Cin * tr * itm   # xcat + live tap slices
        sts = 2 * nph * cout_t * 2 * 4
        return inp + wgt + yout + acc + tmp + sts

    def _k2_bytes(tr):
        return 4 * nph * Cout * tr * st_itm + Cout * 8       # in + out, double-buffered

    tr_cap = min(4096, _round_up(Lo, HALO))
    TR = HALO
    cand = HALO
    while cand <= tr_cap:
        if max(_k1_bytes(cand), _k2_bytes(cand)) <= ws_budget:
            TR = cand
        cand += HALO
    n_rt = -(-Lo // TR)
    Lo_pad = n_rt * TR
    Lf_pad = (n_rt + 1) * TR
    halo_step = TR // HALO
    est = max(_k1_bytes(TR), _k2_bytes(TR))
    vmem_limit = int(min(vmem_phys * 3 // 4, max(32 * 2 ** 20, 2 * est)))

    # ---- pack input: spatial pad, flatten per image (free), pad flat tail ----
    xp = jnp.pad(x_nchw.astype(mxu_dtype),
                 ((0, 0), (0, 0), (pad_lo, pad_hi_h), (pad_lo, pad_hi_w)))
    xf = xp.reshape(N, Cin, Hp * Wp)
    xf = jnp.pad(xf, ((0, 0), (0, 0), (0, Lf_pad - Hp * Wp)))

    kernel1 = functools.partial(_convt_stats_kernel, taps=taps, tr=TR, wp=Wp, wop=Wop, lo=Lo)

    cparams1 = pltpu.CompilerParams(
        dimension_semantics=("parallel", "parallel", "parallel"),
        vmem_limit_bytes=vmem_limit,
    )

    n_valid_taps = sum(len(t) for t in taps)
    flops = 2 * N * Lo_pad * Cin * Cout * max(n_valid_taps, 1)
    bytes_accessed = int(xf.size * itm * (1.0 + HALO / TR)
                         + w_taps.size * itm * n_ct
                         + N * nph * Cout * Lo_pad * st_itm
                         + N * n_rt * nph * Cout * 2 * 4)

    y, stats = pl.pallas_call(
        kernel1,
        grid=(N, n_rt, n_ct),
        in_specs=[
            pl.BlockSpec((1, Cin, TR), lambda n, rt, ct: (n, 0, rt)),
            pl.BlockSpec((1, Cin, HALO), lambda n, rt, ct: (n, 0, (rt + 1) * halo_step)),
            pl.BlockSpec((n_taps, cout_t, Cin), lambda n, rt, ct: (0, ct, 0)),
        ],
        out_specs=[
            pl.BlockSpec((1, nph, cout_t, TR), lambda n, rt, ct: (n, 0, ct, rt)),
            pl.BlockSpec((1, 1, nph, cout_t, 2), lambda n, rt, ct: (n, rt, 0, ct, 0)),
        ],
        out_shape=[
            jax.ShapeDtypeStruct((N, nph, Cout, Lo_pad), store_dtype),
            jax.ShapeDtypeStruct((N, n_rt, nph, Cout, 2), jnp.float32),
        ],
        compiler_params=cparams1,
        cost_estimate=pl.CostEstimate(flops=int(flops), transcendentals=0,
                                      bytes_accessed=bytes_accessed),
    )(xf, xf, w_taps)

    if inner:
        # Exact parallel-variance combine of per-tile (count, sum, M2) in f32.
        ls = np.arange(Lo)
        valid = (ls % Wp) < Wop
        counts = np.array([valid[rt * TR:(rt + 1) * TR].sum() for rt in range(n_rt)],
                          np.float32)
        total = float(N * nph) * float(counts.sum())          # == N * Ho * Wo
        cnt = jnp.asarray(counts).reshape(1, n_rt, 1, 1)

        sums = stats[..., 0]                                   # (N, n_rt, nph, Cout)
        m2 = stats[..., 1]
        mean_g = jnp.sum(sums, axis=(0, 1, 2)) / total         # (Cout,)
        mean_t = sums / jnp.maximum(cnt, 1.0)
        var_g = (jnp.sum(m2, axis=(0, 1, 2))
                 + jnp.sum(cnt * (mean_t - mean_g) ** 2, axis=(0, 1, 2))) / total
        var_g = jnp.maximum(var_g, 0.0)
        scale = gamma.astype(jnp.float32) * jax.lax.rsqrt(var_g + eps)
        shift = beta.astype(jnp.float32) - mean_g * scale

        cparams2 = pltpu.CompilerParams(
            dimension_semantics=("parallel", "parallel"),
            vmem_limit_bytes=vmem_limit,
        )
        y = pl.pallas_call(
            _bn_relu_kernel,
            grid=(N, n_rt),
            in_specs=[
                pl.BlockSpec((1, nph, Cout, TR), lambda n, rt: (n, 0, 0, rt)),
                pl.BlockSpec((Cout, 1), lambda n, rt: (0, 0)),
                pl.BlockSpec((Cout, 1), lambda n, rt: (0, 0)),
            ],
            out_specs=pl.BlockSpec((1, nph, Cout, TR), lambda n, rt: (n, 0, 0, rt)),
            out_shape=jax.ShapeDtypeStruct((N, nph, Cout, Lo_pad), store_dtype),
            input_output_aliases={0: 0},
            compiler_params=cparams2,
        )(y, scale.reshape(Cout, 1), shift.reshape(Cout, 1))

    # TODO(synk): BatchNorm2d running_mean / running_var buffer updates (module
    # training-state side effect) are not modeled; only the forward output is.

    # ---- un-phase to NCHW (single XLA transpose of the bf16 result) ----------
    # TODO(synk): for s == 2 this transpose could be folded into kernel 2's
    # out_spec via the 2x bf16 -> u32 pack trick; kept in XLA for generality.
    y = y[:, :, :, :Lo].reshape(N, s, s, Cout, Hop, Wp)[..., :Wop]
    out = jnp.transpose(y, (0, 3, 4, 1, 5, 2)).reshape(N, Cout, Ho, Wo)
    return out.astype(out_dtype)


def _reference(x_nchw, weight, gamma, beta, *, stride, padding, output_padding,
               eps=1e-5, inner=True):
    """Plain-JAX f32 reference (ConvTranspose2d -> BN(train) -> ReLU)."""
    N, Cin, H, W = x_nchw.shape
    _, Cout, kH, kW = weight.shape
    x = jnp.transpose(x_nchw, (0, 2, 3, 1)).astype(jnp.float32)
    w_conv = jnp.transpose(weight[:, :, ::-1, ::-1], (2, 3, 0, 1)).astype(jnp.float32)
    y = jax.lax.conv_general_dilated(
        x, w_conv, window_strides=(1, 1),
        padding=[(kH - 1 - padding, kH - 1 - padding + output_padding),
                 (kW - 1 - padding, kW - 1 - padding + output_padding)],
        lhs_dilation=(stride, stride),
        dimension_numbers=("NHWC", "HWIO", "NHWC"),
        precision=jax.lax.Precision.HIGHEST)
    if inner:
        mean = jnp.mean(y, axis=(0, 1, 2), keepdims=True)
        var = jnp.mean((y - mean) ** 2, axis=(0, 1, 2), keepdims=True)
        y = (y - mean) * jax.lax.rsqrt(var + eps)
        y = y * gamma.reshape(1, 1, 1, Cout) + beta.reshape(1, 1, 1, Cout)
        y = jnp.maximum(y, 0.0)
    return jnp.transpose(y, (0, 3, 1, 2))


if __name__ == "__main__":
    # DecoderBlock(in_dim=4, out_dim=8, kernel=4, stride=2, padding=1, add=0, inner=True)
    N, Cin, H, W = 2, 4, 16, 16
    Cout, K, stride, padding, add = 8, 4, 2, 1, 0

    key = jax.random.PRNGKey(0)
    k1, k2, k3, k4 = jax.random.split(key, 4)
    x = jax.random.normal(k1, (N, Cin, H, W), jnp.float32)
    weight = jax.random.normal(k2, (Cin, Cout, K, K), jnp.float32) * 0.1  # bias=False
    gamma = jax.random.uniform(k3, (Cout,), jnp.float32, 0.5, 1.5)
    beta = jax.random.normal(k4, (Cout,), jnp.float32) * 0.1

    ref = _reference(x, weight, gamma, beta, stride=stride, padding=padding,
                     output_padding=add, inner=True)

    Ho = (H - 1) * stride - 2 * padding + K + add
    Wo = (W - 1) * stride - 2 * padding + K + add

    # bf16 MXU operands + bf16 intermediate storage (recommended path).
    out = decoder_block(x, weight, gamma, beta, stride=stride, padding=padding,
                        output_padding=add, inner=True)
    out = jax.block_until_ready(out)
    assert out.shape == (N, Cout, Ho, Wo), out.shape
    err_bf16 = float(jnp.max(jnp.abs(out - ref)))
    assert err_bf16 < 1e-1, f"bf16 path mismatch: {err_bf16}"

    # f32 MXU operands / f32 storage: tighter numerical check of the algorithm.
    out32 = decoder_block(x, weight, gamma, beta, stride=stride, padding=padding,
                          output_padding=add, inner=True, mxu_dtype=jnp.float32)
    out32 = jax.block_until_ready(out32)
    err_f32 = float(jnp.max(jnp.abs(out32 - ref)))
    assert err_f32 < 2e-2, f"f32 path mismatch: {err_f32}"

    print("KERNEL_OK")
</pallas_src>

<mosaic_0001>
module attributes {stable_mosaic.version = 11 : i64} {
  func.func @_convt_stats_kernel(%arg0: i32, %arg1: i32, %arg2: i32, %arg3: memref<1x4x384xbf16, #tpu.memory_space<vmem>>, %arg4: memref<1x4x128xbf16, #tpu.memory_space<vmem>>, %arg5: memref<16x8x4xbf16, #tpu.memory_space<vmem>>, %arg6: memref<1x4x8x384xbf16, #tpu.memory_space<vmem>>, %arg7: memref<1x1x4x8x2xf32, #tpu.memory_space<vmem>>) attributes {dimension_semantics = [#tpu.dimension_semantics<parallel>, #tpu.dimension_semantics<parallel>, #tpu.dimension_semantics<parallel>], iteration_bounds = array<i64: 2, 1, 1>, scalar_prefetch = 0 : i64, scratch_operands = 0 : i64, tpu.core_type = #tpu.core_type<tc>, window_params = [{transform_indices = @transform_0, window_bounds = array<i64: 1, 4, 384>}, {transform_indices = @transform_1, window_bounds = array<i64: 1, 4, 128>}, {transform_indices = @transform_2, window_bounds = array<i64: 16, 8, 4>}, {transform_indices = @transform_3, window_bounds = array<i64: 1, 4, 8, 384>}, {transform_indices = @transform_4, window_bounds = array<i64: 1, 1, 4, 8, 2>}]} {
    %c0 = arith.constant 0 : index
    %c0_0 = arith.constant 0 : index
    %c0_1 = arith.constant 0 : index
    %0 = vector.load %arg3[%c0, %c0_0, %c0_1] : memref<1x4x384xbf16, #tpu.memory_space<vmem>>, vector<1x4x384xbf16>
    %1 = vector.shape_cast %0 : vector<1x4x384xbf16> to vector<4x384xbf16>
    %c0_2 = arith.constant 0 : index
    %c0_3 = arith.constant 0 : index
    %c0_4 = arith.constant 0 : index
    %2 = vector.load %arg4[%c0_2, %c0_3, %c0_4] : memref<1x4x128xbf16, #tpu.memory_space<vmem>>, vector<1x4x128xbf16>
    %3 = vector.shape_cast %2 : vector<1x4x128xbf16> to vector<4x128xbf16>
    %4 = tpu.concatenate %1, %3 in 1 : vector<4x384xbf16>, vector<4x128xbf16> -> vector<4x512xbf16>
    %c384_i32 = arith.constant 384 : i32
    %5 = arith.muli %arg1, %c384_i32 : i32
    %6 = tpu.iota {dimensions = array<i32: 1>} : vector<1x384xi32>
    %7 = vector.broadcast %5 : i32 to vector<1x384xi32>
    %8 = arith.addi %7, %6 : vector<1x384xi32>
    %c18_i32 = arith.constant 18 : i32
    %c0_i32 = arith.constant 0 : i32
    %9 = arith.cmpi eq, %c18_i32, %c0_i32 : i32
    %c1_i32 = arith.constant 1 : i32
    %10 = arith.select %9, %c1_i32, %c18_i32 : i32
    %11 = vector.broadcast %10 : i32 to vector<1x384xi32>
    %12 = arith.remsi %8, %11 : vector<1x384xi32>
    %c0_i32_5 = arith.constant 0 : i32
    %13 = vector.broadcast %c0_i32_5 : i32 to vector<1x384xi32>
    %14 = arith.cmpi ne, %12, %13 : vector<1x384xi32>
    %c0_i32_6 = arith.constant 0 : i32
    %15 = vector.broadcast %c0_i32_6 : i32 to vector<1x384xi32>
    %16 = arith.cmpi slt, %12, %15 : vector<1x384xi32>
    %c0_i32_7 = arith.constant 0 : i32
    %17 = arith.cmpi slt, %10, %c0_i32_7 : i32
    %18 = vector.broadcast %17 : i1 to vector<1x384xi1>
    %19 = vector.broadcast %18 : vector<1x384xi1> to vector<1x384xi1>
    %20 = arith.xori %16, %19 : vector<1x384xi1>
    %21 = arith.andi %20, %14 : vector<1x384xi1>
    %22 = vector.broadcast %10 : i32 to vector<1x384xi32>
    %23 = arith.addi %12, %22 : vector<1x384xi32>
    %24 = arith.select %21, %23, %12 : vector<1x384xi1>, vector<1x384xi32>
    %c16_i32 = arith.constant 16 : i32
    %25 = vector.broadcast %c16_i32 : i32 to vector<1x384xi32>
    %26 = arith.cmpi slt, %24, %25 : vector<1x384xi32>
    %c288_i32 = arith.constant 288 : i32
    %27 = vector.broadcast %c288_i32 : i32 to vector<1x384xi32>
    %28 = arith.cmpi slt, %8, %27 : vector<1x384xi32>
    %29 = arith.andi %26, %28 : vector<1x384xi1>
    %30 = arith.extui %29 : vector<1x384xi1> to vector<1x384xi32>
    %31 = arith.sitofp %30 : vector<1x384xi32> to vector<1x384xf32>
    %cst = arith.constant dense<0.000000e+00> : vector<1xf32>
    %32 = vector.multi_reduction <add>, %31, %cst [1] : vector<1x384xf32> to vector<1xf32>
    %33 = vector.shape_cast %32 : vector<1xf32> to vector<1x1xf32>
    %cst_8 = arith.constant 1.000000e+00 : f32
    %34 = vector.broadcast %cst_8 : f32 to vector<1x1xf32>
    %35 = arith.maximumf %33, %34 : vector<1x1xf32>
    %c0_9 = arith.constant 0 : index
    %c0_10 = arith.constant 0 : index
    %c0_11 = arith.constant 0 : index
    %36 = vector.load %arg5[%c0_9, %c0_10, %c0_11] : memref<16x8x4xbf16, #tpu.memory_space<vmem>>, vector<1x8x4xbf16>
    %37 = vector.shape_cast %36 : vector<1x8x4xbf16> to vector<8x4xbf16>
    %38 = vector.extract_strided_slice %4 {offsets = [0, 0], sizes = [4, 384], strides = [1, 1]} : vector<4x512xbf16> to vector<4x384xbf16>
    %cst_12 = arith.constant dense<0.000000e+00> : vector<8x384xf32>
    %39 = tpu.matmul %37, %38, %cst_12 {dimension_numbers = #tpu.dot_dimension_numbers<[1], [0], [0], [1], [0, 0, 1, 1], [], []>} : vector<8x4xbf16>, vector<4x384xbf16>, vector<8x384xf32> -> vector<8x384xf32>
    %c1 = arith.constant 1 : index
    %c0_13 = arith.constant 0 : index
    %c0_14 = arith.constant 0 : index
    %40 = vector.load %arg5[%c1, %c0_13, %c0_14] : memref<16x8x4xbf16, #tpu.memory_space<vmem>>, vector<1x8x4xbf16>
    %41 = vector.shape_cast %40 : vector<1x8x4xbf16> to vector<8x4xbf16>
    %42 = vector.extract_strided_slice %4 {offsets = [0, 1], sizes = [4, 384], strides = [1, 1]} : vector<4x512xbf16> to vector<4x384xbf16>
    %cst_15 = arith.constant dense<0.000000e+00> : vector<8x384xf32>
    %43 = tpu.matmul %41, %42, %cst_15 {dimension_numbers = #tpu.dot_dimension_numbers<[1], [0], [0], [1], [0, 0, 1, 1], [], []>} : vector<8x4xbf16>, vector<4x384xbf16>, vector<8x384xf32> -> vector<8x384xf32>
    %44 = arith.addf %39, %43 : vector<8x384xf32>
    %c2 = arith.constant 2 : index
    %c0_16 = arith.constant 0 : index
    %c0_17 = arith.constant 0 : index
    %45 = vector.load %arg5[%c2, %c0_16, %c0_17] : memref<16x8x4xbf16, #tpu.memory_space<vmem>>, vector<1x8x4xbf16>
    %46 = vector.shape_cast %45 : vector<1x8x4xbf16> to vector<8x4xbf16>
    %47 = vector.extract_strided_slice %4 {offsets = [0, 18], sizes = [4, 384], strides = [1, 1]} : vector<4x512xbf16> to vector<4x384xbf16>
    %cst_18 = arith.constant dense<0.000000e+00> : vector<8x384xf32>
    %48 = tpu.matmul %46, %47, %cst_18 {dimension_numbers = #tpu.dot_dimension_numbers<[1], [0], [0], [1], [0, 0, 1, 1], [], []>} : vector<8x4xbf16>, vector<4x384xbf16>, vector<8x384xf32> -> vector<8x384xf32>
    %49 = arith.addf %44, %48 : vector<8x384xf32>
    %c3 = arith.constant 3 : index
    %c0_19 = arith.constant 0 : index
    %c0_20 = arith.constant 0 : index
    %50 = vector.load %arg5[%c3, %c0_19, %c0_20] : memref<16x8x4xbf16, #tpu.memory_space<vmem>>, vector<1x8x4xbf16>
    %51 = vector.shape_cast %50 : vector<1x8x4xbf16> to vector<8x4xbf16>
    %52 = vector.extract_strided_slice %4 {offsets = [0, 19], sizes = [4, 384], strides = [1, 1]} : vector<4x512xbf16> to vector<4x384xbf16>
    %cst_21 = arith.constant dense<0.000000e+00> : vector<8x384xf32>
    %53 = tpu.matmul %51, %52, %cst_21 {dimension_numbers = #tpu.dot_dimension_numbers<[1], [0], [0], [1], [0, 0, 1, 1], [], []>} : vector<8x4xbf16>, vector<4x384xbf16>, vector<8x384xf32> -> vector<8x384xf32>
    %54 = arith.addf %49, %53 : vector<8x384xf32>
    %55 = arith.truncf %54 : vector<8x384xf32> to vector<8x384xbf16>
    %c0_22 = arith.constant 0 : index
    %c0_23 = arith.constant 0 : index
    %c0_24 = arith.constant 0 : index
    %c0_25 = arith.constant 0 : index
    %56 = vector.load %arg6[%c0_22, %c0_23, %c0_24, %c0_25] : memref<1x4x8x384xbf16, #tpu.memory_space<vmem>>, vector<1x1x8x384xbf16>
    %57 = vector.shape_cast %56 : vector<1x1x8x384xbf16> to vector<8x384xbf16>
    %58 = vector.shape_cast %55 : vector<8x384xbf16> to vector<1x1x8x384xbf16>
    tpu.vector_store %arg6[%c0_22, %c0_23, %c0_24, %c0_25], %58 {strides = array<i32>} : memref<1x4x8x384xbf16, #tpu.memory_space<vmem>>, vector<1x1x8x384xbf16>,
    %59 = vector.broadcast %31 : vector<1x384xf32> to vector<8x384xf32>
    %60 = arith.mulf %54, %59 : vector<8x384xf32>
    %cst_26 = arith.constant dense<0.000000e+00> : vector<8xf32>
    %61 = vector.multi_reduction <add>, %60, %cst_26 [1] : vector<8x384xf32> to vector<8xf32>
    %62 = vector.shape_cast %61 : vector<8xf32> to vector<8x1xf32>
    %63 = vector.broadcast %35 : vector<1x1xf32> to vector<8x1xf32>
    %64 = arith.divf %62, %63 : vector<8x1xf32>
    %65 = vector.broadcast %64 : vector<8x1xf32> to vector<8x384xf32>
    %66 = arith.subf %54, %65 : vector<8x384xf32>
    %67 = vector.broadcast %31 : vector<1x384xf32> to vector<8x384xf32>
    %68 = arith.mulf %66, %67 : vector<8x384xf32>
    %69 = arith.mulf %68, %68 : vector<8x384xf32>
    %cst_27 = arith.constant dense<0.000000e+00> : vector<8xf32>
    %70 = vector.multi_reduction <add>, %69, %cst_27 [1] : vector<8x384xf32> to vector<8xf32>
    %71 = vector.shape_cast %70 : vector<8xf32> to vector<8x1xf32>
    %72 = tpu.concatenate %62, %71 in 1 : vector<8x1xf32>, vector<8x1xf32> -> vector<8x2xf32>
    %c0_28 = arith.constant 0 : index
    %c0_29 = arith.constant 0 : index
    %c0_30 = arith.constant 0 : index
    %c0_31 = arith.constant 0 : index
    %c0_32 = arith.constant 0 : index
    %73 = vector.load %arg7[%c0_28, %c0_29, %c0_30, %c0_31, %c0_32] : memref<1x1x4x8x2xf32, #tpu.memory_space<vmem>>, vector<1x1x1x8x2xf32>
    %74 = vector.shape_cast %73 : vector<1x1x1x8x2xf32> to vector<8x2xf32>
    %75 = vector.shape_cast %72 : vector<8x2xf32> to vector<1x1x1x8x2xf32>
    tpu.vector_store %arg7[%c0_28, %c0_29, %c0_30, %c0_31, %c0_32], %75 {strides = array<i32>} : memref<1x1x4x8x2xf32, #tpu.memory_space<vmem>>, vector<1x1x1x8x2xf32>,
    %c4 = arith.constant 4 : index
    %c0_33 = arith.constant 0 : index
    %c0_34 = arith.constant 0 : index
    %76 = vector.load %arg5[%c4, %c0_33, %c0_34] : memref<16x8x4xbf16, #tpu.memory_space<vmem>>, vector<1x8x4xbf16>
    %77 = vector.shape_cast %76 : vector<1x8x4xbf16> to vector<8x4xbf16>
    %78 = vector.extract_strided_slice %4 {offsets = [0, 1], sizes = [4, 384], strides = [1, 1]} : vector<4x512xbf16> to vector<4x384xbf16>
    %cst_35 = arith.constant dense<0.000000e+00> : vector<8x384xf32>
    %79 = tpu.matmul %77, %78, %cst_35 {dimension_numbers = #tpu.dot_dimension_numbers<[1], [0], [0], [1], [0, 0, 1, 1], [], []>} : vector<8x4xbf16>, vector<4x384xbf16>, vector<8x384xf32> -> vector<8x384xf32>
    %c5 = arith.constant 5 : index
    %c0_36 = arith.constant 0 : index
    %c0_37 = arith.constant 0 : index
    %80 = vector.load %arg5[%c5, %c0_36, %c0_37] : memref<16x8x4xbf16, #tpu.memory_space<vmem>>, vector<1x8x4xbf16>
    %81 = vector.shape_cast %80 : vector<1x8x4xbf16> to vector<8x4xbf16>
    %82 = vector.extract_strided_slice %4 {offsets = [0, 2], sizes = [4, 384], strides = [1, 1]} : vector<4x512xbf16> to vector<4x384xbf16>
    %cst_38 = arith.constant dense<0.000000e+00> : vector<8x384xf32>
    %83 = tpu.matmul %81, %82, %cst_38 {dimension_numbers = #tpu.dot_dimension_numbers<[1], [0], [0], [1], [0, 0, 1, 1], [], []>} : vector<8x4xbf16>, vector<4x384xbf16>, vector<8x384xf32> -> vector<8x384xf32>
    %84 = arith.addf %79, %83 : vector<8x384xf32>
    %c6 = arith.constant 6 : index
    %c0_39 = arith.constant 0 : index
    %c0_40 = arith.constant 0 : index
    %85 = vector.load %arg5[%c6, %c0_39, %c0_40] : memref<16x8x4xbf16, #tpu.memory_space<vmem>>, vector<1x8x4xbf16>
    %86 = vector.shape_cast %85 : vector<1x8x4xbf16> to vector<8x4xbf16>
    %87 = vector.extract_strided_slice %4 {offsets = [0, 19], sizes = [4, 384], strides = [1, 1]} : vector<4x512xbf16> to vector<4x384xbf16>
    %cst_41 = arith.constant dense<0.000000e+00> : vector<8x384xf32>
    %88 = tpu.matmul %86, %87, %cst_41 {dimension_numbers = #tpu.dot_dimension_numbers<[1], [0], [0], [1], [0, 0, 1, 1], [], []>} : vector<8x4xbf16>, vector<4x384xbf16>, vector<8x384xf32> -> vector<8x384xf32>
    %89 = arith.addf %84, %88 : vector<8x384xf32>
    %c7 = arith.constant 7 : index
    %c0_42 = arith.constant 0 : index
    %c0_43 = arith.constant 0 : index
    %90 = vector.load %arg5[%c7, %c0_42, %c0_43] : memref<16x8x4xbf16, #tpu.memory_space<vmem>>, vector<1x8x4xbf16>
    %91 = vector.shape_cast %90 : vector<1x8x4xbf16> to vector<8x4xbf16>
    %92 = vector.extract_strided_slice %4 {offsets = [0, 20], sizes = [4, 384], strides = [1, 1]} : vector<4x512xbf16> to vector<4x384xbf16>
    %cst_44 = arith.constant dense<0.000000e+00> : vector<8x384xf32>
    %93 = tpu.matmul %91, %92, %cst_44 {dimension_numbers = #tpu.dot_dimension_numbers<[1], [0], [0], [1], [0, 0, 1, 1], [], []>} : vector<8x4xbf16>, vector<4x384xbf16>, vector<8x384xf32> -> vector<8x384xf32>
    %94 = arith.addf %89, %93 : vector<8x384xf32>
    %95 = arith.truncf %94 : vector<8x384xf32> to vector<8x384xbf16>
    %c0_45 = arith.constant 0 : index
    %c1_46 = arith.constant 1 : index
    %c0_47 = arith.constant 0 : index
    %c0_48 = arith.constant 0 : index
    %96 = vector.load %arg6[%c0_45, %c1_46, %c0_47, %c0_48] : memref<1x4x8x384xbf16, #tpu.memory_space<vmem>>, vector<1x1x8x384xbf16>
    %97 = vector.shape_cast %96 : vector<1x1x8x384xbf16> to vector<8x384xbf16>
    %98 = vector.shape_cast %95 : vector<8x384xbf16> to vector<1x1x8x384xbf16>
    tpu.vector_store %arg6[%c0_45, %c1_46, %c0_47, %c0_48], %98 {strides = array<i32>} : memref<1x4x8x384xbf16, #tpu.memory_space<vmem>>, vector<1x1x8x384xbf16>,
    %99 = vector.broadcast %31 : vector<1x384xf32> to vector<8x384xf32>
    %100 = arith.mulf %94, %99 : vector<8x384xf32>
    %cst_49 = arith.constant dense<0.000000e+00> : vector<8xf32>
    %101 = vector.multi_reduction <add>, %100, %cst_49 [1] : vector<8x384xf32> to vector<8xf32>
    %102 = vector.shape_cast %101 : vector<8xf32> to vector<8x1xf32>
    %103 = vector.broadcast %35 : vector<1x1xf32> to vector<8x1xf32>
    %104 = arith.divf %102, %103 : vector<8x1xf32>
    %105 = vector.broadcast %104 : vector<8x1xf32> to vector<8x384xf32>
    %106 = arith.subf %94, %105 : vector<8x384xf32>
    %107 = vector.broadcast %31 : vector<1x384xf32> to vector<8x384xf32>
    %108 = arith.mulf %106, %107 : vector<8x384xf32>
    %109 = arith.mulf %108, %108 : vector<8x384xf32>
    %cst_50 = arith.constant dense<0.000000e+00> : vector<8xf32>
    %110 = vector.multi_reduction <add>, %109, %cst_50 [1] : vector<8x384xf32> to vector<8xf32>
    %111 = vector.shape_cast %110 : vector<8xf32> to vector<8x1xf32>
    %112 = tpu.concatenate %102, %111 in 1 : vector<8x1xf32>, vector<8x1xf32> -> vector<8x2xf32>
    %c0_51 = arith.constant 0 : index
    %c0_52 = arith.constant 0 : index
    %c1_53 = arith.constant 1 : index
    %c0_54 = arith.constant 0 : index
    %c0_55 = arith.constant 0 : index
    %113 = vector.load %arg7[%c0_51, %c0_52, %c1_53, %c0_54, %c0_55] : memref<1x1x4x8x2xf32, #tpu.memory_space<vmem>>, vector<1x1x1x8x2xf32>
    %114 = vector.shape_cast %113 : vector<1x1x1x8x2xf32> to vector<8x2xf32>
    %115 = vector.shape_cast %112 : vector<8x2xf32> to vector<1x1x1x8x2xf32>
    tpu.vector_store %arg7[%c0_51, %c0_52, %c1_53, %c0_54, %c0_55], %115 {strides = array<i32>} : memref<1x1x4x8x2xf32, #tpu.memory_space<vmem>>, vector<1x1x1x8x2xf32>,
    %c8 = arith.constant 8 : index
    %c0_56 = arith.constant 0 : index
    %c0_57 = arith.constant 0 : index
    %116 = vector.load %arg5[%c8, %c0_56, %c0_57] : memref<16x8x4xbf16, #tpu.memory_space<vmem>>, vector<1x8x4xbf16>
    %117 = vector.shape_cast %116 : vector<1x8x4xbf16> to vector<8x4xbf16>
    %118 = vector.extract_strided_slice %4 {offsets = [0, 18], sizes = [4, 384], strides = [1, 1]} : vector<4x512xbf16> to vector<4x384xbf16>
    %cst_58 = arith.constant dense<0.000000e+00> : vector<8x384xf32>
    %119 = tpu.matmul %117, %118, %cst_58 {dimension_numbers = #tpu.dot_dimension_numbers<[1], [0], [0], [1], [0, 0, 1, 1], [], []>} : vector<8x4xbf16>, vector<4x384xbf16>, vector<8x384xf32> -> vector<8x384xf32>
    %c9 = arith.constant 9 : index
    %c0_59 = arith.constant 0 : index
    %c0_60 = arith.constant 0 : index
    %120 = vector.load %arg5[%c9, %c0_59, %c0_60] : memref<16x8x4xbf16, #tpu.memory_space<vmem>>, vector<1x8x4xbf16>
    %121 = vector.shape_cast %120 : vector<1x8x4xbf16> to vector<8x4xbf16>
    %122 = vector.extract_strided_slice %4 {offsets = [0, 19], sizes = [4, 384], strides = [1, 1]} : vector<4x512xbf16> to vector<4x384xbf16>
    %cst_61 = arith.constant dense<0.000000e+00> : vector<8x384xf32>
    %123 = tpu.matmul %121, %122, %cst_61 {dimension_numbers = #tpu.dot_dimension_numbers<[1], [0], [0], [1], [0, 0, 1, 1], [], []>} : vector<8x4xbf16>, vector<4x384xbf16>, vector<8x384xf32> -> vector<8x384xf32>
    %124 = arith.addf %119, %123 : vector<8x384xf32>
    %c10 = arith.constant 10 : index
    %c0_62 = arith.constant 0 : index
    %c0_63 = arith.constant 0 : index
    %125 = vector.load %arg5[%c10, %c0_62, %c0_63] : memref<16x8x4xbf16, #tpu.memory_space<vmem>>, vector<1x8x4xbf16>
    %126 = vector.shape_cast %125 : vector<1x8x4xbf16> to vector<8x4xbf16>
    %127 = vector.extract_strided_slice %4 {offsets = [0, 36], sizes = [4, 384], strides = [1, 1]} : vector<4x512xbf16> to vector<4x384xbf16>
    %cst_64 = arith.constant dense<0.000000e+00> : vector<8x384xf32>
    %128 = tpu.matmul %126, %127, %cst_64 {dimension_numbers = #tpu.dot_dimension_numbers<[1], [0], [0], [1], [0, 0, 1, 1], [], []>} : vector<8x4xbf16>, vector<4x384xbf16>, vector<8x384xf32> -> vector<8x384xf32>
    %129 = arith.addf %124, %128 : vector<8x384xf32>
    %c11 = arith.constant 11 : index
    %c0_65 = arith.constant 0 : index
    %c0_66 = arith.constant 0 : index
    %130 = vector.load %arg5[%c11, %c0_65, %c0_66] : memref<16x8x4xbf16, #tpu.memory_space<vmem>>, vector<1x8x4xbf16>
    %131 = vector.shape_cast %130 : vector<1x8x4xbf16> to vector<8x4xbf16>
    %132 = vector.extract_strided_slice %4 {offsets = [0, 37], sizes = [4, 384], strides = [1, 1]} : vector<4x512xbf16> to vector<4x384xbf16>
    %cst_67 = arith.constant dense<0.000000e+00> : vector<8x384xf32>
    %133 = tpu.matmul %131, %132, %cst_67 {dimension_numbers = #tpu.dot_dimension_numbers<[1], [0], [0], [1], [0, 0, 1, 1], [], []>} : vector<8x4xbf16>, vector<4x384xbf16>, vector<8x384xf32> -> vector<8x384xf32>
    %134 = arith.addf %129, %133 : vector<8x384xf32>
    %135 = arith.truncf %134 : vector<8x384xf32> to vector<8x384xbf16>
    %c0_68 = arith.constant 0 : index
    %c2_69 = arith.constant 2 : index
    %c0_70 = arith.constant 0 : index
    %c0_71 = arith.constant 0 : index
    %136 = vector.load %arg6[%c0_68, %c2_69, %c0_70, %c0_71] : memref<1x4x8x384xbf16, #tpu.memory_space<vmem>>, vector<1x1x8x384xbf16>
    %137 = vector.shape_cast %136 : vector<1x1x8x384xbf16> to vector<8x384xbf16>
    %138 = vector.shape_cast %135 : vector<8x384xbf16> to vector<1x1x8x384xbf16>
    tpu.vector_store %arg6[%c0_68, %c2_69, %c0_70, %c0_71], %138 {strides = array<i32>} : memref<1x4x8x384xbf16, #tpu.memory_space<vmem>>, vector<1x1x8x384xbf16>,
    %139 = vector.broadcast %31 : vector<1x384xf32> to vector<8x384xf32>
    %140 = arith.mulf %134, %139 : vector<8x384xf32>
    %cst_72 = arith.constant dense<0.000000e+00> : vector<8xf32>
    %141 = vector.multi_reduction <add>, %140, %cst_72 [1] : vector<8x384xf32> to vector<8xf32>
    %142 = vector.shape_cast %141 : vector<8xf32> to vector<8x1xf32>
    %143 = vector.broadcast %35 : vector<1x1xf32> to vector<8x1xf32>
    %144 = arith.divf %142, %143 : vector<8x1xf32>
    %145 = vector.broadcast %144 : vector<8x1xf32> to vector<8x384xf32>
    %146 = arith.subf %134, %145 : vector<8x384xf32>
    %147 = vector.broadcast %31 : vector<1x384xf32> to vector<8x384xf32>
    %148 = arith.mulf %146, %147 : vector<8x384xf32>
    %149 = arith.mulf %148, %148 : vector<8x384xf32>
    %cst_73 = arith.constant dense<0.000000e+00> : vector<8xf32>
    %150 = vector.multi_reduction <add>, %149, %cst_73 [1] : vector<8x384xf32> to vector<8xf32>
    %151 = vector.shape_cast %150 : vector<8xf32> to vector<8x1xf32>
    %152 = tpu.concatenate %142, %151 in 1 : vector<8x1xf32>, vector<8x1xf32> -> vector<8x2xf32>
    %c0_74 = arith.constant 0 : index
    %c0_75 = arith.constant 0 : index
    %c2_76 = arith.constant 2 : index
    %c0_77 = arith.constant 0 : index
    %c0_78 = arith.constant 0 : index
    %153 = vector.load %arg7[%c0_74, %c0_75, %c2_76, %c0_77, %c0_78] : memref<1x1x4x8x2xf32, #tpu.memory_space<vmem>>, vector<1x1x1x8x2xf32>
    %154 = vector.shape_cast %153 : vector<1x1x1x8x2xf32> to vector<8x2xf32>
    %155 = vector.shape_cast %152 : vector<8x2xf32> to vector<1x1x1x8x2xf32>
    tpu.vector_store %arg7[%c0_74, %c0_75, %c2_76, %c0_77, %c0_78], %155 {strides = array<i32>} : memref<1x1x4x8x2xf32, #tpu.memory_space<vmem>>, vector<1x1x1x8x2xf32>,
    %c12 = arith.constant 12 : index
    %c0_79 = arith.constant 0 : index
    %c0_80 = arith.constant 0 : index
    %156 = vector.load %arg5[%c12, %c0_79, %c0_80] : memref<16x8x4xbf16, #tpu.memory_space<vmem>>, vector<1x8x4xbf16>
    %157 = vector.shape_cast %156 : vector<1x8x4xbf16> to vector<8x4xbf16>
    %158 = vector.extract_strided_slice %4 {offsets = [0, 19], sizes = [4, 384], strides = [1, 1]} : vector<4x512xbf16> to vector<4x384xbf16>
    %cst_81 = arith.constant dense<0.000000e+00> : vector<8x384xf32>
    %159 = tpu.matmul %157, %158, %cst_81 {dimension_numbers = #tpu.dot_dimension_numbers<[1], [0], [0], [1], [0, 0, 1, 1], [], []>} : vector<8x4xbf16>, vector<4x384xbf16>, vector<8x384xf32> -> vector<8x384xf32>
    %c13 = arith.constant 13 : index
    %c0_82 = arith.constant 0 : index
    %c0_83 = arith.constant 0 : index
    %160 = vector.load %arg5[%c13, %c0_82, %c0_83] : memref<16x8x4xbf16, #tpu.memory_space<vmem>>, vector<1x8x4xbf16>
    %161 = vector.shape_cast %160 : vector<1x8x4xbf16> to vector<8x4xbf16>
    %162 = vector.extract_strided_slice %4 {offsets = [0, 20], sizes = [4, 384], strides = [1, 1]} : vector<4x512xbf16> to vector<4x384xbf16>
    %cst_84 = arith.constant dense<0.000000e+00> : vector<8x384xf32>
    %163 = tpu.matmul %161, %162, %cst_84 {dimension_numbers = #tpu.dot_dimension_numbers<[1], [0], [0], [1], [0, 0, 1, 1], [], []>} : vector<8x4xbf16>, vector<4x384xbf16>, vector<8x384xf32> -> vector<8x384xf32>
    %164 = arith.addf %159, %163 : vector<8x384xf32>
    %c14 = arith.constant 14 : index
    %c0_85 = arith.constant 0 : index
    %c0_86 = arith.constant 0 : index
    %165 = vector.load %arg5[%c14, %c0_85, %c0_86] : memref<16x8x4xbf16, #tpu.memory_space<vmem>>, vector<1x8x4xbf16>
    %166 = vector.shape_cast %165 : vector<1x8x4xbf16> to vector<8x4xbf16>
    %167 = vector.extract_strided_slice %4 {offsets = [0, 37], sizes = [4, 384], strides = [1, 1]} : vector<4x512xbf16> to vector<4x384xbf16>
    %cst_87 = arith.constant dense<0.000000e+00> : vector<8x384xf32>
    %168 = tpu.matmul %166, %167, %cst_87 {dimension_numbers = #tpu.dot_dimension_numbers<[1], [0], [0], [1], [0, 0, 1, 1], [], []>} : vector<8x4xbf16>, vector<4x384xbf16>, vector<8x384xf32> -> vector<8x384xf32>
    %169 = arith.addf %164, %168 : vector<8x384xf32>
    %c15 = arith.constant 15 : index
    %c0_88 = arith.constant 0 : index
    %c0_89 = arith.constant 0 : index
    %170 = vector.load %arg5[%c15, %c0_88, %c0_89] : memref<16x8x4xbf16, #tpu.memory_space<vmem>>, vector<1x8x4xbf16>
    %171 = vector.shape_cast %170 : vector<1x8x4xbf16> to vector<8x4xbf16>
    %172 = vector.extract_strided_slice %4 {offsets = [0, 38], sizes = [4, 384], strides = [1, 1]} : vector<4x512xbf16> to vector<4x384xbf16>
    %cst_90 = arith.constant dense<0.000000e+00> : vector<8x384xf32>
    %173 = tpu.matmul %171, %172, %cst_90 {dimension_numbers = #tpu.dot_dimension_numbers<[1], [0], [0], [1], [0, 0, 1, 1], [], []>} : vector<8x4xbf16>, vector<4x384xbf16>, vector<8x384xf32> -> vector<8x384xf32>
    %174 = arith.addf %169, %173 : vector<8x384xf32>
    %175 = arith.truncf %174 : vector<8x384xf32> to vector<8x384xbf16>
    %c0_91 = arith.constant 0 : index
    %c3_92 = arith.constant 3 : index
    %c0_93 = arith.constant 0 : index
    %c0_94 = arith.constant 0 : index
    %176 = vector.load %arg6[%c0_91, %c3_92, %c0_93, %c0_94] : memref<1x4x8x384xbf16, #tpu.memory_space<vmem>>, vector<1x1x8x384xbf16>
    %177 = vector.shape_cast %176 : vector<1x1x8x384xbf16> to vector<8x384xbf16>
    %178 = vector.shape_cast %175 : vector<8x384xbf16> to vector<1x1x8x384xbf16>
    tpu.vector_store %arg6[%c0_91, %c3_92, %c0_93, %c0_94], %178 {strides = array<i32>} : memref<1x4x8x384xbf16, #tpu.memory_space<vmem>>, vector<1x1x8x384xbf16>,
    %179 = vector.broadcast %31 : vector<1x384xf32> to vector<8x384xf32>
    %180 = arith.mulf %174, %179 : vector<8x384xf32>
    %cst_95 = arith.constant dense<0.000000e+00> : vector<8xf32>
    %181 = vector.multi_reduction <add>, %180, %cst_95 [1] : vector<8x384xf32> to vector<8xf32>
    %182 = vector.shape_cast %181 : vector<8xf32> to vector<8x1xf32>
    %183 = vector.broadcast %35 : vector<1x1xf32> to vector<8x1xf32>
    %184 = arith.divf %182, %183 : vector<8x1xf32>
    %185 = vector.broadcast %184 : vector<8x1xf32> to vector<8x384xf32>
    %186 = arith.subf %174, %185 : vector<8x384xf32>
    %187 = vector.broadcast %31 : vector<1x384xf32> to vector<8x384xf32>
    %188 = arith.mulf %186, %187 : vector<8x384xf32>
    %189 = arith.mulf %188, %188 : vector<8x384xf32>
    %cst_96 = arith.constant dense<0.000000e+00> : vector<8xf32>
    %190 = vector.multi_reduction <add>, %189, %cst_96 [1] : vector<8x384xf32> to vector<8xf32>
    %191 = vector.shape_cast %190 : vector<8xf32> to vector<8x1xf32>
    %192 = tpu.concatenate %182, %191 in 1 : vector<8x1xf32>, vector<8x1xf32> -> vector<8x2xf32>
    %c0_97 = arith.constant 0 : index
    %c0_98 = arith.constant 0 : index
    %c3_99 = arith.constant 3 : index
    %c0_100 = arith.constant 0 : index
    %c0_101 = arith.constant 0 : index
    %193 = vector.load %arg7[%c0_97, %c0_98, %c3_99, %c0_100, %c0_101] : memref<1x1x4x8x2xf32, #tpu.memory_space<vmem>>, vector<1x1x1x8x2xf32>
    %194 = vector.shape_cast %193 : vector<1x1x1x8x2xf32> to vector<8x2xf32>
    %195 = vector.shape_cast %192 : vector<8x2xf32> to vector<1x1x1x8x2xf32>
    tpu.vector_store %arg7[%c0_97, %c0_98, %c3_99, %c0_100, %c0_101], %195 {strides = array<i32>} : memref<1x1x4x8x2xf32, #tpu.memory_space<vmem>>, vector<1x1x1x8x2xf32>,
    return
  }
  func.func @transform_0(%arg0: i32, %arg1: i32, %arg2: i32) -> (i32, i32, i32) {
    %c0_i32 = arith.constant 0 : i32
    %c0_i32_0 = arith.constant 0 : i32
    return %arg0, %c0_i32, %arg1 : i32, i32, i32
  }
  func.func @transform_1(%arg0: i32, %arg1: i32, %arg2: i32) -> (i32, i32, i32) {
    %c1_i32 = arith.constant 1 : i32
    %0 = arith.addi %arg1, %c1_i32 : i32
    %c3_i32 = arith.constant 3 : i32
    %1 = arith.muli %0, %c3_i32 : i32
    %c0_i32 = arith.constant 0 : i32
    %c0_i32_0 = arith.constant 0 : i32
    return %arg0, %c0_i32, %1 : i32, i32, i32
  }
  func.func @transform_2(%arg0: i32, %arg1: i32, %arg2: i32) -> (i32, i32, i32) {
    %c0_i32 = arith.constant 0 : i32
    %c0_i32_0 = arith.constant 0 : i32
    %c0_i32_1 = arith.constant 0 : i32
    return %c0_i32, %arg2, %c0_i32_0 : i32, i32, i32
  }
  func.func @transform_3(%arg0: i32, %arg1: i32, %arg2: i32) -> (i32, i32, i32, i32) {
    %c0_i32 = arith.constant 0 : i32
    %c0_i32_0 = arith.constant 0 : i32
    return %arg0, %c0_i32, %arg2, %arg1 : i32, i32, i32, i32
  }
  func.func @transform_4(%arg0: i32, %arg1: i32, %arg2: i32) -> (i32, i32, i32, i32, i32) {
    %c0_i32 = arith.constant 0 : i32
    %c0_i32_0 = arith.constant 0 : i32
    %c0_i32_1 = arith.constant 0 : i32
    return %arg0, %arg1, %c0_i32, %arg2, %c0_i32_0 : i32, i32, i32, i32, i32
  }
}

module attributes {stable_mosaic.version = 11 : i64} {
  func.func @_bn_relu_kernel(%arg0: i32, %arg1: i32, %arg2: memref<1x4x8x384xbf16, #tpu.memory_space<vmem>>, %arg3: memref<8x1xf32, #tpu.memory_space<vmem>>, %arg4: memref<8x1xf32, #tpu.memory_space<vmem>>, %arg5: memref<1x4x8x384xbf16, #tpu.memory_space<vmem>>) attributes {dimension_semantics = [#tpu.dimension_semantics<parallel>, #tpu.dimension_semantics<parallel>], iteration_bounds = array<i64: 2, 1>, scalar_prefetch = 0 : i64, scratch_operands = 0 : i64, tpu.core_type = #tpu.core_type<tc>, window_params = [{transform_indices = @transform_0, window_bounds = array<i64: 1, 4, 8, 384>}, {pipeline_mode = #tpu.pipeline_mode<synchronous>, transform_indices = @transform_1, window_bounds = array<i64: 8, 1>}, {pipeline_mode = #tpu.pipeline_mode<synchronous>, transform_indices = @transform_2, window_bounds = array<i64: 8, 1>}, {transform_indices = @transform_3, window_bounds = array<i64: 1, 4, 8, 384>}]} {
    %c0 = arith.constant 0 : index
    %c0_0 = arith.constant 0 : index
    %c0_1 = arith.constant 0 : index
    %c0_2 = arith.constant 0 : index
    %0 = vector.load %arg2[%c0, %c0_0, %c0_1, %c0_2] : memref<1x4x8x384xbf16, #tpu.memory_space<vmem>>, vector<1x4x8x384xbf16>
    %1 = vector.shape_cast %0 : vector<1x4x8x384xbf16> to vector<4x8x384xbf16>
    %2 = arith.extf %1 : vector<4x8x384xbf16> to vector<4x8x384xf32>
    %c0_3 = arith.constant 0 : index
    %c0_4 = arith.constant 0 : index
    %3 = vector.load %arg3[%c0_3, %c0_4] : memref<8x1xf32, #tpu.memory_space<vmem>>, vector<8x1xf32>
    %4 = vector.shape_cast %3 : vector<8x1xf32> to vector<1x8x1xf32>
    %5 = vector.broadcast %4 : vector<1x8x1xf32> to vector<4x8x384xf32>
    %6 = arith.mulf %2, %5 : vector<4x8x384xf32>
    %c0_5 = arith.constant 0 : index
    %c0_6 = arith.constant 0 : index
    %7 = vector.load %arg4[%c0_5, %c0_6] : memref<8x1xf32, #tpu.memory_space<vmem>>, vector<8x1xf32>
    %8 = vector.shape_cast %7 : vector<8x1xf32> to vector<1x8x1xf32>
    %9 = vector.broadcast %8 : vector<1x8x1xf32> to vector<4x8x384xf32>
    %10 = arith.addf %6, %9 : vector<4x8x384xf32>
    %cst = arith.constant 0.000000e+00 : f32
    %11 = vector.broadcast %cst : f32 to vector<4x8x384xf32>
    %12 = arith.maximumf %10, %11 : vector<4x8x384xf32>
    %13 = arith.truncf %12 : vector<4x8x384xf32> to vector<4x8x384xbf16>
    %c0_7 = arith.constant 0 : index
    %c0_8 = arith.constant 0 : index
    %c0_9 = arith.constant 0 : index
    %c0_10 = arith.constant 0 : index
    %14 = vector.load %arg5[%c0_7, %c0_8, %c0_9, %c0_10] : memref<1x4x8x384xbf16, #tpu.memory_space<vmem>>, vector<1x4x8x384xbf16>
    %15 = vector.shape_cast %14 : vector<1x4x8x384xbf16> to vector<4x8x384xbf16>
    %16 = vector.shape_cast %13 : vector<4x8x384xbf16> to vector<1x4x8x384xbf16>
    tpu.vector_store %arg5[%c0_7, %c0_8, %c0_9, %c0_10], %16 {strides = array<i32>} : memref<1x4x8x384xbf16, #tpu.memory_space<vmem>>, vector<1x4x8x384xbf16>,
    return
  }
  func.func @transform_0(%arg0: i32, %arg1: i32) -> (i32, i32, i32, i32) {
    %c0_i32 = arith.constant 0 : i32
    %c0_i32_0 = arith.constant 0 : i32
    %c0_i32_1 = arith.constant 0 : i32
    return %arg0, %c0_i32, %c0_i32_0, %arg1 : i32, i32, i32, i32
  }
  func.func @transform_1(%arg0: i32, %arg1: i32) -> (i32, i32) {
    %c0_i32 = arith.constant 0 : i32
    %c0_i32_0 = arith.constant 0 : i32
    %c0_i32_1 = arith.constant 0 : i32
    return %c0_i32, %c0_i32_0 : i32, i32
  }
  func.func @transform_2(%arg0: i32, %arg1: i32) -> (i32, i32) {
    %c0_i32 = arith.constant 0 : i32
    %c0_i32_0 = arith.constant 0 : i32
    %c0_i32_1 = arith.constant 0 : i32
    return %c0_i32, %c0_i32_0 : i32, i32
  }
  func.func @transform_3(%arg0: i32, %arg1: i32) -> (i32, i32, i32, i32) {
    %c0_i32 = arith.constant 0 : i32
    %c0_i32_0 = arith.constant 0 : i32
    %c0_i32_1 = arith.constant 0 : i32
    return %arg0, %c0_i32, %c0_i32_0, %arg1 : i32, i32, i32, i32
  }
}

</mosaic_0001>

<llo_original>
// kernel: decoder_block.3
$region0: #{decoder_block.3}
  #allocation0 [shape = 'u32[]', space=smem, size = 0x4, offset = 0x4, fixed_abs, tag = 'smem constant byte address 0x4 - core index']
  #allocation1 [shape = 'u32[144,128]{1,0:T(1,128)}', space=vmem, size = 0x12000, scoped, tag = 'internal scratch']
  %s0 = inlined_call_operand.vmem [shape: bf16[2,4,8,384], index: 0, kind: input, shape index: {}, may-alias: {0,3}]
  %s1 = inlined_call_operand.vmem [shape: f32[8,1], index: 1, kind: input, shape index: {}]
  %s2 = inlined_call_operand.vmem [shape: f32[8,1], index: 2, kind: input, shape index: {}]
  %s3 = inlined_call_operand.vmem [shape: bf16[2,4,8,384], index: 3, kind: output, shape index: {}, may-alias: {0,3}]
  %s4 = sld [smem:[#allocation0]]
  $region45: #{decoder_block.3} parent=0
    _
  %s6 = ssub.s32 1, %s4
  %s7 = scalar_select 0, %s6, %s4
  loop: start=0, step=1, limit=4
  $region2: #{decoder_block.3} parent=0 // loop_pre_header
    _
  $region3: #{decoder_block.3} parent=0 // loop_header
    %s9 = sphi 0, %s13
    %p10 = scmp.ge.s32.totalorder %s9, 4
    %s16 = sphi 0, %s28
    %s17 = sphi 0, %s24
    %s18 = sphi 0, %s16
    %s19 = sphi 0, %s17
    %s20 = sphi 0, %s18
    %s21 = sphi 0, %s19
    %s33 = sphi 0, %s35
    %s36 = sphi 0, %s33
    %s37 = sphi 0, %s36
    %s53 = sphi 0, %s37
    %s57 = sphi 0, %s57
    %s59 = sphi 0, %s57
    %s60 = sphi 0, %s59
    %s74 = sphi 0, %s60
    %s78 = sphi 0, %s78
    %s80 = sphi 0, %s78
    %s81 = sphi 0, %s80
    %s95 = sphi 0, %s81
    %s103 = sphi 0, %s105
    %s106 = sphi 0, %s103
    %s107 = sphi 0, %s106
    %s123 = sphi 0, %s107
  $region4: #{decoder_block.3} parent=0 // loop_header_branch
    %12 = sbr.rel (%p10) target = $region8
  $region5: #{decoder_block.3} parent=0 // loop_body
    %s14 = ssub.s32 %s9, 1
    %s15 = ssub.s32 %s9, 2
    %s22 = sadd.s32 1, %s17
    %p23 = scmp.ge.s32.totalorder %s22, 1
    %s24 = scalar_select %p23, 0, %s22
    %s25 = sadd.s32 1, %s16
    %s26 = scalar_select %p23, %s25, %s16
    %p27 = scmp.ge.s32.totalorder %s26, 2
    %s28 = scalar_select %p27, 0, %s26
    %s29 = ssub.s32 %s16, %s28
    %s30 = ssub.s32 %s17, %s24
    %s31 = sor.u32 %s29, %s30
    %p32 = scmp.eq.s32.totalorder %s31, 0
    %s34 = sadd.s32 %s33, 1
    %s35 = scalar_select %p32, %s33, %s34
    %p38 = pneg %p32
    %p39 = scmp.eq.s32.totalorder %s9, 1
    %p40 = por %p38, %p39
    %p41 = scmp.ne.s32.totalorder %s33, %s36
    %p42 = scmp.eq.s32.totalorder %s9, 0
    %p43 = por %p41, %p42
    %p44 = scmp.ne.s32.totalorder %s33, %s36
    %p45 = scmp.eq.s32.totalorder %s14, 1
    %p46 = por %p44, %p45
    %p47 = scmp.ne.s32.totalorder %s36, %s37
    %p48 = scmp.eq.s32.totalorder %s14, 0
    %p49 = por %p47, %p48
    %p50 = scmp.ne.s32.totalorder %s36, %s37
    %p51 = scmp.eq.s32.totalorder %s15, 1
    %p52 = por %p50, %p51
    %p54 = scmp.ne.s32.totalorder %s37, %s53
    %p55 = scmp.eq.s32.totalorder %s15, 0
    %p56 = por %p54, %p55
    %s58 = sadd.s32 %s57, 1
    %p61 = scmp.eq.s32.totalorder %s9, 1
    %p62 = scmp.ne.s32.totalorder %s57, %s59
    %p63 = scmp.eq.s32.totalorder %s9, 0
    %p64 = por %p62, %p63
    %p65 = scmp.ne.s32.totalorder %s57, %s59
    %p66 = scmp.eq.s32.totalorder %s14, 1
    %p67 = por %p65, %p66
    %p68 = scmp.ne.s32.totalorder %s59, %s60
    %p69 = scmp.eq.s32.totalorder %s14, 0
    %p70 = por %p68, %p69
    %p71 = scmp.ne.s32.totalorder %s59, %s60
    %p72 = scmp.eq.s32.totalorder %s15, 1
    %p73 = por %p71, %p72
    %p75 = scmp.ne.s32.totalorder %s60, %s74
    %p76 = scmp.eq.s32.totalorder %s15, 0
    %p77 = por %p75, %p76
    %s79 = sadd.s32 %s78, 1
    %p82 = scmp.eq.s32.totalorder %s9, 1
    %p83 = scmp.ne.s32.totalorder %s78, %s80
    %p84 = scmp.eq.s32.totalorder %s9, 0
    %p85 = por %p83, %p84
    %p86 = scmp.ne.s32.totalorder %s78, %s80
    %p87 = scmp.eq.s32.totalorder %s14, 1
    %p88 = por %p86, %p87
    %p89 = scmp.ne.s32.totalorder %s80, %s81
    %p90 = scmp.eq.s32.totalorder %s14, 0
    %p91 = por %p89, %p90
    %p92 = scmp.ne.s32.totalorder %s80, %s81
    %p93 = scmp.eq.s32.totalorder %s15, 1
    %p94 = por %p92, %p93
    %p96 = scmp.ne.s32.totalorder %s81, %s95
    %p97 = scmp.eq.s32.totalorder %s15, 0
    %p98 = por %p96, %p97
    %s99 = ssub.s32 %s16, %s28
    %s100 = ssub.s32 %s17, %s24
    %s101 = sor.u32 %s99, %s100
    %p102 = scmp.eq.s32.totalorder %s101, 0
    %s104 = sadd.s32 %s103, 1
    %s105 = scalar_select %p102, %s103, %s104
    %p108 = pneg %p102
    %p109 = scmp.eq.s32.totalorder %s9, 1
    %p110 = por %p108, %p109
    %p111 = scmp.ne.s32.totalorder %s103, %s106
    %p112 = scmp.eq.s32.totalorder %s9, 0
    %p113 = por %p111, %p112
    %p114 = scmp.ne.s32.totalorder %s103, %s106
    %p115 = scmp.eq.s32.totalorder %s14, 1
    %p116 = por %p114, %p115
    %p117 = scmp.ne.s32.totalorder %s106, %s107
    %p118 = scmp.eq.s32.totalorder %s14, 0
    %p119 = por %p117, %p118
    %p120 = scmp.ne.s32.totalorder %s106, %s107
    %p121 = scmp.eq.s32.totalorder %s15, 1
    %p122 = por %p120, %p121
    %p124 = scmp.ne.s32.totalorder %s107, %s123
    %p125 = scmp.eq.s32.totalorder %s15, 0
    %p126 = por %p124, %p125
    %p127 = scmp.le.s32.totalorder 1, %s9
    %p128 = scmp.lt.s32.totalorder %s9, 3
    %p129 = pnand %p127, %p128
    %p130 = pneg %p129
    // Predicated region
    $region9: #{decoder_block.3} parent=5 // pred_check
      _
    $region10: #{decoder_block.3} parent=5 // pred_check_branch
      %132 = sbr.rel (%p129) target = $region12
    $region11: #{decoder_block.3} parent=5 // pred_region
      %s133 = ssub.s32 %s9, 1
      // Predicated region
      $region13: #{decoder_block.3} parent=11 // pred_check
        %p134 = pneg %p70
      $region14: #{decoder_block.3} parent=11 // pred_check_branch
        %136 = sbr.rel (%p134) target = $region16
      $region15: #{decoder_block.3} parent=11 // pred_region
        _
      $region16: #{decoder_block.3} parent=11 // pred_fallthru
        _
      // Predicated region
      $region17: #{decoder_block.3} parent=11 // pred_check
        %p137 = pneg %p91
      $region18: #{decoder_block.3} parent=11 // pred_check_branch
        %139 = sbr.rel (%p137) target = $region20
      $region19: #{decoder_block.3} parent=11 // pred_region
        _
      $region20: #{decoder_block.3} parent=11 // pred_fallthru
        _
    $region12: #{decoder_block.3} parent=5 // pred_fallthru
      _
    %p140 = scmp.lt.s32.totalorder %s9, 2
    // Predicated region
    $region21: #{decoder_block.3} parent=5 // pred_check
      %p141 = pneg %p140
    $region22: #{decoder_block.3} parent=5 // pred_check_branch
      %143 = sbr.rel (%p141) target = $region24
    $region23: #{decoder_block.3} parent=5 // pred_region
      // Predicated region
      $region25: #{decoder_block.3} parent=23 // pred_check
        %p144 = pneg %p43
      $region26: #{decoder_block.3} parent=23 // pred_check_branch
        %146 = sbr.rel (%p144) target = $region28
      $region27: #{decoder_block.3} parent=23 // pred_region
        %s147 = smul.u32 3, %s17
        %p148 = scmp.lt.s32.totalorder %s16, 1
        %s149 = scalar_select %p148, %s16, 1
        %p150 = scmp.lt.s32.totalorder %s147, 2
        %s151 = scalar_select %p150, %s147, 2
        %s152 = smul.addr %s149, 12
        %s153 = sadd.s32 %s151, %s152
        %s154 = smul.addr %s153, 4
        %s155 = scalar_lea.vmem %s0, %s154
        %s156 = smul.u32 3, %s17
      $region28: #{decoder_block.3} parent=23 // pred_fallthru
        _
    $region24: #{decoder_block.3} parent=5 // pred_fallthru
      _
    %p157 = scmp.le.s32.totalorder 1, %s9
    %p158 = scmp.lt.s32.totalorder %s9, 3
    %p159 = pnand %p157, %p158
    %p160 = pneg %p159
    // Predicated region
    $region29: #{decoder_block.3} parent=5 // pred_check
      _
    $region30: #{decoder_block.3} parent=5 // pred_check_branch
      %162 = sbr.rel (%p159) target = $region32
    $region31: #{decoder_block.3} parent=5 // pred_region
      %s163 = ssub.s32 %s9, 1
      %s164 = smul.u32 3, %s19
      %p165 = scmp.lt.s32.totalorder %s18, 1
      %s166 = scalar_select %p165, %s18, 1
      %p167 = scmp.lt.s32.totalorder %s164, 2
      %s168 = scalar_select %p167, %s164, 2
      %s169 = smul.addr %s166, 12
      %s170 = sadd.s32 %s168, %s169
      %s171 = smul.addr %s170, 4
      %s172 = scalar_lea.vmem %s0, %s171
      %p173 = pneg %p49
      %p174 = pneg %p46
      %p175 = pneg %p70
      %p176 = pneg %p67
      %p177 = pneg %p91
      %p178 = pneg %p88
      %p179 = pneg %p119
      %p180 = pneg %p116
      %s181 = smul.u32 3, %s19
      %p182 = scmp.lt.s32.totalorder %s18, 1
      %s183 = scalar_select %p182, %s18, 1
      %p184 = scmp.lt.s32.totalorder %s181, 2
      %s185 = scalar_select %p184, %s181, 2
      %s186 = smul.addr %s183, 12
      %s187 = sadd.s32 %s185, %s186
      %s188 = smul.addr %s187, 4
      %s189 = scalar_lea.vmem %s3, %s188
      %s190 = smul.u32 3, %s19
      %p191 = scmp.lt.s32.totalorder %s18, 1
      %s192 = scalar_select %p191, %s18, 1
      %p193 = scmp.lt.s32.totalorder %s190, 2
      %s194 = scalar_select %p193, %s190, 2
      %s195 = smul.addr %s192, 12
      %s196 = sadd.s32 %s194, %s195
      %s197 = smul.addr %s196, 4
      %s198 = scalar_lea.vmem %s0, %s197
      %s199 = smul.u32 3, %s19
      %s200 = smul.u32 3, %s19
      %p201 = scmp.lt.s32.totalorder %s18, 1
      %s202 = scalar_select %p201, %s18, 1
      %p203 = scmp.lt.s32.totalorder %s200, 2
      %s204 = scalar_select %p203, %s200, 2
      %s205 = smul.addr %s202, 12
      %s206 = sadd.s32 %s204, %s205
      %s207 = smul.addr %s206, 4
      %s208 = scalar_lea.vmem %s3, %s207
      %s209 = smul.u32 3, %s19
      %v210 = vld [vmem:[%s198] sm:$0xff]
      %v211 = vld [vmem:[%s198 + $0x8] sm:$0xf]
      %v212 = vld [vmem:[%s198 + $0xc] sm:$0xff]
      %v213 = vld [vmem:[%s198 + $0x14] sm:$0xf]
      %v214 = vld [vmem:[%s198 + $0x18] sm:$0xff]
      %v215 = vld [vmem:[%s198 + $0x20] sm:$0xf]
      %v216 = vld [vmem:[%s198 + $0x24] sm:$0xff]
      %v217 = vld [vmem:[%s198 + $0x2c] sm:$0xf]
      %v218 = vunpack.c.l.bf16 %v210
      %v219 = vunpack.c.h.bf16 %v210
      %v220 = vunpack.c.l.bf16 %v211
      %v221 = vunpack.c.l.bf16 %v212
      %v222 = vunpack.c.h.bf16 %v212
      %v223 = vunpack.c.l.bf16 %v213
      %v224 = vunpack.c.l.bf16 %v214
      %v225 = vunpack.c.h.bf16 %v214
      %v226 = vunpack.c.l.bf16 %v215
      %v227 = vunpack.c.l.bf16 %v216
      %v228 = vunpack.c.h.bf16 %v216
      %v229 = vunpack.c.l.bf16 %v217
      %v230 = vld [vmem:[%s1] sm:$0xff]
      %232 = vset.pattern.permute.xlu0 0
      %233 = vperm.xlu0 %232, %v230
      %v234 = vpop.permute.xlu0 %233
      %v236 = vmul.f32 %v218, %v234
      %v237 = vmul.f32 %v219, %v234
      %v238 = vmul.f32 %v220, %v234
      %v239 = vmul.f32 %v221, %v234
      %v240 = vmul.f32 %v222, %v234
      %v241 = vmul.f32 %v223, %v234
      %v242 = vmul.f32 %v224, %v234
      %v243 = vmul.f32 %v225, %v234
      %v244 = vmul.f32 %v226, %v234
      %v245 = vmul.f32 %v227, %v234
      %v246 = vmul.f32 %v228, %v234
      %v247 = vmul.f32 %v229, %v234
      %v248 = vld [vmem:[%s2] sm:$0xff]
      %250 = vset.pattern.permute.xlu0 0
      %251 = vperm.xlu0 %250, %v248
      %v252 = vpop.permute.xlu0 %251
      %v254 = vadd.f32 %v236, %v252
      %v255 = vadd.f32 %v237, %v252
      %v256 = vadd.f32 %v238, %v252
      %v257 = vadd.f32 %v239, %v252
      %v258 = vadd.f32 %v240, %v252
      %v259 = vadd.f32 %v241, %v252
      %v260 = vadd.f32 %v242, %v252
      %v261 = vadd.f32 %v243, %v252
      %v262 = vadd.f32 %v244, %v252
      %v263 = vadd.f32 %v245, %v252
      %v264 = vadd.f32 %v246, %v252
      %v265 = vadd.f32 %v247, %v252
      %v266 = vmax.f32 %v254, 0.0
      %v267 = vmax.f32 %v255, 0.0
      %v268 = vmax.f32 %v256, 0.0
      %v269 = vmax.f32 %v257, 0.0
      %v270 = vmax.f32 %v258, 0.0
      %v271 = vmax.f32 %v259, 0.0
      %v272 = vmax.f32 %v260, 0.0
      %v273 = vmax.f32 %v261, 0.0
      %v274 = vmax.f32 %v262, 0.0
      %v275 = vmax.f32 %v263, 0.0
      %v276 = vmax.f32 %v264, 0.0
      %v277 = vmax.f32 %v265, 0.0
      %v278 = vpack.c.bf16 %v266, %v266
      %v279 = vpack.c.bf16 %v267, %v267
      %v280 = vpack.c.bf16 %v268, %v268
      %v281 = vpack.c.bf16 %v269, %v269
      %v282 = vpack.c.bf16 %v270, %v270
      %v283 = vpack.c.bf16 %v271, %v271
      %v284 = vpack.c.bf16 %v272, %v272
      %v285 = vpack.c.bf16 %v273, %v273
      %v286 = vpack.c.bf16 %v274, %v274
      %v287 = vpack.c.bf16 %v275, %v275
      %v288 = vpack.c.bf16 %v276, %v276
      %v289 = vpack.c.bf16 %v277, %v277
      %v302 = vunpack.c.l.b16 %v278
      %v303 = vunpack.c.l.b16 %v279
      %v304 = vunpack.c.l.b16 %v280
      %v305 = vunpack.c.l.b16 %v281
      %v306 = vunpack.c.l.b16 %v282
      %v307 = vunpack.c.l.b16 %v283
      %v308 = vunpack.c.l.b16 %v284
      %v309 = vunpack.c.l.b16 %v285
      %v310 = vunpack.c.l.b16 %v286
      %v311 = vunpack.c.l.b16 %v287
      %v312 = vunpack.c.l.b16 %v288
      %v313 = vunpack.c.l.b16 %v289
      %v314 = vpack.c.b16 %v303, %v302
      %v315 = vpack.c.b16 %v304, %v304
      %v316 = vpack.c.b16 %v306, %v305
      %v317 = vpack.c.b16 %v307, %v307
      %v318 = vpack.c.b16 %v309, %v308
      %v319 = vpack.c.b16 %v310, %v310
      %v320 = vpack.c.b16 %v312, %v311
      %v321 = vpack.c.b16 %v313, %v313
      %330 = vst [vmem:[%s208] sm:$0xff] %v314
      %331 = vst [vmem:[%s208 + $0x8] sm:$0xf] %v315
      %332 = vst [vmem:[%s208 + $0xc] sm:$0xff] %v316
      %333 = vst [vmem:[%s208 + $0x14] sm:$0xf] %v317
      %334 = vst [vmem:[%s208 + $0x18] sm:$0xff] %v318
      %335 = vst [vmem:[%s208 + $0x20] sm:$0xf] %v319
      %336 = vst [vmem:[%s208 + $0x24] sm:$0xff] %v320
      %337 = vst [vmem:[%s208 + $0x2c] sm:$0xf] %v321
      %s338 = smul.u32 3, %s19
      %p339 = scmp.lt.s32.totalorder %s18, 1
      %s340 = scalar_select %p339, %s18, 1
      %p341 = scmp.lt.s32.totalorder %s338, 2
      %s342 = scalar_select %p341, %s338, 2
      %s343 = smul.addr %s340, 12
      %s344 = sadd.s32 %s342, %s343
      %s345 = smul.addr %s344, 4
      %s346 = scalar_lea.vmem %s3, %s345
      // Predicated region
      $region33: #{decoder_block.3} parent=31 // pred_check
        %p347 = pneg %p116
      $region34: #{decoder_block.3} parent=31 // pred_check_branch
        %349 = sbr.rel (%p347) target = $region36
      $region35: #{decoder_block.3} parent=31 // pred_region
        %s350 = smul.u32 3, %s19
      $region36: #{decoder_block.3} parent=31 // pred_fallthru
        _
    $region32: #{decoder_block.3} parent=5 // pred_fallthru
      _
    %p351 = scmp.le.s32.totalorder 2, %s9
    // Predicated region
    $region37: #{decoder_block.3} parent=5 // pred_check
      %p352 = pneg %p351
    $region38: #{decoder_block.3} parent=5 // pred_check_branch
      %354 = sbr.rel (%p352) target = $region40
    $region39: #{decoder_block.3} parent=5 // pred_region
      %s355 = ssub.s32 %s9, 2
      // Predicated region
      $region41: #{decoder_block.3} parent=39 // pred_check
        %p356 = pneg %p122
      $region42: #{decoder_block.3} parent=39 // pred_check_branch
        %358 = sbr.rel (%p356) target = $region44
      $region43: #{decoder_block.3} parent=39 // pred_region
        %s359 = smul.u32 3, %s21
        %p360 = scmp.lt.s32.totalorder %s20, 1
        %s361 = scalar_select %p360, %s20, 1
        %p362 = scmp.lt.s32.totalorder %s359, 2
        %s363 = scalar_select %p362, %s359, 2
        %s364 = smul.addr %s361, 12
        %s365 = sadd.s32 %s363, %s364
        %s366 = smul.addr %s365, 4
        %s367 = scalar_lea.vmem %s3, %s366
      $region44: #{decoder_block.3} parent=39 // pred_fallthru
        _
    $region40: #{decoder_block.3} parent=5 // pred_fallthru
      _
  $region6: #{decoder_block.3} parent=0 // loop_footer
    %s13 = sadd.s32 1, %s9
  $region7: #{decoder_block.3} parent=0 // loop_footer_branch
    %8 = sbr.rel target = $region3
  $region8: #{decoder_block.3} parent=0 // loop_exit
    _

// kernel: decoder_block.2
$region0: #{decoder_block.2}
  #allocation0 [shape = 'u32[]', space=smem, size = 0x4, offset = 0x4, fixed_abs, tag = 'smem constant byte address 0x4 - core index']
  #allocation1 [shape = 'u32[144,128]{1,0:T(1,128)}', space=vmem, size = 0x12000, scoped, tag = 'internal scratch']
  %s0 = inlined_call_operand.vmem [shape: bf16[2,4,768], index: 0, kind: input, shape index: {}, may-alias: {0,1}]
  %s1 = inlined_call_operand.vmem [shape: bf16[2,4,768], index: 1, kind: input, shape index: {}, may-alias: {0,1}]
  %s2 = inlined_call_operand.vmem [shape: bf16[16,8,4], index: 2, kind: input, shape index: {}]
  %s3 = inlined_call_operand.vmem [shape: bf16[2,4,8,384], index: 3, kind: output, shape index: {0}]
  %s4 = inlined_call_operand.vmem [shape: f32[2,1,4,8,2], index: 4, kind: output, shape index: {1}]
  %5 = xla_tuple %s3, %s4
  %s6 = sld [smem:[#allocation0]]
  $region53: #{decoder_block.2} parent=0
    _
  %s8 = ssub.s32 1, %s6
  %s9 = scalar_select 0, %s8, %s6
  loop: start=0, step=1, limit=4
  $region2: #{decoder_block.2} parent=0 // loop_pre_header
    _
  $region3: #{decoder_block.2} parent=0 // loop_header
    %s11 = sphi 0, %s15
    %p12 = scmp.ge.s32.totalorder %s11, 4
    %s18 = sphi 0, %s37
    %s19 = sphi 0, %s33
    %s20 = sphi 0, %s29
    %s21 = sphi 0, %s18
    %s22 = sphi 0, %s19
    %s23 = sphi 0, %s20
    %s24 = sphi 0, %s21
    %s25 = sphi 0, %s22
    %s26 = sphi 0, %s23
    %s42 = sphi 0, %s44
    %s45 = sphi 0, %s42
    %s46 = sphi 0, %s45
    %s62 = sphi 0, %s46
    %s74 = sphi 0, %s76
    %s77 = sphi 0, %s74
    %s78 = sphi 0, %s77
    %s94 = sphi 0, %s78
    %s100 = sphi 0, %s102
    %s103 = sphi 0, %s100
    %s104 = sphi 0, %s103
    %s120 = sphi 0, %s104
    %s130 = sphi 0, %s132
    %s133 = sphi 0, %s130
    %s134 = sphi 0, %s133
    %s150 = sphi 0, %s134
    %s160 = sphi 0, %s162
    %s163 = sphi 0, %s160
    %s164 = sphi 0, %s163
    %s180 = sphi 0, %s164
  $region4: #{decoder_block.2} parent=0 // loop_header_branch
    %14 = sbr.rel (%p12) target = $region8
  $region5: #{decoder_block.2} parent=0 // loop_body
    %s16 = ssub.s32 %s11, 1
    %s17 = ssub.s32 %s11, 2
    %s27 = sadd.s32 1, %s20
    %p28 = scmp.ge.s32.totalorder %s27, 1
    %s29 = scalar_select %p28, 0, %s27
    %s30 = sadd.s32 1, %s19
    %s31 = scalar_select %p28, %s30, %s19
    %p32 = scmp.ge.s32.totalorder %s31, 1
    %s33 = scalar_select %p32, 0, %s31
    %s34 = sadd.s32 1, %s18
    %s35 = scalar_select %p32, %s34, %s18
    %p36 = scmp.ge.s32.totalorder %s35, 2
    %s37 = scalar_select %p36, 0, %s35
    %s38 = ssub.s32 %s18, %s37
    %s39 = ssub.s32 %s19, %s33
    %s40 = sor.u32 %s38, %s39
    %p41 = scmp.eq.s32.totalorder %s40, 0
    %s43 = sadd.s32 %s42, 1
    %s44 = scalar_select %p41, %s42, %s43
    %p47 = pneg %p41
    %p48 = scmp.eq.s32.totalorder %s11, 1
    %p49 = por %p47, %p48
    %p50 = scmp.ne.s32.totalorder %s42, %s45
    %p51 = scmp.eq.s32.totalorder %s11, 0
    %p52 = por %p50, %p51
    %p53 = scmp.ne.s32.totalorder %s42, %s45
    %p54 = scmp.eq.s32.totalorder %s16, 1
    %p55 = por %p53, %p54
    %p56 = scmp.ne.s32.totalorder %s45, %s46
    %p57 = scmp.eq.s32.totalorder %s16, 0
    %p58 = por %p56, %p57
    %p59 = scmp.ne.s32.totalorder %s45, %s46
    %p60 = scmp.eq.s32.totalorder %s17, 1
    %p61 = por %p59, %p60
    %p63 = scmp.ne.s32.totalorder %s46, %s62
    %p64 = scmp.eq.s32.totalorder %s17, 0
    %p65 = por %p63, %p64
    %s66 = sadd.s32 %s19, 1
    %s67 = smul.u32 %s66, 3
    %s68 = sadd.s32 %s33, 1
    %s69 = smul.u32 %s68, 3
    %s70 = ssub.s32 %s18, %s37
    %s71 = ssub.s32 %s67, %s69
    %s72 = sor.u32 %s70, %s71
    %p73 = scmp.eq.s32.totalorder %s72, 0
    %s75 = sadd.s32 %s74, 1
    %s76 = scalar_select %p73, %s74, %s75
    %p79 = pneg %p73
    %p80 = scmp.eq.s32.totalorder %s11, 1
    %p81 = por %p79, %p80
    %p82 = scmp.ne.s32.totalorder %s74, %s77
    %p83 = scmp.eq.s32.totalorder %s11, 0
    %p84 = por %p82, %p83
    %p85 = scmp.ne.s32.totalorder %s74, %s77
    %p86 = scmp.eq.s32.totalorder %s16, 1
    %p87 = por %p85, %p86
    %p88 = scmp.ne.s32.totalorder %s77, %s78
    %p89 = scmp.eq.s32.totalorder %s16, 0
    %p90 = por %p88, %p89
    %p91 = scmp.ne.s32.totalorder %s77, %s78
    %p92 = scmp.eq.s32.totalorder %s17, 1
    %p93 = por %p91, %p92
    %p95 = scmp.ne.s32.totalorder %s78, %s94
    %p96 = scmp.eq.s32.totalorder %s17, 0
    %p97 = por %p95, %p96
    %s98 = ssub.s32 %s20, %s29
    %p99 = scmp.eq.s32.totalorder %s98, 0
    %s101 = sadd.s32 %s100, 1
    %s102 = scalar_select %p99, %s100, %s101
    %p105 = pneg %p99
    %p106 = scmp.eq.s32.totalorder %s11, 1
    %p107 = por %p105, %p106
    %p108 = scmp.ne.s32.totalorder %s100, %s103
    %p109 = scmp.eq.s32.totalorder %s11, 0
    %p110 = por %p108, %p109
    %p111 = scmp.ne.s32.totalorder %s100, %s103
    %p112 = scmp.eq.s32.totalorder %s16, 1
    %p113 = por %p111, %p112
    %p114 = scmp.ne.s32.totalorder %s103, %s104
    %p115 = scmp.eq.s32.totalorder %s16, 0
    %p116 = por %p114, %p115
    %p117 = scmp.ne.s32.totalorder %s103, %s104
    %p118 = scmp.eq.s32.totalorder %s17, 1
    %p119 = por %p117, %p118
    %p121 = scmp.ne.s32.totalorder %s104, %s120
    %p122 = scmp.eq.s32.totalorder %s17, 0
    %p123 = por %p121, %p122
    %s124 = ssub.s32 %s18, %s37
    %s125 = ssub.s32 %s20, %s29
    %s126 = sor.u32 %s124, %s125
    %s127 = ssub.s32 %s19, %s33
    %s128 = sor.u32 %s126, %s127
    %p129 = scmp.eq.s32.totalorder %s128, 0
    %s131 = sadd.s32 %s130, 1
    %s132 = scalar_select %p129, %s130, %s131
    %p135 = pneg %p129
    %p136 = scmp.eq.s32.totalorder %s11, 1
    %p137 = por %p135, %p136
    %p138 = scmp.ne.s32.totalorder %s130, %s133
    %p139 = scmp.eq.s32.totalorder %s11, 0
    %p140 = por %p138, %p139
    %p141 = scmp.ne.s32.totalorder %s130, %s133
    %p142 = scmp.eq.s32.totalorder %s16, 1
    %p143 = por %p141, %p142
    %p144 = scmp.ne.s32.totalorder %s133, %s134
    %p145 = scmp.eq.s32.totalorder %s16, 0
    %p146 = por %p144, %p145
    %p147 = scmp.ne.s32.totalorder %s133, %s134
    %p148 = scmp.eq.s32.totalorder %s17, 1
    %p149 = por %p147, %p148
    %p151 = scmp.ne.s32.totalorder %s134, %s150
    %p152 = scmp.eq.s32.totalorder %s17, 0
    %p153 = por %p151, %p152
    %s154 = ssub.s32 %s18, %s37
    %s155 = ssub.s32 %s19, %s33
    %s156 = sor.u32 %s154, %s155
    %s157 = ssub.s32 %s20, %s29
    %s158 = sor.u32 %s156, %s157
    %p159 = scmp.eq.s32.totalorder %s158, 0
    %s161 = sadd.s32 %s160, 1
    %s162 = scalar_select %p159, %s160, %s161
    %p165 = pneg %p159
    %p166 = scmp.eq.s32.totalorder %s11, 1
    %p167 = por %p165, %p166
    %p168 = scmp.ne.s32.totalorder %s160, %s163
    %p169 = scmp.eq.s32.totalorder %s11, 0
    %p170 = por %p168, %p169
    %p171 = scmp.ne.s32.totalorder %s160, %s163
    %p172 = scmp.eq.s32.totalorder %s16, 1
    %p173 = por %p171, %p172
    %p174 = scmp.ne.s32.totalorder %s163, %s164
    %p175 = scmp.eq.s32.totalorder %s16, 0
    %p176 = por %p174, %p175
    %p177 = scmp.ne.s32.totalorder %s163, %s164
    %p178 = scmp.eq.s32.totalorder %s17, 1
    %p179 = por %p177, %p178
    %p181 = scmp.ne.s32.totalorder %s164, %s180
    %p182 = scmp.eq.s32.totalorder %s17, 0
    %p183 = por %p181, %p182
    %p184 = scmp.le.s32.totalorder 1, %s11
    %p185 = scmp.lt.s32.totalorder %s11, 3
    %p186 = pnand %p184, %p185
    %p187 = pneg %p186
    // Predicated region
    $region9: #{decoder_block.2} parent=5 // pred_check
      _
    $region10: #{decoder_block.2} parent=5 // pred_check_branch
      %189 = sbr.rel (%p186) target = $region12
    $region11: #{decoder_block.2} parent=5 // pred_region
      %s190 = ssub.s32 %s11, 1
      // Predicated region
      $region13: #{decoder_block.2} parent=11 // pred_check
        %p191 = pneg %p116
      $region14: #{decoder_block.2} parent=11 // pred_check_branch
        %193 = sbr.rel (%p191) target = $region16
      $region15: #{decoder_block.2} parent=11 // pred_region
        %p194 = scmp.lt.s32.totalorder %s23, 0
        %s195 = scalar_select %p194, %s23, 0
        %s196 = smul.addr %s195, 4
        %s197 = scalar_lea.vmem %s2, %s196
      $region16: #{decoder_block.2} parent=11 // pred_fallthru
        _
    $region12: #{decoder_block.2} parent=5 // pred_fallthru
      _
    %p198 = scmp.lt.s32.totalorder %s11, 2
    // Predicated region
    $region17: #{decoder_block.2} parent=5 // pred_check
      %p199 = pneg %p198
    $region18: #{decoder_block.2} parent=5 // pred_check_branch
      %201 = sbr.rel (%p199) target = $region20
    $region19: #{decoder_block.2} parent=5 // pred_region
      // Predicated region
      $region21: #{decoder_block.2} parent=19 // pred_check
        %p202 = pneg %p52
      $region22: #{decoder_block.2} parent=19 // pred_check_branch
        %204 = sbr.rel (%p202) target = $region24
      $region23: #{decoder_block.2} parent=19 // pred_region
        %s205 = smul.u32 3, %s19
        %p206 = scmp.lt.s32.totalorder %s18, 1
        %s207 = scalar_select %p206, %s18, 1
        %p208 = scmp.lt.s32.totalorder %s205, 5
        %s209 = scalar_select %p208, %s205, 5
        %s210 = smul.addr %s207, 6
        %s211 = sadd.s32 %s209, %s210
        %s212 = smul.addr %s211, 2
        %s213 = scalar_lea.vmem %s0, %s212
        %s214 = smul.u32 3, %s19
      $region24: #{decoder_block.2} parent=19 // pred_fallthru
        _
      // Predicated region
      $region25: #{decoder_block.2} parent=19 // pred_check
        %p215 = pneg %p84
      $region26: #{decoder_block.2} parent=19 // pred_check_branch
        %217 = sbr.rel (%p215) target = $region28
      $region27: #{decoder_block.2} parent=19 // pred_region
        %s218 = sadd.s32 %s19, 1
        %s219 = smul.u32 %s218, 3
        %p220 = scmp.lt.s32.totalorder %s18, 1
        %s221 = scalar_select %p220, %s18, 1
        %p222 = scmp.lt.s32.totalorder %s219, 5
        %s223 = scalar_select %p222, %s219, 5
        %s224 = smul.addr %s221, 6
        %s225 = sadd.s32 %s223, %s224
        %s226 = smul.addr %s225, 2
        %s227 = scalar_lea.vmem %s1, %s226
        %s228 = sadd.s32 %s19, 1
        %s229 = smul.u32 %s228, 3
      $region28: #{decoder_block.2} parent=19 // pred_fallthru
        _
    $region20: #{decoder_block.2} parent=5 // pred_fallthru
      _
    %p230 = scmp.le.s32.totalorder 1, %s11
    %p231 = scmp.lt.s32.totalorder %s11, 3
    %p232 = pnand %p230, %p231
    %p233 = pneg %p232
    // Predicated region
    $region29: #{decoder_block.2} parent=5 // pred_check
      _
    $region30: #{decoder_block.2} parent=5 // pred_check_branch
      %235 = sbr.rel (%p232) target = $region32
    $region31: #{decoder_block.2} parent=5 // pred_region
      %s236 = ssub.s32 %s11, 1
      %s237 = smul.u32 3, %s22
      %p238 = scmp.lt.s32.totalorder %s21, 1
      %s239 = scalar_select %p238, %s21, 1
      %p240 = scmp.lt.s32.totalorder %s237, 5
      %s241 = scalar_select %p240, %s237, 5
      %s242 = smul.addr %s239, 6
      %s243 = sadd.s32 %s241, %s242
      %s244 = smul.addr %s243, 2
      %s245 = scalar_lea.vmem %s0, %s244
      %p246 = pneg %p58
      %p247 = pneg %p55
      %s248 = sadd.s32 %s22, 1
      %s249 = smul.u32 %s248, 3
      %p250 = scmp.lt.s32.totalorder %s21, 1
      %s251 = scalar_select %p250, %s21, 1
      %p252 = scmp.lt.s32.totalorder %s249, 5
      %s253 = scalar_select %p252, %s249, 5
      %s254 = smul.addr %s251, 6
      %s255 = sadd.s32 %s253, %s254
      %s256 = smul.addr %s255, 2
      %s257 = scalar_lea.vmem %s1, %s256
      %p258 = pneg %p90
      %p259 = pneg %p87
      %p260 = scmp.lt.s32.totalorder %s23, 0
      %s261 = scalar_select %p260, %s23, 0
      %s262 = smul.addr %s261, 4
      %s263 = scalar_lea.vmem %s2, %s262
      %p264 = pneg %p116
      %p265 = pneg %p113
      %p266 = pneg %p146
      %p267 = pneg %p143
      %s268 = smul.u32 3, %s22
      %p269 = scmp.lt.s32.totalorder %s21, 1
      %s270 = scalar_select %p269, %s21, 1
      %p271 = scmp.lt.s32.totalorder %s23, 0
      %s272 = scalar_select %p271, %s23, 0
      %p273 = scmp.lt.s32.totalorder %s268, 2
      %s274 = scalar_select %p273, %s268, 2
      %s275 = smul.addr %s272, 3
      %s276 = sadd.s32 %s274, %s275
      %s277 = smul.addr %s270, 12
      %s278 = sadd.s32 %s276, %s277
      %s279 = smul.addr %s278, 4
      %s280 = scalar_lea.vmem %s3, %s279
      %p281 = pneg %p176
      %p282 = pneg %p173
      %p283 = scmp.lt.s32.totalorder %s21, 1
      %s284 = scalar_select %p283, %s21, 1
      %p285 = scmp.lt.s32.totalorder %s22, 0
      %s286 = scalar_select %p285, %s22, 0
      %p287 = scmp.lt.s32.totalorder %s23, 0
      %s288 = scalar_select %p287, %s23, 0
      %s289 = smul.addr %s286, 4
      %s290 = sadd.s32 %s288, %s289
      %s291 = smul.addr %s284, 4
      %s292 = sadd.s32 %s290, %s291
      %s293 = smul.addr %s292, 8
      %s294 = scalar_lea.vmem %s4, %s293
      %s295 = smul.u32 3, %s22
      %p296 = scmp.lt.s32.totalorder %s21, 1
      %s297 = scalar_select %p296, %s21, 1
      %p298 = scmp.lt.s32.totalorder %s295, 5
      %s299 = scalar_select %p298, %s295, 5
      %s300 = smul.addr %s297, 6
      %s301 = sadd.s32 %s299, %s300
      %s302 = smul.addr %s301, 2
      %s303 = scalar_lea.vmem %s0, %s302
      %s304 = smul.u32 3, %s22
      %s305 = sadd.s32 %s22, 1
      %s306 = smul.u32 %s305, 3
      %p307 = scmp.lt.s32.totalorder %s21, 1
      %s308 = scalar_select %p307, %s21, 1
      %p309 = scmp.lt.s32.totalorder %s306, 5
      %s310 = scalar_select %p309, %s306, 5
      %s311 = smul.addr %s308, 6
      %s312 = sadd.s32 %s310, %s311
      %s313 = smul.addr %s312, 2
      %s314 = scalar_lea.vmem %s1, %s313
      %s315 = sadd.s32 %s22, 1
      %s316 = smul.u32 %s315, 3
      %p317 = scmp.lt.s32.totalorder %s23, 0
      %s318 = scalar_select %p317, %s23, 0
      %s319 = smul.addr %s318, 4
      %s320 = scalar_lea.vmem %s2, %s319
      %s321 = smul.u32 3, %s22
      %p322 = scmp.lt.s32.totalorder %s21, 1
      %s323 = scalar_select %p322, %s21, 1
      %p324 = scmp.lt.s32.totalorder %s23, 0
      %s325 = scalar_select %p324, %s23, 0
      %p326 = scmp.lt.s32.totalorder %s321, 2
      %s327 = scalar_select %p326, %s321, 2
      %s328 = smul.addr %s325, 3
      %s329 = sadd.s32 %s327, %s328
      %s330 = smul.addr %s323, 12
      %s331 = sadd.s32 %s329, %s330
      %s332 = smul.addr %s331, 4
      %s333 = scalar_lea.vmem %s3, %s332
      %s334 = smul.u32 3, %s22
      %p335 = scmp.lt.s32.totalorder %s21, 1
      %s336 = scalar_select %p335, %s21, 1
      %p337 = scmp.lt.s32.totalorder %s22, 0
      %s338 = scalar_select %p337, %s22, 0
      %p339 = scmp.lt.s32.totalorder %s23, 0
      %s340 = scalar_select %p339, %s23, 0
      %s341 = smul.addr %s338, 4
      %s342 = sadd.s32 %s340, %s341
      %s343 = smul.addr %s336, 4
      %s344 = sadd.s32 %s342, %s343
      %s345 = smul.addr %s344, 8
      %s346 = scalar_lea.vmem %s4, %s345
      %v348 = vld [vmem:[%s303] sm:$0x3f]
      %v349 = vld [vmem:[%s314] sm:$0x3]
      %v351 = vcombine.high %v348, %v348
      %v353 = vunpack.c.l.s4 1983009808
      %v354 = vunpack.c.0.s8 %v353
      %v355 = vlaneseq
      %v356 = vshrl.u32 %v355, 7
      %v357 = vsub.s32 %v354, %v356
      %v358 = vrot.slane %v348, %v357
      %v360 = vunpack.c.l.s4 1983009808
      %v361 = vunpack.c.0.s8 %v360
      %v362 = vlaneseq
      %v363 = vshrl.u32 %v362, 7
      %v364 = vsub.s32 %v361, %v363
      %v365 = vrot.slane %v351, %v364
      %v366 = vcombine.high %v358, %v358
      %s367 = smul.u32 %s22, 384
      %v368 = vlaneseq
      %v369 = vand.u32 %v368, 127
      %v370 = vadd.s32 %v369, 128
      %v371 = vadd.s32 %v369, 256
      %v372 = vstv %s367
      %v373 = vadd.s32 %v372, %v369
      %v374 = vadd.s32 %v372, %v370
      %v375 = vadd.s32 %v372, %v371
      %vm376 = vcmp.lt.s32.totalorder %v373, 0
      %v377 = vsub.s32 0, %v373
      %v378 = vsel %vm376, %v377, %v373
      %v379 = vmul.u32.u64.compose %v378, 3817748708
      %v380 = vextract.low.u32 %v379
      %v381 = vextract.high.u32 %v379
      %v382 = vshrl.u32 %v381, 4
      %v383 = vmul.u32 %v382, 18
      %v384 = vsub.s32 %v378, %v383
      %v385 = vsub.s32 0, %v384
      %v386 = vsel %vm376, %v385, %v384
      %vm387 = vcmp.lt.s32.totalorder %v374, 0
      %v388 = vsub.s32 0, %v374
      %v389 = vsel %vm387, %v388, %v374
      %v390 = vmul.u32.u64.compose %v389, 3817748708
      %v391 = vextract.low.u32 %v390
      %v392 = vextract.high.u32 %v390
      %v393 = vshrl.u32 %v392, 4
      %v394 = vmul.u32 %v393, 18
      %v395 = vsub.s32 %v389, %v394
      %v396 = vsub.s32 0, %v395
      %v397 = vsel %vm387, %v396, %v395
      %vm398 = vcmp.lt.s32.totalorder %v375, 0
      %v399 = vsub.s32 0, %v375
      %v400 = vsel %vm398, %v399, %v375
      %v401 = vmul.u32.u64.compose %v400, 3817748708
      %v402 = vextract.low.u32 %v401
      %v403 = vextract.high.u32 %v401
      %v404 = vshrl.u32 %v403, 4
      %v405 = vmul.u32 %v404, 18
      %v406 = vsub.s32 %v400, %v405
      %v407 = vsub.s32 0, %v406
      %v408 = vsel %vm398, %v407, %v406
      %vm409 = vcmp.ne.s32.totalorder %v386, 0
      %vm410 = vcmp.ne.s32.totalorder %v397, 0
      %vm411 = vcmp.ne.s32.totalorder %v408, 0
      %vm412 = vcmp.lt.s32.totalorder %v386, 0
      %vm413 = vcmp.lt.s32.totalorder %v397, 0
      %vm414 = vcmp.lt.s32.totalorder %v408, 0
      %vm415 = vmand %vm412, %vm409
      %vm416 = vmand %vm413, %vm410
      %vm417 = vmand %vm414, %vm411
      %v418 = vadd.s32 %v386, 18
      %v419 = vadd.s32 %v397, 18
      %v420 = vadd.s32 %v408, 18
      %v421 = vsel %vm415, %v418, %v386
      %v422 = vsel %vm416, %v419, %v397
      %v423 = vsel %vm417, %v420, %v408
      %vm424 = vcmp.lt.s32.totalorder %v421, 16
      %vm425 = vcmp.lt.s32.totalorder %v422, 16
      %vm426 = vcmp.lt.s32.totalorder %v423, 16
      %vm427 = vcmp.lt.s32.totalorder %v373, 288
      %vm428 = vcmp.lt.s32.totalorder %v374, 288
      %vm429 = vcmp.lt.s32.totalorder %v375, 288
      %vm430 = vmand %vm424, %vm427
      %vm431 = vmand %vm425, %vm428
      %vm432 = vmand %vm426, %vm429
      %v433 = vsel %vm430, 1, 0
      %v434 = vsel %vm431, 1, 0
      %v435 = vsel %vm432, 1, 0
      %v436 = vcvt.s32.f32 %v433
      %v437 = vcvt.s32.f32 %v434
      %v438 = vcvt.s32.f32 %v435
      %v439 = vadd.f32 %v436, %v437
      %v440 = vadd.f32 %v439, %v438
      %441 = vadd.xlane.f32.xlu0 %v440
      %v442 = vpop.xlane.xlu0 %441
      %v443 = vmax.f32 %v442, 1.0
      %v444 = vld [vmem:[%s320] sm:$0xf]
      %s445 = scalar_lea.vmem %s320, 4
      %v446 = vld [vmem:[%s445] sm:$0xf]
      %448 = vrot.lane.b32.xlu0 %v358, 127
      %v449 = vpop.permute.xlu0 %448
      %450 = vrot.lane.b32.xlu0 %v366, 127
      %v451 = vpop.permute.xlu0 %450
      %452 = vrot.lane.b32.xlu0 %v365, 127
      %v453 = vpop.permute.xlu0 %452
      %454 = vrot.lane.b32.xlu0 %v349, 127
      %v455 = vpop.permute.xlu0 %454
      %vm456 = vcmask 1039360
      %v457 = vsel %vm456, %v449, %v451
      %v458 = vsel %vm456, %v451, %v453
      %v459 = vsel %vm456, %v453, %v455
      %vm460 = vcmask 31744
      %v462 = vsel %vm460, %v446, 0
      %vm464 = vcmask 1041408
      %v466 = vsel %vm464, %v457, 0
      %v469 = vsel %vm464, %v458, 0
      %v472 = vsel %vm464, %v459, 0
      %474 = vmatprep.subr.bf16.mxu0 %v469
      %475 = vmatpush1.bf16.msra.mxu0 %v466
      %476 = vmatprep.subr.bf16.mxu0 0
      %477 = vmatpush1.bf16.msra.mxu0 0
      %478 = vmatprep.subr.bf16.mxu0 0
      %479 = vmatpush1.bf16.msra.mxu0 0
      %480 = vmatprep.subr.bf16.mxu0 0
      %481 = vmatpush1.bf16.msra.mxu0 0
      %482 = vmatprep.subr.bf16.mxu0 0
      %483 = vmatpush1.bf16.msra.mxu0 0
      %484 = vmatprep.subr.bf16.mxu0 0
      %485 = vmatpush1.bf16.msra.mxu0 0
      %486 = vmatprep.subr.bf16.mxu0 0
      %487 = vmatpush1.bf16.msra.mxu0 0
      %488 = vmatprep.subr.bf16.mxu0 0
      %489 = vmatpush1.bf16.msra.mxu0 0
      %490 = vmatprep.subr.bf16.mxu0 0
      %491 = vmatpush1.bf16.msra.mxu0 0
      %492 = vmatprep.subr.bf16.mxu0 0
      %493 = vmatpush1.bf16.msra.mxu0 0
      %494 = vmatprep.subr.bf16.mxu0 0
      %495 = vmatpush1.bf16.msra.mxu0 0
      %496 = vmatprep.subr.bf16.mxu0 0
      %497 = vmatpush1.bf16.msra.mxu0 0
      %498 = vmatprep.subr.bf16.mxu0 0
      %499 = vmatpush1.bf16.msra.mxu0 0
      %500 = vmatprep.subr.bf16.mxu0 0
      %501 = vmatpush1.bf16.msra.mxu0 0
      %502 = vmatprep.subr.bf16.mxu0 0
      %503 = vmatpush1.bf16.msra.mxu0 0
      %504 = vmatprep.subr.bf16.mxu0 0
      %505 = vmatpush1.bf16.msra.mxu0 0
      %506 = vmatprep.mubr.bf16.mxu0 0
      %507 = vmatmul.mubr.bf16.gmra.mrb[0].mxu0 %v462
      %v508 = vpop.f32.mrb[0].mxu0
      %v509 = vadd.f32 0.0, %v508
      %v510 = vpop.f32.mrb[0].mxu0
      %v511 = vadd.f32 0.0, %v510
      %v512 = vpop.f32.mrb[0].mxu0
      %v513 = vpop.f32.mrb[0].mxu0
      %514 = vdwg.mxu0
      %515 = vmatprep.subr.bf16.mxu0 0
      %516 = vmatpush1.bf16.msra.mxu0 %v472
      %517 = vmatprep.subr.bf16.mxu0 0
      %518 = vmatpush1.bf16.msra.mxu0 0
      %519 = vmatprep.subr.bf16.mxu0 0
      %520 = vmatpush1.bf16.msra.mxu0 0
      %521 = vmatprep.subr.bf16.mxu0 0
      %522 = vmatpush1.bf16.msra.mxu0 0
      %523 = vmatprep.subr.bf16.mxu0 0
      %524 = vmatpush1.bf16.msra.mxu0 0
      %525 = vmatprep.subr.bf16.mxu0 0
      %526 = vmatpush1.bf16.msra.mxu0 0
      %527 = vmatprep.subr.bf16.mxu0 0
      %528 = vmatpush1.bf16.msra.mxu0 0
      %529 = vmatprep.subr.bf16.mxu0 0
      %530 = vmatpush1.bf16.msra.mxu0 0
      %531 = vmatprep.subr.bf16.mxu0 0
      %532 = vmatpush1.bf16.msra.mxu0 0
      %533 = vmatprep.subr.bf16.mxu0 0
      %534 = vmatpush1.bf16.msra.mxu0 0
      %535 = vmatprep.subr.bf16.mxu0 0
      %536 = vmatpush1.bf16.msra.mxu0 0
      %537 = vmatprep.subr.bf16.mxu0 0
      %538 = vmatpush1.bf16.msra.mxu0 0
      %539 = vmatprep.subr.bf16.mxu0 0
      %540 = vmatpush1.bf16.msra.mxu0 0
      %541 = vmatprep.subr.bf16.mxu0 0
      %542 = vmatpush1.bf16.msra.mxu0 0
      %543 = vmatprep.subr.bf16.mxu0 0
      %544 = vmatpush1.bf16.msra.mxu0 0
      %545 = vmatprep.subr.bf16.mxu0 0
      %546 = vmatpush1.bf16.msra.mxu0 0
      %547 = vmatprep.mubr.bf16.mxu0 0
      %548 = vmatmul.mubr.bf16.gmra.mrb[0].mxu0 %v462
      %v549 = vpop.f32.mrb[0].mxu0
      %v550 = vadd.f32 0.0, %v549
      %v551 = vpop.f32.mrb[0].mxu0
      %v552 = vpop.f32.mrb[0].mxu0
      %v553 = vpop.f32.mrb[0].mxu0
      %554 = vdwg.mxu0
      %v556 = vsel %vm460, %v444, 0
      %v559 = vsel %vm464, %v358, 0
      %v562 = vsel %vm464, %v366, 0
      %v565 = vsel %vm464, %v365, 0
      %567 = vmatprep.subr.bf16.mxu0 %v562
      %568 = vmatpush1.bf16.msra.mxu0 %v559
      %569 = vmatprep.subr.bf16.mxu0 0
      %570 = vmatpush1.bf16.msra.mxu0 0
      %571 = vmatprep.subr.bf16.mxu0 0
      %572 = vmatpush1.bf16.msra.mxu0 0
      %573 = vmatprep.subr.bf16.mxu0 0
      %574 = vmatpush1.bf16.msra.mxu0 0
      %575 = vmatprep.subr.bf16.mxu0 0
      %576 = vmatpush1.bf16.msra.mxu0 0
      %577 = vmatprep.subr.bf16.mxu0 0
      %578 = vmatpush1.bf16.msra.mxu0 0
      %579 = vmatprep.subr.bf16.mxu0 0
      %580 = vmatpush1.bf16.msra.mxu0 0
      %581 = vmatprep.subr.bf16.mxu0 0
      %582 = vmatpush1.bf16.msra.mxu0 0
      %583 = vmatprep.subr.bf16.mxu0 0
      %584 = vmatpush1.bf16.msra.mxu0 0
      %585 = vmatprep.subr.bf16.mxu0 0
      %586 = vmatpush1.bf16.msra.mxu0 0
      %587 = vmatprep.subr.bf16.mxu0 0
      %588 = vmatpush1.bf16.msra.mxu0 0
      %589 = vmatprep.subr.bf16.mxu0 0
      %590 = vmatpush1.bf16.msra.mxu0 0
      %591 = vmatprep.subr.bf16.mxu0 0
      %592 = vmatpush1.bf16.msra.mxu0 0
      %593 = vmatprep.subr.bf16.mxu0 0
      %594 = vmatpush1.bf16.msra.mxu0 0
      %595 = vmatprep.subr.bf16.mxu0 0
      %596 = vmatpush1.bf16.msra.mxu0 0
      %597 = vmatprep.subr.bf16.mxu0 0
      %598 = vmatpush1.bf16.msra.mxu0 0
      %599 = vmatprep.mubr.bf16.mxu0 0
      %600 = vmatmul.mubr.bf16.gmra.mrb[0].mxu0 %v556
      %v601 = vpop.f32.mrb[0].mxu0
      %v602 = vadd.f32 %v509, %v601
      %v603 = vpop.f32.mrb[0].mxu0
      %v604 = vadd.f32 %v511, %v603
      %v605 = vpop.f32.mrb[0].mxu0
      %v606 = vpop.f32.mrb[0].mxu0
      %607 = vdwg.mxu0
      %608 = vmatprep.subr.bf16.mxu0 0
      %609 = vmatpush1.bf16.msra.mxu0 %v565
      %610 = vmatprep.subr.bf16.mxu0 0
      %611 = vmatpush1.bf16.msra.mxu0 0
      %612 = vmatprep.subr.bf16.mxu0 0
      %613 = vmatpush1.bf16.msra.mxu0 0
      %614 = vmatprep.subr.bf16.mxu0 0
      %615 = vmatpush1.bf16.msra.mxu0 0
      %616 = vmatprep.subr.bf16.mxu0 0
      %617 = vmatpush1.bf16.msra.mxu0 0
      %618 = vmatprep.subr.bf16.mxu0 0
      %619 = vmatpush1.bf16.msra.mxu0 0
      %620 = vmatprep.subr.bf16.mxu0 0
      %621 = vmatpush1.bf16.msra.mxu0 0
      %622 = vmatprep.subr.bf16.mxu0 0
      %623 = vmatpush1.bf16.msra.mxu0 0
      %624 = vmatprep.subr.bf16.mxu0 0
      %625 = vmatpush1.bf16.msra.mxu0 0
      %626 = vmatprep.subr.bf16.mxu0 0
      %627 = vmatpush1.bf16.msra.mxu0 0
      %628 = vmatprep.subr.bf16.mxu0 0
      %629 = vmatpush1.bf16.msra.mxu0 0
      %630 = vmatprep.subr.bf16.mxu0 0
      %631 = vmatpush1.bf16.msra.mxu0 0
      %632 = vmatprep.subr.bf16.mxu0 0
      %633 = vmatpush1.bf16.msra.mxu0 0
      %634 = vmatprep.subr.bf16.mxu0 0
      %635 = vmatpush1.bf16.msra.mxu0 0
      %636 = vmatprep.subr.bf16.mxu0 0
      %637 = vmatpush1.bf16.msra.mxu0 0
      %638 = vmatprep.subr.bf16.mxu0 0
      %639 = vmatpush1.bf16.msra.mxu0 0
      %640 = vmatprep.mubr.bf16.mxu0 0
      %641 = vmatmul.mubr.bf16.gmra.mrb[0].mxu0 %v556
      %v642 = vpop.f32.mrb[0].mxu0
      %v643 = vadd.f32 %v550, %v642
      %v644 = vpop.f32.mrb[0].mxu0
      %v645 = vpop.f32.mrb[0].mxu0
      %v646 = vpop.f32.mrb[0].mxu0
      %647 = vdwg.mxu0
      %s648 = scalar_lea.vmem %s320, 8
      %v649 = vld [vmem:[%s648] sm:$0xf]
      %650 = vrot.lane.b32.xlu0 %v358, 110
      %v651 = vpop.permute.xlu0 %650
      %652 = vrot.lane.b32.xlu0 %v366, 110
      %v653 = vpop.permute.xlu0 %652
      %654 = vrot.lane.b32.xlu0 %v365, 110
      %v655 = vpop.permute.xlu0 %654
      %656 = vrot.lane.b32.xlu0 %v349, 110
      %v657 = vpop.permute.xlu0 %656
      %vm658 = vcmask 900096
      %v659 = vsel %vm658, %v651, %v653
      %v660 = vsel %vm658, %v653, %v655
      %v661 = vsel %vm658, %v655, %v657
      %v663 = vsel %vm460, %v649, 0
      %v666 = vsel %vm464, %v659, 0
      %v669 = vsel %vm464, %v660, 0
      %v672 = vsel %vm464, %v661, 0
      %674 = vmatprep.subr.bf16.mxu0 %v669
      %675 = vmatpush1.bf16.msra.mxu0 %v666
      %676 = vmatprep.subr.bf16.mxu0 0
      %677 = vmatpush1.bf16.msra.mxu0 0
      %678 = vmatprep.subr.bf16.mxu0 0
      %679 = vmatpush1.bf16.msra.mxu0 0
      %680 = vmatprep.subr.bf16.mxu0 0
      %681 = vmatpush1.bf16.msra.mxu0 0
      %682 = vmatprep.subr.bf16.mxu0 0
      %683 = vmatpush1.bf16.msra.mxu0 0
      %684 = vmatprep.subr.bf16.mxu0 0
      %685 = vmatpush1.bf16.msra.mxu0 0
      %686 = vmatprep.subr.bf16.mxu0 0
      %687 = vmatpush1.bf16.msra.mxu0 0
      %688 = vmatprep.subr.bf16.mxu0 0
      %689 = vmatpush1.bf16.msra.mxu0 0
      %690 = vmatprep.subr.bf16.mxu0 0
      %691 = vmatpush1.bf16.msra.mxu0 0
      %692 = vmatprep.subr.bf16.mxu0 0
      %693 = vmatpush1.bf16.msra.mxu0 0
      %694 = vmatprep.subr.bf16.mxu0 0
      %695 = vmatpush1.bf16.msra.mxu0 0
      %696 = vmatprep.subr.bf16.mxu0 0
      %697 = vmatpush1.bf16.msra.mxu0 0
      %698 = vmatprep.subr.bf16.mxu0 0
      %699 = vmatpush1.bf16.msra.mxu0 0
      %700 = vmatprep.subr.bf16.mxu0 0
      %701 = vmatpush1.bf16.msra.mxu0 0
      %702 = vmatprep.subr.bf16.mxu0 0
      %703 = vmatpush1.bf16.msra.mxu0 0
      %704 = vmatprep.subr.bf16.mxu0 0
      %705 = vmatpush1.bf16.msra.mxu0 0
      %706 = vmatprep.mubr.bf16.mxu0 0
      %707 = vmatmul.mubr.bf16.gmra.mrb[0].mxu0 %v663
      %v708 = vpop.f32.mrb[0].mxu0
      %v709 = vadd.f32 0.0, %v708
      %v710 = vpop.f32.mrb[0].mxu0
      %v711 = vadd.f32 0.0, %v710
      %v712 = vpop.f32.mrb[0].mxu0
      %v713 = vpop.f32.mrb[0].mxu0
      %714 = vdwg.mxu0
      %715 = vmatprep.subr.bf16.mxu0 0
      %716 = vmatpush1.bf16.msra.mxu0 %v672
      %717 = vmatprep.subr.bf16.mxu0 0
      %718 = vmatpush1.bf16.msra.mxu0 0
      %719 = vmatprep.subr.bf16.mxu0 0
      %720 = vmatpush1.bf16.msra.mxu0 0
      %721 = vmatprep.subr.bf16.mxu0 0
      %722 = vmatpush1.bf16.msra.mxu0 0
      %723 = vmatprep.subr.bf16.mxu0 0
      %724 = vmatpush1.bf16.msra.mxu0 0
      %725 = vmatprep.subr.bf16.mxu0 0
      %726 = vmatpush1.bf16.msra.mxu0 0
      %727 = vmatprep.subr.bf16.mxu0 0
      %728 = vmatpush1.bf16.msra.mxu0 0
      %729 = vmatprep.subr.bf16.mxu0 0
      %730 = vmatpush1.bf16.msra.mxu0 0
      %731 = vmatprep.subr.bf16.mxu0 0
      %732 = vmatpush1.bf16.msra.mxu0 0
      %733 = vmatprep.subr.bf16.mxu0 0
      %734 = vmatpush1.bf16.msra.mxu0 0
      %735 = vmatprep.subr.bf16.mxu0 0
      %736 = vmatpush1.bf16.msra.mxu0 0
      %737 = vmatprep.subr.bf16.mxu0 0
      %738 = vmatpush1.bf16.msra.mxu0 0
      %739 = vmatprep.subr.bf16.mxu0 0
      %740 = vmatpush1.bf16.msra.mxu0 0
      %741 = vmatprep.subr.bf16.mxu0 0
      %742 = vmatpush1.bf16.msra.mxu0 0
      %743 = vmatprep.subr.bf16.mxu0 0
      %744 = vmatpush1.bf16.msra.mxu0 0
      %745 = vmatprep.subr.bf16.mxu0 0
      %746 = vmatpush1.bf16.msra.mxu0 0
      %747 = vmatprep.mubr.bf16.mxu0 0
      %748 = vmatmul.mubr.bf16.gmra.mrb[0].mxu0 %v663
      %v749 = vpop.f32.mrb[0].mxu0
      %v750 = vadd.f32 0.0, %v749
      %v751 = vpop.f32.mrb[0].mxu0
      %v752 = vpop.f32.mrb[0].mxu0
      %v753 = vpop.f32.mrb[0].mxu0
      %754 = vdwg.mxu0
      %v755 = vadd.f32 %v602, %v709
      %v756 = vadd.f32 %v604, %v711
      %v757 = vadd.f32 %v643, %v750
      %s758 = scalar_lea.vmem %s320, 12
      %v759 = vld [vmem:[%s758] sm:$0xf]
      %760 = vrot.lane.b32.xlu0 %v358, 109
      %v761 = vpop.permute.xlu0 %760
      %762 = vrot.lane.b32.xlu0 %v366, 109
      %v763 = vpop.permute.xlu0 %762
      %764 = vrot.lane.b32.xlu0 %v365, 109
      %v765 = vpop.permute.xlu0 %764
      %766 = vrot.lane.b32.xlu0 %v349, 109
      %v767 = vpop.permute.xlu0 %766
      %vm768 = vcmask 891904
      %v769 = vsel %vm768, %v761, %v763
      %v770 = vsel %vm768, %v763, %v765
      %v771 = vsel %vm768, %v765, %v767
      %v773 = vsel %vm460, %v759, 0
      %v776 = vsel %vm464, %v769, 0
      %v779 = vsel %vm464, %v770, 0
      %v782 = vsel %vm464, %v771, 0
      %784 = vmatprep.subr.bf16.mxu0 %v779
      %785 = vmatpush1.bf16.msra.mxu0 %v776
      %786 = vmatprep.subr.bf16.mxu0 0
      %787 = vmatpush1.bf16.msra.mxu0 0
      %788 = vmatprep.subr.bf16.mxu0 0
      %789 = vmatpush1.bf16.msra.mxu0 0
      %790 = vmatprep.subr.bf16.mxu0 0
      %791 = vmatpush1.bf16.msra.mxu0 0
      %792 = vmatprep.subr.bf16.mxu0 0
      %793 = vmatpush1.bf16.msra.mxu0 0
      %794 = vmatprep.subr.bf16.mxu0 0
      %795 = vmatpush1.bf16.msra.mxu0 0
      %796 = vmatprep.subr.bf16.mxu0 0
      %797 = vmatpush1.bf16.msra.mxu0 0
      %798 = vmatprep.subr.bf16.mxu0 0
      %799 = vmatpush1.bf16.msra.mxu0 0
      %800 = vmatprep.subr.bf16.mxu0 0
      %801 = vmatpush1.bf16.msra.mxu0 0
      %802 = vmatprep.subr.bf16.mxu0 0
      %803 = vmatpush1.bf16.msra.mxu0 0
      %804 = vmatprep.subr.bf16.mxu0 0
      %805 = vmatpush1.bf16.msra.mxu0 0
      %806 = vmatprep.subr.bf16.mxu0 0
      %807 = vmatpush1.bf16.msra.mxu0 0
      %808 = vmatprep.subr.bf16.mxu0 0
      %809 = vmatpush1.bf16.msra.mxu0 0
      %810 = vmatprep.subr.bf16.mxu0 0
      %811 = vmatpush1.bf16.msra.mxu0 0
      %812 = vmatprep.subr.bf16.mxu0 0
      %813 = vmatpush1.bf16.msra.mxu0 0
      %814 = vmatprep.subr.bf16.mxu0 0
      %815 = vmatpush1.bf16.msra.mxu0 0
      %816 = vmatprep.mubr.bf16.mxu0 0
      %817 = vmatmul.mubr.bf16.gmra.mrb[0].mxu0 %v773
      %v818 = vpop.f32.mrb[0].mxu0
      %v819 = vadd.f32 0.0, %v818
      %v820 = vpop.f32.mrb[0].mxu0
      %v821 = vadd.f32 0.0, %v820
      %v822 = vpop.f32.mrb[0].mxu0
      %v823 = vpop.f32.mrb[0].mxu0
      %824 = vdwg.mxu0
      %825 = vmatprep.subr.bf16.mxu0 0
      %826 = vmatpush1.bf16.msra.mxu0 %v782
      %827 = vmatprep.subr.bf16.mxu0 0
      %828 = vmatpush1.bf16.msra.mxu0 0
      %829 = vmatprep.subr.bf16.mxu0 0
      %830 = vmatpush1.bf16.msra.mxu0 0
      %831 = vmatprep.subr.bf16.mxu0 0
      %832 = vmatpush1.bf16.msra.mxu0 0
      %833 = vmatprep.subr.bf16.mxu0 0
      %834 = vmatpush1.bf16.msra.mxu0 0
      %835 = vmatprep.subr.bf16.mxu0 0
      %836 = vmatpush1.bf16.msra.mxu0 0
      %837 = vmatprep.subr.bf16.mxu0 0
      %838 = vmatpush1.bf16.msra.mxu0 0
      %839 = vmatprep.subr.bf16.mxu0 0
      %840 = vmatpush1.bf16.msra.mxu0 0
      %841 = vmatprep.subr.bf16.mxu0 0
      %842 = vmatpush1.bf16.msra.mxu0 0
      %843 = vmatprep.subr.bf16.mxu0 0
      %844 = vmatpush1.bf16.msra.mxu0 0
      %845 = vmatprep.subr.bf16.mxu0 0
      %846 = vmatpush1.bf16.msra.mxu0 0
      %847 = vmatprep.subr.bf16.mxu0 0
      %848 = vmatpush1.bf16.msra.mxu0 0
      %849 = vmatprep.subr.bf16.mxu0 0
      %850 = vmatpush1.bf16.msra.mxu0 0
      %851 = vmatprep.subr.bf16.mxu0 0
      %852 = vmatpush1.bf16.msra.mxu0 0
      %853 = vmatprep.subr.bf16.mxu0 0
      %854 = vmatpush1.bf16.msra.mxu0 0
      %855 = vmatprep.subr.bf16.mxu0 0
      %856 = vmatpush1.bf16.msra.mxu0 0
      %857 = vmatprep.mubr.bf16.mxu0 0
      %858 = vmatmul.mubr.bf16.gmra.mrb[0].mxu0 %v773
      %v859 = vpop.f32.mrb[0].mxu0
      %v860 = vadd.f32 0.0, %v859
      %v861 = vpop.f32.mrb[0].mxu0
      %v862 = vpop.f32.mrb[0].mxu0
      %v863 = vpop.f32.mrb[0].mxu0
      %864 = vdwg.mxu0
      %v865 = vadd.f32 %v755, %v819
      %v866 = vadd.f32 %v756, %v821
      %v867 = vadd.f32 %v757, %v860
      %v868 = vpack.c.bf16 %v865, %v865
      %v869 = vpack.c.bf16 %v866, %v866
      %v870 = vpack.c.bf16 %v867, %v867
      %v874 = vunpack.c.l.b16 %v868
      %v875 = vunpack.c.l.b16 %v869
      %v876 = vunpack.c.l.b16 %v870
      %v877 = vpack.c.b16 %v875, %v874
      %v878 = vpack.c.b16 %v876, %v876
      %881 = vst [vmem:[%s333] sm:$0xff] %v877
      %882 = vst [vmem:[%s333 + $0x8] sm:$0xf] %v878
      %v883 = vmul.f32 %v865, %v436
      %v884 = vmul.f32 %v866, %v437
      %v885 = vmul.f32 %v867, %v438
      %v886 = vadd.f32 %v883, %v884
      %v887 = vadd.f32 %v886, %v885
      %888 = vadd.xlane.f32.xlu0 %v887
      %v889 = vpop.xlane.xlu0 %888
      %v890 = vrcp.pop %v443
      %v891 = vmul.f32 %v889, %v890
      %v892 = vsub.f32 %v865, %v891
      %v893 = vsub.f32 %v866, %v891
      %v894 = vsub.f32 %v867, %v891
      %v895 = vmul.f32 %v892, %v436
      %v896 = vmul.f32 %v893, %v437
      %v897 = vmul.f32 %v894, %v438
      %v898 = vmul.f32 %v895, %v895
      %v899 = vmul.f32 %v896, %v896
      %v900 = vmul.f32 %v897, %v897
      %v901 = vadd.f32 %v898, %v899
      %v902 = vadd.f32 %v901, %v900
      %903 = vadd.xlane.f32.xlu0 %v902
      %v904 = vpop.xlane.xlu0 %903
      %vm905 = vcmask 7168
      %v906 = vsel %vm905, %v889, %v904
      %vm907 = vcmask 15360
      %908 = vst.msk [vmem:[%s346] sm:$0xff] %vm907, %v906
      %s909 = scalar_lea.vmem %s320, 16
      %v910 = vld [vmem:[%s909] sm:$0xf]
      %s911 = scalar_lea.vmem %s320, 20
      %v912 = vld [vmem:[%s911] sm:$0xf]
      %913 = vrot.lane.b32.xlu0 %v358, 126
      %v914 = vpop.permute.xlu0 %913
      %915 = vrot.lane.b32.xlu0 %v366, 126
      %v916 = vpop.permute.xlu0 %915
      %917 = vrot.lane.b32.xlu0 %v365, 126
      %v918 = vpop.permute.xlu0 %917
      %919 = vrot.lane.b32.xlu0 %v349, 126
      %v920 = vpop.permute.xlu0 %919
      %vm921 = vcmask 1031168
      %v922 = vsel %vm921, %v914, %v916
      %v923 = vsel %vm921, %v916, %v918
      %v924 = vsel %vm921, %v918, %v920
      %v926 = vsel %vm460, %v912, 0
      %v929 = vsel %vm464, %v922, 0
      %v932 = vsel %vm464, %v923, 0
      %v935 = vsel %vm464, %v924, 0
      %937 = vmatprep.subr.bf16.mxu0 %v932
      %938 = vmatpush1.bf16.msra.mxu0 %v929
      %939 = vmatprep.subr.bf16.mxu0 0
      %940 = vmatpush1.bf16.msra.mxu0 0
      %941 = vmatprep.subr.bf16.mxu0 0
      %942 = vmatpush1.bf16.msra.mxu0 0
      %943 = vmatprep.subr.bf16.mxu0 0
      %944 = vmatpush1.bf16.msra.mxu0 0
      %945 = vmatprep.subr.bf16.mxu0 0
      %946 = vmatpush1.bf16.msra.mxu0 0
      %947 = vmatprep.subr.bf16.mxu0 0
      %948 = vmatpush1.bf16.msra.mxu0 0
      %949 = vmatprep.subr.bf16.mxu0 0
      %950 = vmatpush1.bf16.msra.mxu0 0
      %951 = vmatprep.subr.bf16.mxu0 0
      %952 = vmatpush1.bf16.msra.mxu0 0
      %953 = vmatprep.subr.bf16.mxu0 0
      %954 = vmatpush1.bf16.msra.mxu0 0
      %955 = vmatprep.subr.bf16.mxu0 0
      %956 = vmatpush1.bf16.msra.mxu0 0
      %957 = vmatprep.subr.bf16.mxu0 0
      %958 = vmatpush1.bf16.msra.mxu0 0
      %959 = vmatprep.subr.bf16.mxu0 0
      %960 = vmatpush1.bf16.msra.mxu0 0
      %961 = vmatprep.subr.bf16.mxu0 0
      %962 = vmatpush1.bf16.msra.mxu0 0
      %963 = vmatprep.subr.bf16.mxu0 0
      %964 = vmatpush1.bf16.msra.mxu0 0
      %965 = vmatprep.subr.bf16.mxu0 0
      %966 = vmatpush1.bf16.msra.mxu0 0
      %967 = vmatprep.subr.bf16.mxu0 0
      %968 = vmatpush1.bf16.msra.mxu0 0
      %969 = vmatprep.mubr.bf16.mxu0 0
      %970 = vmatmul.mubr.bf16.gmra.mrb[0].mxu0 %v926
      %v971 = vpop.f32.mrb[0].mxu0
      %v972 = vadd.f32 0.0, %v971
      %v973 = vpop.f32.mrb[0].mxu0
      %v974 = vadd.f32 0.0, %v973
      %v975 = vpop.f32.mrb[0].mxu0
      %v976 = vpop.f32.mrb[0].mxu0
      %977 = vdwg.mxu0
      %978 = vmatprep.subr.bf16.mxu0 0
      %979 = vmatpush1.bf16.msra.mxu0 %v935
      %980 = vmatprep.subr.bf16.mxu0 0
      %981 = vmatpush1.bf16.msra.mxu0 0
      %982 = vmatprep.subr.bf16.mxu0 0
      %983 = vmatpush1.bf16.msra.mxu0 0
      %984 = vmatprep.subr.bf16.mxu0 0
      %985 = vmatpush1.bf16.msra.mxu0 0
      %986 = vmatprep.subr.bf16.mxu0 0
      %987 = vmatpush1.bf16.msra.mxu0 0
      %988 = vmatprep.subr.bf16.mxu0 0
      %989 = vmatpush1.bf16.msra.mxu0 0
      %990 = vmatprep.subr.bf16.mxu0 0
      %991 = vmatpush1.bf16.msra.mxu0 0
      %992 = vmatprep.subr.bf16.mxu0 0
      %993 = vmatpush1.bf16.msra.mxu0 0
      %994 = vmatprep.subr.bf16.mxu0 0
      %995 = vmatpush1.bf16.msra.mxu0 0
      %996 = vmatprep.subr.bf16.mxu0 0
      %997 = vmatpush1.bf16.msra.mxu0 0
      %998 = vmatprep.subr.bf16.mxu0 0
      %999 = vmatpush1.bf16.msra.mxu0 0
      %1000 = vmatprep.subr.bf16.mxu0 0
      %1001 = vmatpush1.bf16.msra.mxu0 0
      %1002 = vmatprep.subr.bf16.mxu0 0
      %1003 = vmatpush1.bf16.msra.mxu0 0
      %1004 = vmatprep.subr.bf16.mxu0 0
      %1005 = vmatpush1.bf16.msra.mxu0 0
      %1006 = vmatprep.subr.bf16.mxu0 0
      %1007 = vmatpush1.bf16.msra.mxu0 0
      %1008 = vmatprep.subr.bf16.mxu0 0
      %1009 = vmatpush1.bf16.msra.mxu0 0
      %1010 = vmatprep.mubr.bf16.mxu0 0
      %1011 = vmatmul.mubr.bf16.gmra.mrb[0].mxu0 %v926
      %v1012 = vpop.f32.mrb[0].mxu0
      %v1013 = vadd.f32 0.0, %v1012
      %v1014 = vpop.f32.mrb[0].mxu0
      %v1015 = vpop.f32.mrb[0].mxu0
      %v1016 = vpop.f32.mrb[0].mxu0
      %1017 = vdwg.mxu0
      %v1019 = vsel %vm460, %v910, 0
      %1021 = vmatprep.subr.bf16.mxu0 %v469
      %1022 = vmatpush1.bf16.msra.mxu0 %v466
      %1023 = vmatprep.subr.bf16.mxu0 0
      %1024 = vmatpush1.bf16.msra.mxu0 0
      %1025 = vmatprep.subr.bf16.mxu0 0
      %1026 = vmatpush1.bf16.msra.mxu0 0
      %1027 = vmatprep.subr.bf16.mxu0 0
      %1028 = vmatpush1.bf16.msra.mxu0 0
      %1029 = vmatprep.subr.bf16.mxu0 0
      %1030 = vmatpush1.bf16.msra.mxu0 0
      %1031 = vmatprep.subr.bf16.mxu0 0
      %1032 = vmatpush1.bf16.msra.mxu0 0
      %1033 = vmatprep.subr.bf16.mxu0 0
      %1034 = vmatpush1.bf16.msra.mxu0 0
      %1035 = vmatprep.subr.bf16.mxu0 0
      %1036 = vmatpush1.bf16.msra.mxu0 0
      %1037 = vmatprep.subr.bf16.mxu0 0
      %1038 = vmatpush1.bf16.msra.mxu0 0
      %1039 = vmatprep.subr.bf16.mxu0 0
      %1040 = vmatpush1.bf16.msra.mxu0 0
      %1041 = vmatprep.subr.bf16.mxu0 0
      %1042 = vmatpush1.bf16.msra.mxu0 0
      %1043 = vmatprep.subr.bf16.mxu0 0
      %1044 = vmatpush1.bf16.msra.mxu0 0
      %1045 = vmatprep.subr.bf16.mxu0 0
      %1046 = vmatpush1.bf16.msra.mxu0 0
      %1047 = vmatprep.subr.bf16.mxu0 0
      %1048 = vmatpush1.bf16.msra.mxu0 0
      %1049 = vmatprep.subr.bf16.mxu0 0
      %1050 = vmatpush1.bf16.msra.mxu0 0
      %1051 = vmatprep.subr.bf16.mxu0 0
      %1052 = vmatpush1.bf16.msra.mxu0 0
      %1053 = vmatprep.mubr.bf16.mxu0 0
      %1054 = vmatmul.mubr.bf16.gmra.mrb[0].mxu0 %v1019
      %v1055 = vpop.f32.mrb[0].mxu0
      %v1056 = vadd.f32 %v972, %v1055
      %v1057 = vpop.f32.mrb[0].mxu0
      %v1058 = vadd.f32 %v974, %v1057
      %v1059 = vpop.f32.mrb[0].mxu0
      %v1060 = vpop.f32.mrb[0].mxu0
      %1061 = vdwg.mxu0
      %1062 = vmatprep.subr.bf16.mxu0 0
      %1063 = vmatpush1.bf16.msra.mxu0 %v472
      %1064 = vmatprep.subr.bf16.mxu0 0
      %1065 = vmatpush1.bf16.msra.mxu0 0
      %1066 = vmatprep.subr.bf16.mxu0 0
      %1067 = vmatpush1.bf16.msra.mxu0 0
      %1068 = vmatprep.subr.bf16.mxu0 0
      %1069 = vmatpush1.bf16.msra.mxu0 0
      %1070 = vmatprep.subr.bf16.mxu0 0
      %1071 = vmatpush1.bf16.msra.mxu0 0
      %1072 = vmatprep.subr.bf16.mxu0 0
      %1073 = vmatpush1.bf16.msra.mxu0 0
      %1074 = vmatprep.subr.bf16.mxu0 0
      %1075 = vmatpush1.bf16.msra.mxu0 0
      %1076 = vmatprep.subr.bf16.mxu0 0
      %1077 = vmatpush1.bf16.msra.mxu0 0
      %1078 = vmatprep.subr.bf16.mxu0 0
      %1079 = vmatpush1.bf16.msra.mxu0 0
      %1080 = vmatprep.subr.bf16.mxu0 0
      %1081 = vmatpush1.bf16.msra.mxu0 0
      %1082 = vmatprep.subr.bf16.mxu0 0
      %1083 = vmatpush1.bf16.msra.mxu0 0
      %1084 = vmatprep.subr.bf16.mxu0 0
      %1085 = vmatpush1.bf16.msra.mxu0 0
      %1086 = vmatprep.subr.bf16.mxu0 0
      %1087 = vmatpush1.bf16.msra.mxu0 0
      %1088 = vmatprep.subr.bf16.mxu0 0
      %1089 = vmatpush1.bf16.msra.mxu0 0
      %1090 = vmatprep.subr.bf16.mxu0 0
      %1091 = vmatpush1.bf16.msra.mxu0 0
      %1092 = vmatprep.subr.bf16.mxu0 0
      %1093 = vmatpush1.bf16.msra.mxu0 0
      %1094 = vmatprep.mubr.bf16.mxu0 0
      %1095 = vmatmul.mubr.bf16.gmra.mrb[0].mxu0 %v1019
      %v1096 = vpop.f32.mrb[0].mxu0
      %v1097 = vadd.f32 %v1013, %v1096
      %v1098 = vpop.f32.mrb[0].mxu0
      %v1099 = vpop.f32.mrb[0].mxu0
      %v1100 = vpop.f32.mrb[0].mxu0
      %1101 = vdwg.mxu0
      %s1102 = scalar_lea.vmem %s320, 24
      %v1103 = vld [vmem:[%s1102] sm:$0xf]
      %v1105 = vsel %vm460, %v1103, 0
      %1107 = vmatprep.subr.bf16.mxu0 %v779
      %1108 = vmatpush1.bf16.msra.mxu0 %v776
      %1109 = vmatprep.subr.bf16.mxu0 0
      %1110 = vmatpush1.bf16.msra.mxu0 0
      %1111 = vmatprep.subr.bf16.mxu0 0
      %1112 = vmatpush1.bf16.msra.mxu0 0
      %1113 = vmatprep.subr.bf16.mxu0 0
      %1114 = vmatpush1.bf16.msra.mxu0 0
      %1115 = vmatprep.subr.bf16.mxu0 0
      %1116 = vmatpush1.bf16.msra.mxu0 0
      %1117 = vmatprep.subr.bf16.mxu0 0
      %1118 = vmatpush1.bf16.msra.mxu0 0
      %1119 = vmatprep.subr.bf16.mxu0 0
      %1120 = vmatpush1.bf16.msra.mxu0 0
      %1121 = vmatprep.subr.bf16.mxu0 0
      %1122 = vmatpush1.bf16.msra.mxu0 0
      %1123 = vmatprep.subr.bf16.mxu0 0
      %1124 = vmatpush1.bf16.msra.mxu0 0
      %1125 = vmatprep.subr.bf16.mxu0 0
      %1126 = vmatpush1.bf16.msra.mxu0 0
      %1127 = vmatprep.subr.bf16.mxu0 0
      %1128 = vmatpush1.bf16.msra.mxu0 0
      %1129 = vmatprep.subr.bf16.mxu0 0
      %1130 = vmatpush1.bf16.msra.mxu0 0
      %1131 = vmatprep.subr.bf16.mxu0 0
      %1132 = vmatpush1.bf16.msra.mxu0 0
      %1133 = vmatprep.subr.bf16.mxu0 0
      %1134 = vmatpush1.bf16.msra.mxu0 0
      %1135 = vmatprep.subr.bf16.mxu0 0
      %1136 = vmatpush1.bf16.msra.mxu0 0
      %1137 = vmatprep.subr.bf16.mxu0 0
      %1138 = vmatpush1.bf16.msra.mxu0 0
      %1139 = vmatprep.mubr.bf16.mxu0 0
      %1140 = vmatmul.mubr.bf16.gmra.mrb[0].mxu0 %v1105
      %v1141 = vpop.f32.mrb[0].mxu0
      %v1142 = vadd.f32 0.0, %v1141
      %v1143 = vpop.f32.mrb[0].mxu0
      %v1144 = vadd.f32 0.0, %v1143
      %v1145 = vpop.f32.mrb[0].mxu0
      %v1146 = vpop.f32.mrb[0].mxu0
      %1147 = vdwg.mxu0
      %1148 = vmatprep.subr.bf16.mxu0 0
      %1149 = vmatpush1.bf16.msra.mxu0 %v782
      %1150 = vmatprep.subr.bf16.mxu0 0
      %1151 = vmatpush1.bf16.msra.mxu0 0
      %1152 = vmatprep.subr.bf16.mxu0 0
      %1153 = vmatpush1.bf16.msra.mxu0 0
      %1154 = vmatprep.subr.bf16.mxu0 0
      %1155 = vmatpush1.bf16.msra.mxu0 0
      %1156 = vmatprep.subr.bf16.mxu0 0
      %1157 = vmatpush1.bf16.msra.mxu0 0
      %1158 = vmatprep.subr.bf16.mxu0 0
      %1159 = vmatpush1.bf16.msra.mxu0 0
      %1160 = vmatprep.subr.bf16.mxu0 0
      %1161 = vmatpush1.bf16.msra.mxu0 0
      %1162 = vmatprep.subr.bf16.mxu0 0
      %1163 = vmatpush1.bf16.msra.mxu0 0
      %1164 = vmatprep.subr.bf16.mxu0 0
      %1165 = vmatpush1.bf16.msra.mxu0 0
      %1166 = vmatprep.subr.bf16.mxu0 0
      %1167 = vmatpush1.bf16.msra.mxu0 0
      %1168 = vmatprep.subr.bf16.mxu0 0
      %1169 = vmatpush1.bf16.msra.mxu0 0
      %1170 = vmatprep.subr.bf16.mxu0 0
      %1171 = vmatpush1.bf16.msra.mxu0 0
      %1172 = vmatprep.subr.bf16.mxu0 0
      %1173 = vmatpush1.bf16.msra.mxu0 0
      %1174 = vmatprep.subr.bf16.mxu0 0
      %1175 = vmatpush1.bf16.msra.mxu0 0
      %1176 = vmatprep.subr.bf16.mxu0 0
      %1177 = vmatpush1.bf16.msra.mxu0 0
      %1178 = vmatprep.subr.bf16.mxu0 0
      %1179 = vmatpush1.bf16.msra.mxu0 0
      %1180 = vmatprep.mubr.bf16.mxu0 0
      %1181 = vmatmul.mubr.bf16.gmra.mrb[0].mxu0 %v1105
      %v1182 = vpop.f32.mrb[0].mxu0
      %v1183 = vadd.f32 0.0, %v1182
      %v1184 = vpop.f32.mrb[0].mxu0
      %v1185 = vpop.f32.mrb[0].mxu0
      %v1186 = vpop.f32.mrb[0].mxu0
      %1187 = vdwg.mxu0
      %v1188 = vadd.f32 %v1056, %v1142
      %v1189 = vadd.f32 %v1058, %v1144
      %v1190 = vadd.f32 %v1097, %v1183
      %s1191 = scalar_lea.vmem %s320, 28
      %v1192 = vld [vmem:[%s1191] sm:$0xf]
      %1193 = vrot.lane.b32.xlu0 %v358, 108
      %v1194 = vpop.permute.xlu0 %1193
      %1195 = vrot.lane.b32.xlu0 %v366, 108
      %v1196 = vpop.permute.xlu0 %1195
      %1197 = vrot.lane.b32.xlu0 %v365, 108
      %v1198 = vpop.permute.xlu0 %1197
      %1199 = vrot.lane.b32.xlu0 %v349, 108
      %v1200 = vpop.permute.xlu0 %1199
      %vm1201 = vcmask 883712
      %v1202 = vsel %vm1201, %v1194, %v1196
      %v1203 = vsel %vm1201, %v1196, %v1198
      %v1204 = vsel %vm1201, %v1198, %v1200
      %v1206 = vsel %vm460, %v1192, 0
      %v1209 = vsel %vm464, %v1202, 0
      %v1212 = vsel %vm464, %v1203, 0
      %v1215 = vsel %vm464, %v1204, 0
      %1217 = vmatprep.subr.bf16.mxu0 %v1212
      %1218 = vmatpush1.bf16.msra.mxu0 %v1209
      %1219 = vmatprep.subr.bf16.mxu0 0
      %1220 = vmatpush1.bf16.msra.mxu0 0
      %1221 = vmatprep.subr.bf16.mxu0 0
      %1222 = vmatpush1.bf16.msra.mxu0 0
      %1223 = vmatprep.subr.bf16.mxu0 0
      %1224 = vmatpush1.bf16.msra.mxu0 0
      %1225 = vmatprep.subr.bf16.mxu0 0
      %1226 = vmatpush1.bf16.msra.mxu0 0
      %1227 = vmatprep.subr.bf16.mxu0 0
      %1228 = vmatpush1.bf16.msra.mxu0 0
      %1229 = vmatprep.subr.bf16.mxu0 0
      %1230 = vmatpush1.bf16.msra.mxu0 0
      %1231 = vmatprep.subr.bf16.mxu0 0
      %1232 = vmatpush1.bf16.msra.mxu0 0
      %1233 = vmatprep.subr.bf16.mxu0 0
      %1234 = vmatpush1.bf16.msra.mxu0 0
      %1235 = vmatprep.subr.bf16.mxu0 0
      %1236 = vmatpush1.bf16.msra.mxu0 0
      %1237 = vmatprep.subr.bf16.mxu0 0
      %1238 = vmatpush1.bf16.msra.mxu0 0
      %1239 = vmatprep.subr.bf16.mxu0 0
      %1240 = vmatpush1.bf16.msra.mxu0 0
      %1241 = vmatprep.subr.bf16.mxu0 0
      %1242 = vmatpush1.bf16.msra.mxu0 0
      %1243 = vmatprep.subr.bf16.mxu0 0
      %1244 = vmatpush1.bf16.msra.mxu0 0
      %1245 = vmatprep.subr.bf16.mxu0 0
      %1246 = vmatpush1.bf16.msra.mxu0 0
      %1247 = vmatprep.subr.bf16.mxu0 0
      %1248 = vmatpush1.bf16.msra.mxu0 0
      %1249 = vmatprep.mubr.bf16.mxu0 0
      %1250 = vmatmul.mubr.bf16.gmra.mrb[0].mxu0 %v1206
      %v1251 = vpop.f32.mrb[0].mxu0
      %v1252 = vadd.f32 0.0, %v1251
      %v1253 = vpop.f32.mrb[0].mxu0
      %v1254 = vadd.f32 0.0, %v1253
      %v1255 = vpop.f32.mrb[0].mxu0
      %v1256 = vpop.f32.mrb[0].mxu0
      %1257 = vdwg.mxu0
      %1258 = vmatprep.subr.bf16.mxu0 0
      %1259 = vmatpush1.bf16.msra.mxu0 %v1215
      %1260 = vmatprep.subr.bf16.mxu0 0
      %1261 = vmatpush1.bf16.msra.mxu0 0
      %1262 = vmatprep.subr.bf16.mxu0 0
      %1263 = vmatpush1.bf16.msra.mxu0 0
      %1264 = vmatprep.subr.bf16.mxu0 0
      %1265 = vmatpush1.bf16.msra.mxu0 0
      %1266 = vmatprep.subr.bf16.mxu0 0
      %1267 = vmatpush1.bf16.msra.mxu0 0
      %1268 = vmatprep.subr.bf16.mxu0 0
      %1269 = vmatpush1.bf16.msra.mxu0 0
      %1270 = vmatprep.subr.bf16.mxu0 0
      %1271 = vmatpush1.bf16.msra.mxu0 0
      %1272 = vmatprep.subr.bf16.mxu0 0
      %1273 = vmatpush1.bf16.msra.mxu0 0
      %1274 = vmatprep.subr.bf16.mxu0 0
      %1275 = vmatpush1.bf16.msra.mxu0 0
      %1276 = vmatprep.subr.bf16.mxu0 0
      %1277 = vmatpush1.bf16.msra.mxu0 0
      %1278 = vmatprep.subr.bf16.mxu0 0
      %1279 = vmatpush1.bf16.msra.mxu0 0
      %1280 = vmatprep.subr.bf16.mxu0 0
      %1281 = vmatpush1.bf16.msra.mxu0 0
      %1282 = vmatprep.subr.bf16.mxu0 0
      %1283 = vmatpush1.bf16.msra.mxu0 0
      %1284 = vmatprep.subr.bf16.mxu0 0
      %1285 = vmatpush1.bf16.msra.mxu0 0
      %1286 = vmatprep.subr.bf16.mxu0 0
      %1287 = vmatpush1.bf16.msra.mxu0 0
      %1288 = vmatprep.subr.bf16.mxu0 0
      %1289 = vmatpush1.bf16.msra.mxu0 0
      %1290 = vmatprep.mubr.bf16.mxu0 0
      %1291 = vmatmul.mubr.bf16.gmra.mrb[0].mxu0 %v1206
      %v1292 = vpop.f32.mrb[0].mxu0
      %v1293 = vadd.f32 0.0, %v1292
      %v1294 = vpop.f32.mrb[0].mxu0
      %v1295 = vpop.f32.mrb[0].mxu0
      %v1296 = vpop.f32.mrb[0].mxu0
      %1297 = vdwg.mxu0
      %v1298 = vadd.f32 %v1188, %v1252
      %v1299 = vadd.f32 %v1189, %v1254
      %v1300 = vadd.f32 %v1190, %v1293
      %v1301 = vpack.c.bf16 %v1298, %v1298
      %v1302 = vpack.c.bf16 %v1299, %v1299
      %v1303 = vpack.c.bf16 %v1300, %v1300
      %v1307 = vunpack.c.l.b16 %v1301
      %v1308 = vunpack.c.l.b16 %v1302
      %v1309 = vunpack.c.l.b16 %v1303
      %v1310 = vpack.c.b16 %v1308, %v1307
      %v1311 = vpack.c.b16 %v1309, %v1309
      %s1314 = scalar_lea.vmem %s333, 12
      %1315 = vst [vmem:[%s1314] sm:$0xff] %v1310
      %1316 = vst [vmem:[%s1314 + $0x8] sm:$0xf] %v1311
      %v1317 = vmul.f32 %v1298, %v436
      %v1318 = vmul.f32 %v1299, %v437
      %v1319 = vmul.f32 %v1300, %v438
      %v1320 = vadd.f32 %v1317, %v1318
      %v1321 = vadd.f32 %v1320, %v1319
      %1322 = vadd.xlane.f32.xlu0 %v1321
      %v1323 = vpop.xlane.xlu0 %1322
      %v1324 = vmul.f32 %v1323, %v890
      %v1325 = vsub.f32 %v1298, %v1324
      %v1326 = vsub.f32 %v1299, %v1324
      %v1327 = vsub.f32 %v1300, %v1324
      %v1328 = vmul.f32 %v1325, %v436
      %v1329 = vmul.f32 %v1326, %v437
      %v1330 = vmul.f32 %v1327, %v438
      %v1331 = vmul.f32 %v1328, %v1328
      %v1332 = vmul.f32 %v1329, %v1329
      %v1333 = vmul.f32 %v1330, %v1330
      %v1334 = vadd.f32 %v1331, %v1332
      %v1335 = vadd.f32 %v1334, %v1333
      %1336 = vadd.xlane.f32.xlu0 %v1335
      %v1337 = vpop.xlane.xlu0 %1336
      %v1338 = vsel %vm905, %v1323, %v1337
      %s1339 = scalar_lea.vmem %s346, 8
      %1340 = vst.msk [vmem:[%s1339] sm:$0xff] %vm907, %v1338
      %s1341 = scalar_lea.vmem %s320, 32
      %v1342 = vld [vmem:[%s1341] sm:$0xf]
      %s1343 = scalar_lea.vmem %s320, 36
      %v1344 = vld [vmem:[%s1343] sm:$0xf]
      %v1346 = vsel %vm460, %v1344, 0
      %1348 = vmatprep.subr.bf16.mxu0 %v779
      %1349 = vmatpush1.bf16.msra.mxu0 %v776
      %1350 = vmatprep.subr.bf16.mxu0 0
      %1351 = vmatpush1.bf16.msra.mxu0 0
      %1352 = vmatprep.subr.bf16.mxu0 0
      %1353 = vmatpush1.bf16.msra.mxu0 0
      %1354 = vmatprep.subr.bf16.mxu0 0
      %1355 = vmatpush1.bf16.msra.mxu0 0
      %1356 = vmatprep.subr.bf16.mxu0 0
      %1357 = vmatpush1.bf16.msra.mxu0 0
      %1358 = vmatprep.subr.bf16.mxu0 0
      %1359 = vmatpush1.bf16.msra.mxu0 0
      %1360 = vmatprep.subr.bf16.mxu0 0
      %1361 = vmatpush1.bf16.msra.mxu0 0
      %1362 = vmatprep.subr.bf16.mxu0 0
      %1363 = vmatpush1.bf16.msra.mxu0 0
      %1364 = vmatprep.subr.bf16.mxu0 0
      %1365 = vmatpush1.bf16.msra.mxu0 0
      %1366 = vmatprep.subr.bf16.mxu0 0
      %1367 = vmatpush1.bf16.msra.mxu0 0
      %1368 = vmatprep.subr.bf16.mxu0 0
      %1369 = vmatpush1.bf16.msra.mxu0 0
      %1370 = vmatprep.subr.bf16.mxu0 0
      %1371 = vmatpush1.bf16.msra.mxu0 0
      %1372 = vmatprep.subr.bf16.mxu0 0
      %1373 = vmatpush1.bf16.msra.mxu0 0
      %1374 = vmatprep.subr.bf16.mxu0 0
      %1375 = vmatpush1.bf16.msra.mxu0 0
      %1376 = vmatprep.subr.bf16.mxu0 0
      %1377 = vmatpush1.bf16.msra.mxu0 0
      %1378 = vmatprep.subr.bf16.mxu0 0
      %1379 = vmatpush1.bf16.msra.mxu0 0
      %1380 = vmatprep.mubr.bf16.mxu0 0
      %1381 = vmatmul.mubr.bf16.gmra.mrb[0].mxu0 %v1346
      %v1382 = vpop.f32.mrb[0].mxu0
      %v1383 = vadd.f32 0.0, %v1382
      %v1384 = vpop.f32.mrb[0].mxu0
      %v1385 = vadd.f32 0.0, %v1384
      %v1386 = vpop.f32.mrb[0].mxu0
      %v1387 = vpop.f32.mrb[0].mxu0
      %1388 = vdwg.mxu0
      %1389 = vmatprep.subr.bf16.mxu0 0
      %1390 = vmatpush1.bf16.msra.mxu0 %v782
      %1391 = vmatprep.subr.bf16.mxu0 0
      %1392 = vmatpush1.bf16.msra.mxu0 0
      %1393 = vmatprep.subr.bf16.mxu0 0
      %1394 = vmatpush1.bf16.msra.mxu0 0
      %1395 = vmatprep.subr.bf16.mxu0 0
      %1396 = vmatpush1.bf16.msra.mxu0 0
      %1397 = vmatprep.subr.bf16.mxu0 0
      %1398 = vmatpush1.bf16.msra.mxu0 0
      %1399 = vmatprep.subr.bf16.mxu0 0
      %1400 = vmatpush1.bf16.msra.mxu0 0
      %1401 = vmatprep.subr.bf16.mxu0 0
      %1402 = vmatpush1.bf16.msra.mxu0 0
      %1403 = vmatprep.subr.bf16.mxu0 0
      %1404 = vmatpush1.bf16.msra.mxu0 0
      %1405 = vmatprep.subr.bf16.mxu0 0
      %1406 = vmatpush1.bf16.msra.mxu0 0
      %1407 = vmatprep.subr.bf16.mxu0 0
      %1408 = vmatpush1.bf16.msra.mxu0 0
      %1409 = vmatprep.subr.bf16.mxu0 0
      %1410 = vmatpush1.bf16.msra.mxu0 0
      %1411 = vmatprep.subr.bf16.mxu0 0
      %1412 = vmatpush1.bf16.msra.mxu0 0
      %1413 = vmatprep.subr.bf16.mxu0 0
      %1414 = vmatpush1.bf16.msra.mxu0 0
      %1415 = vmatprep.subr.bf16.mxu0 0
      %1416 = vmatpush1.bf16.msra.mxu0 0
      %1417 = vmatprep.subr.bf16.mxu0 0
      %1418 = vmatpush1.bf16.msra.mxu0 0
      %1419 = vmatprep.subr.bf16.mxu0 0
      %1420 = vmatpush1.bf16.msra.mxu0 0
      %1421 = vmatprep.mubr.bf16.mxu0 0
      %1422 = vmatmul.mubr.bf16.gmra.mrb[0].mxu0 %v1346
      %v1423 = vpop.f32.mrb[0].mxu0
      %v1424 = vadd.f32 0.0, %v1423
      %v1425 = vpop.f32.mrb[0].mxu0
      %v1426 = vpop.f32.mrb[0].mxu0
      %v1427 = vpop.f32.mrb[0].mxu0
      %1428 = vdwg.mxu0
      %v1430 = vsel %vm460, %v1342, 0
      %1432 = vmatprep.subr.bf16.mxu0 %v669
      %1433 = vmatpush1.bf16.msra.mxu0 %v666
      %1434 = vmatprep.subr.bf16.mxu0 0
      %1435 = vmatpush1.bf16.msra.mxu0 0
      %1436 = vmatprep.subr.bf16.mxu0 0
      %1437 = vmatpush1.bf16.msra.mxu0 0
      %1438 = vmatprep.subr.bf16.mxu0 0
      %1439 = vmatpush1.bf16.msra.mxu0 0
      %1440 = vmatprep.subr.bf16.mxu0 0
      %1441 = vmatpush1.bf16.msra.mxu0 0
      %1442 = vmatprep.subr.bf16.mxu0 0
      %1443 = vmatpush1.bf16.msra.mxu0 0
      %1444 = vmatprep.subr.bf16.mxu0 0
      %1445 = vmatpush1.bf16.msra.mxu0 0
      %1446 = vmatprep.subr.bf16.mxu0 0
      %1447 = vmatpush1.bf16.msra.mxu0 0
      %1448 = vmatprep.subr.bf16.mxu0 0
      %1449 = vmatpush1.bf16.msra.mxu0 0
      %1450 = vmatprep.subr.bf16.mxu0 0
      %1451 = vmatpush1.bf16.msra.mxu0 0
      %1452 = vmatprep.subr.bf16.mxu0 0
      %1453 = vmatpush1.bf16.msra.mxu0 0
      %1454 = vmatprep.subr.bf16.mxu0 0
      %1455 = vmatpush1.bf16.msra.mxu0 0
      %1456 = vmatprep.subr.bf16.mxu0 0
      %1457 = vmatpush1.bf16.msra.mxu0 0
      %1458 = vmatprep.subr.bf16.mxu0 0
      %1459 = vmatpush1.bf16.msra.mxu0 0
      %1460 = vmatprep.subr.bf16.mxu0 0
      %1461 = vmatpush1.bf16.msra.mxu0 0
      %1462 = vmatprep.subr.bf16.mxu0 0
      %1463 = vmatpush1.bf16.msra.mxu0 0
      %1464 = vmatprep.mubr.bf16.mxu0 0
      %1465 = vmatmul.mubr.bf16.gmra.mrb[0].mxu0 %v1430
      %v1466 = vpop.f32.mrb[0].mxu0
      %v1467 = vadd.f32 %v1383, %v1466
      %v1468 = vpop.f32.mrb[0].mxu0
      %v1469 = vadd.f32 %v1385, %v1468
      %v1470 = vpop.f32.mrb[0].mxu0
      %v1471 = vpop.f32.mrb[0].mxu0
      %1472 = vdwg.mxu0
      %1473 = vmatprep.subr.bf16.mxu0 0
      %1474 = vmatpush1.bf16.msra.mxu0 %v672
      %1475 = vmatprep.subr.bf16.mxu0 0
      %1476 = vmatpush1.bf16.msra.mxu0 0
      %1477 = vmatprep.subr.bf16.mxu0 0
      %1478 = vmatpush1.bf16.msra.mxu0 0
      %1479 = vmatprep.subr.bf16.mxu0 0
      %1480 = vmatpush1.bf16.msra.mxu0 0
      %1481 = vmatprep.subr.bf16.mxu0 0
      %1482 = vmatpush1.bf16.msra.mxu0 0
      %1483 = vmatprep.subr.bf16.mxu0 0
      %1484 = vmatpush1.bf16.msra.mxu0 0
      %1485 = vmatprep.subr.bf16.mxu0 0
      %1486 = vmatpush1.bf16.msra.mxu0 0
      %1487 = vmatprep.subr.bf16.mxu0 0
      %1488 = vmatpush1.bf16.msra.mxu0 0
      %1489 = vmatprep.subr.bf16.mxu0 0
      %1490 = vmatpush1.bf16.msra.mxu0 0
      %1491 = vmatprep.subr.bf16.mxu0 0
      %1492 = vmatpush1.bf16.msra.mxu0 0
      %1493 = vmatprep.subr.bf16.mxu0 0
      %1494 = vmatpush1.bf16.msra.mxu0 0
      %1495 = vmatprep.subr.bf16.mxu0 0
      %1496 = vmatpush1.bf16.msra.mxu0 0
      %1497 = vmatprep.subr.bf16.mxu0 0
      %1498 = vmatpush1.bf16.msra.mxu0 0
      %1499 = vmatprep.subr.bf16.mxu0 0
      %1500 = vmatpush1.bf16.msra.mxu0 0
      %1501 = vmatprep.subr.bf16.mxu0 0
      %1502 = vmatpush1.bf16.msra.mxu0 0
      %1503 = vmatprep.subr.bf16.mxu0 0
      %1504 = vmatpush1.bf16.msra.mxu0 0
      %1505 = vmatprep.mubr.bf16.mxu0 0
      %1506 = vmatmul.mubr.bf16.gmra.mrb[0].mxu0 %v1430
      %v1507 = vpop.f32.mrb[0].mxu0
      %v1508 = vadd.f32 %v1424, %v1507
      %v1509 = vpop.f32.mrb[0].mxu0
      %v1510 = vpop.f32.mrb[0].mxu0
      %v1511 = vpop.f32.mrb[0].mxu0
      %1512 = vdwg.mxu0
      %s1513 = scalar_lea.vmem %s320, 40
      %v1514 = vld [vmem:[%s1513] sm:$0xf]
      %1515 = vrot.lane.b32.xlu0 %v358, 92
      %v1516 = vpop.permute.xlu0 %1515
      %1517 = vrot.lane.b32.xlu0 %v366, 92
      %v1518 = vpop.permute.xlu0 %1517
      %1519 = vrot.lane.b32.xlu0 %v365, 92
      %v1520 = vpop.permute.xlu0 %1519
      %1521 = vrot.lane.b32.xlu0 %v349, 92
      %v1522 = vpop.permute.xlu0 %1521
      %vm1523 = vcmask 752640
      %v1524 = vsel %vm1523, %v1516, %v1518
      %v1525 = vsel %vm1523, %v1518, %v1520
      %v1526 = vsel %vm1523, %v1520, %v1522
      %v1528 = vsel %vm460, %v1514, 0
      %v1531 = vsel %vm464, %v1524, 0
      %v1534 = vsel %vm464, %v1525, 0
      %v1537 = vsel %vm464, %v1526, 0
      %1539 = vmatprep.subr.bf16.mxu0 %v1534
      %1540 = vmatpush1.bf16.msra.mxu0 %v1531
      %1541 = vmatprep.subr.bf16.mxu0 0
      %1542 = vmatpush1.bf16.msra.mxu0 0
      %1543 = vmatprep.subr.bf16.mxu0 0
      %1544 = vmatpush1.bf16.msra.mxu0 0
      %1545 = vmatprep.subr.bf16.mxu0 0
      %1546 = vmatpush1.bf16.msra.mxu0 0
      %1547 = vmatprep.subr.bf16.mxu0 0
      %1548 = vmatpush1.bf16.msra.mxu0 0
      %1549 = vmatprep.subr.bf16.mxu0 0
      %1550 = vmatpush1.bf16.msra.mxu0 0
      %1551 = vmatprep.subr.bf16.mxu0 0
      %1552 = vmatpush1.bf16.msra.mxu0 0
      %1553 = vmatprep.subr.bf16.mxu0 0
      %1554 = vmatpush1.bf16.msra.mxu0 0
      %1555 = vmatprep.subr.bf16.mxu0 0
      %1556 = vmatpush1.bf16.msra.mxu0 0
      %1557 = vmatprep.subr.bf16.mxu0 0
      %1558 = vmatpush1.bf16.msra.mxu0 0
      %1559 = vmatprep.subr.bf16.mxu0 0
      %1560 = vmatpush1.bf16.msra.mxu0 0
      %1561 = vmatprep.subr.bf16.mxu0 0
      %1562 = vmatpush1.bf16.msra.mxu0 0
      %1563 = vmatprep.subr.bf16.mxu0 0
      %1564 = vmatpush1.bf16.msra.mxu0 0
      %1565 = vmatprep.subr.bf16.mxu0 0
      %1566 = vmatpush1.bf16.msra.mxu0 0
      %1567 = vmatprep.subr.bf16.mxu0 0
      %1568 = vmatpush1.bf16.msra.mxu0 0
      %1569 = vmatprep.subr.bf16.mxu0 0
      %1570 = vmatpush1.bf16.msra.mxu0 0
      %1571 = vmatprep.mubr.bf16.mxu0 0
      %1572 = vmatmul.mubr.bf16.gmra.mrb[0].mxu0 %v1528
      %v1573 = vpop.f32.mrb[0].mxu0
      %v1574 = vadd.f32 0.0, %v1573
      %v1575 = vpop.f32.mrb[0].mxu0
      %v1576 = vadd.f32 0.0, %v1575
      %v1577 = vpop.f32.mrb[0].mxu0
      %v1578 = vpop.f32.mrb[0].mxu0
      %1579 = vdwg.mxu0
      %1580 = vmatprep.subr.bf16.mxu0 0
      %1581 = vmatpush1.bf16.msra.mxu0 %v1537
      %1582 = vmatprep.subr.bf16.mxu0 0
      %1583 = vmatpush1.bf16.msra.mxu0 0
      %1584 = vmatprep.subr.bf16.mxu0 0
      %1585 = vmatpush1.bf16.msra.mxu0 0
      %1586 = vmatprep.subr.bf16.mxu0 0
      %1587 = vmatpush1.bf16.msra.mxu0 0
      %1588 = vmatprep.subr.bf16.mxu0 0
      %1589 = vmatpush1.bf16.msra.mxu0 0
      %1590 = vmatprep.subr.bf16.mxu0 0
      %1591 = vmatpush1.bf16.msra.mxu0 0
      %1592 = vmatprep.subr.bf16.mxu0 0
      %1593 = vmatpush1.bf16.msra.mxu0 0
      %1594 = vmatprep.subr.bf16.mxu0 0
      %1595 = vmatpush1.bf16.msra.mxu0 0
      %1596 = vmatprep.subr.bf16.mxu0 0
      %1597 = vmatpush1.bf16.msra.mxu0 0
      %1598 = vmatprep.subr.bf16.mxu0 0
      %1599 = vmatpush1.bf16.msra.mxu0 0
      %1600 = vmatprep.subr.bf16.mxu0 0
      %1601 = vmatpush1.bf16.msra.mxu0 0
      %1602 = vmatprep.subr.bf16.mxu0 0
      %1603 = vmatpush1.bf16.msra.mxu0 0
      %1604 = vmatprep.subr.bf16.mxu0 0
      %1605 = vmatpush1.bf16.msra.mxu0 0
      %1606 = vmatprep.subr.bf16.mxu0 0
      %1607 = vmatpush1.bf16.msra.mxu0 0
      %1608 = vmatprep.subr.bf16.mxu0 0
      %1609 = vmatpush1.bf16.msra.mxu0 0
      %1610 = vmatprep.subr.bf16.mxu0 0
      %1611 = vmatpush1.bf16.msra.mxu0 0
      %1612 = vmatprep.mubr.bf16.mxu0 0
      %1613 = vmatmul.mubr.bf16.gmra.mrb[0].mxu0 %v1528
      %v1614 = vpop.f32.mrb[0].mxu0
      %v1615 = vadd.f32 0.0, %v1614
      %v1616 = vpop.f32.mrb[0].mxu0
      %v1617 = vpop.f32.mrb[0].mxu0
      %v1618 = vpop.f32.mrb[0].mxu0
      %1619 = vdwg.mxu0
      %v1620 = vadd.f32 %v1467, %v1574
      %v1621 = vadd.f32 %v1469, %v1576
      %v1622 = vadd.f32 %v1508, %v1615
      %s1623 = scalar_lea.vmem %s320, 44
      %v1624 = vld [vmem:[%s1623] sm:$0xf]
      %1625 = vrot.lane.b32.xlu0 %v358, 91
      %v1626 = vpop.permute.xlu0 %1625
      %1627 = vrot.lane.b32.xlu0 %v366, 91
      %v1628 = vpop.permute.xlu0 %1627
      %1629 = vrot.lane.b32.xlu0 %v365, 91
      %v1630 = vpop.permute.xlu0 %1629
      %1631 = vrot.lane.b32.xlu0 %v349, 91
      %v1632 = vpop.permute.xlu0 %1631
      %vm1633 = vcmask 744448
      %v1634 = vsel %vm1633, %v1626, %v1628
      %v1635 = vsel %vm1633, %v1628, %v1630
      %v1636 = vsel %vm1633, %v1630, %v1632
      %v1638 = vsel %vm460, %v1624, 0
      %v1641 = vsel %vm464, %v1634, 0
      %v1644 = vsel %vm464, %v1635, 0
      %v1647 = vsel %vm464, %v1636, 0
      %1649 = vmatprep.subr.bf16.mxu0 %v1644
      %1650 = vmatpush1.bf16.msra.mxu0 %v1641
      %1651 = vmatprep.subr.bf16.mxu0 0
      %1652 = vmatpush1.bf16.msra.mxu0 0
      %1653 = vmatprep.subr.bf16.mxu0 0
      %1654 = vmatpush1.bf16.msra.mxu0 0
      %1655 = vmatprep.subr.bf16.mxu0 0
      %1656 = vmatpush1.bf16.msra.mxu0 0
      %1657 = vmatprep.subr.bf16.mxu0 0
      %1658 = vmatpush1.bf16.msra.mxu0 0
      %1659 = vmatprep.subr.bf16.mxu0 0
      %1660 = vmatpush1.bf16.msra.mxu0 0
      %1661 = vmatprep.subr.bf16.mxu0 0
      %1662 = vmatpush1.bf16.msra.mxu0 0
      %1663 = vmatprep.subr.bf16.mxu0 0
      %1664 = vmatpush1.bf16.msra.mxu0 0
      %1665 = vmatprep.subr.bf16.mxu0 0
      %1666 = vmatpush1.bf16.msra.mxu0 0
      %1667 = vmatprep.subr.bf16.mxu0 0
      %1668 = vmatpush1.bf16.msra.mxu0 0
      %1669 = vmatprep.subr.bf16.mxu0 0
      %1670 = vmatpush1.bf16.msra.mxu0 0
      %1671 = vmatprep.subr.bf16.mxu0 0
      %1672 = vmatpush1.bf16.msra.mxu0 0
      %1673 = vmatprep.subr.bf16.mxu0 0
      %1674 = vmatpush1.bf16.msra.mxu0 0
      %1675 = vmatprep.subr.bf16.mxu0 0
      %1676 = vmatpush1.bf16.msra.mxu0 0
      %1677 = vmatprep.subr.bf16.mxu0 0
      %1678 = vmatpush1.bf16.msra.mxu0 0
      %1679 = vmatprep.subr.bf16.mxu0 0
      %1680 = vmatpush1.bf16.msra.mxu0 0
      %1681 = vmatprep.mubr.bf16.mxu0 0
      %1682 = vmatmul.mubr.bf16.gmra.mrb[0].mxu0 %v1638
      %v1683 = vpop.f32.mrb[0].mxu0
      %v1684 = vadd.f32 0.0, %v1683
      %v1685 = vpop.f32.mrb[0].mxu0
      %v1686 = vadd.f32 0.0, %v1685
      %v1687 = vpop.f32.mrb[0].mxu0
      %v1688 = vpop.f32.mrb[0].mxu0
      %1689 = vdwg.mxu0
      %1690 = vmatprep.subr.bf16.mxu0 0
      %1691 = vmatpush1.bf16.msra.mxu0 %v1647
      %1692 = vmatprep.subr.bf16.mxu0 0
      %1693 = vmatpush1.bf16.msra.mxu0 0
      %1694 = vmatprep.subr.bf16.mxu0 0
      %1695 = vmatpush1.bf16.msra.mxu0 0
      %1696 = vmatprep.subr.bf16.mxu0 0
      %1697 = vmatpush1.bf16.msra.mxu0 0
      %1698 = vmatprep.subr.bf16.mxu0 0
      %1699 = vmatpush1.bf16.msra.mxu0 0
      %1700 = vmatprep.subr.bf16.mxu0 0
      %1701 = vmatpush1.bf16.msra.mxu0 0
      %1702 = vmatprep.subr.bf16.mxu0 0
      %1703 = vmatpush1.bf16.msra.mxu0 0
      %1704 = vmatprep.subr.bf16.mxu0 0
      %1705 = vmatpush1.bf16.msra.mxu0 0
      %1706 = vmatprep.subr.bf16.mxu0 0
      %1707 = vmatpush1.bf16.msra.mxu0 0
      %1708 = vmatprep.subr.bf16.mxu0 0
      %1709 = vmatpush1.bf16.msra.mxu0 0
      %1710 = vmatprep.subr.bf16.mxu0 0
      %1711 = vmatpush1.bf16.msra.mxu0 0
      %1712 = vmatprep.subr.bf16.mxu0 0
      %1713 = vmatpush1.bf16.msra.mxu0 0
      %1714 = vmatprep.subr.bf16.mxu0 0
      %1715 = vmatpush1.bf16.msra.mxu0 0
      %1716 = vmatprep.subr.bf16.mxu0 0
      %1717 = vmatpush1.bf16.msra.mxu0 0
      %1718 = vmatprep.subr.bf16.mxu0 0
      %1719 = vmatpush1.bf16.msra.mxu0 0
      %1720 = vmatprep.subr.bf16.mxu0 0
      %1721 = vmatpush1.bf16.msra.mxu0 0
      %1722 = vmatprep.mubr.bf16.mxu0 0
      %1723 = vmatmul.mubr.bf16.gmra.mrb[0].mxu0 %v1638
      %v1724 = vpop.f32.mrb[0].mxu0
      %v1725 = vadd.f32 0.0, %v1724
      %v1726 = vpop.f32.mrb[0].mxu0
      %v1727 = vpop.f32.mrb[0].mxu0
      %v1728 = vpop.f32.mrb[0].mxu0
      %1729 = vdwg.mxu0
      %v1730 = vadd.f32 %v1620, %v1684
      %v1731 = vadd.f32 %v1621, %v1686
      %v1732 = vadd.f32 %v1622, %v1725
      %v1733 = vpack.c.bf16 %v1730, %v1730
      %v1734 = vpack.c.bf16 %v1731, %v1731
      %v1735 = vpack.c.bf16 %v1732, %v1732
      %v1739 = vunpack.c.l.b16 %v1733
      %v1740 = vunpack.c.l.b16 %v1734
      %v1741 = vunpack.c.l.b16 %v1735
      %v1742 = vpack.c.b16 %v1740, %v1739
      %v1743 = vpack.c.b16 %v1741, %v1741
      %s1746 = scalar_lea.vmem %s333, 24
      %1747 = vst [vmem:[%s1746] sm:$0xff] %v1742
      %1748 = vst [vmem:[%s1746 + $0x8] sm:$0xf] %v1743
      %v1749 = vmul.f32 %v1730, %v436
      %v1750 = vmul.f32 %v1731, %v437
      %v1751 = vmul.f32 %v1732, %v438
      %v1752 = vadd.f32 %v1749, %v1750
      %v1753 = vadd.f32 %v1752, %v1751
      %1754 = vadd.xlane.f32.xlu0 %v1753
      %v1755 = vpop.xlane.xlu0 %1754
      %v1756 = vmul.f32 %v1755, %v890
      %v1757 = vsub.f32 %v1730, %v1756
      %v1758 = vsub.f32 %v1731, %v1756
      %v1759 = vsub.f32 %v1732, %v1756
      %v1760 = vmul.f32 %v1757, %v436
      %v1761 = vmul.f32 %v1758, %v437
      %v1762 = vmul.f32 %v1759, %v438
      %v1763 = vmul.f32 %v1760, %v1760
      %v1764 = vmul.f32 %v1761, %v1761
      %v1765 = vmul.f32 %v1762, %v1762
      %v1766 = vadd.f32 %v1763, %v1764
      %v1767 = vadd.f32 %v1766, %v1765
      %1768 = vadd.xlane.f32.xlu0 %v1767
      %v1769 = vpop.xlane.xlu0 %1768
      %v1770 = vsel %vm905, %v1755, %v1769
      %s1771 = scalar_lea.vmem %s346, 16
      %1772 = vst.msk [vmem:[%s1771] sm:$0xff] %vm907, %v1770
      %s1773 = scalar_lea.vmem %s320, 48
      %v1774 = vld [vmem:[%s1773] sm:$0xf]
      %s1775 = scalar_lea.vmem %s320, 52
      %v1776 = vld [vmem:[%s1775] sm:$0xf]
      %v1778 = vsel %vm460, %v1776, 0
      %1780 = vmatprep.subr.bf16.mxu0 %v1212
      %1781 = vmatpush1.bf16.msra.mxu0 %v1209
      %1782 = vmatprep.subr.bf16.mxu0 0
      %1783 = vmatpush1.bf16.msra.mxu0 0
      %1784 = vmatprep.subr.bf16.mxu0 0
      %1785 = vmatpush1.bf16.msra.mxu0 0
      %1786 = vmatprep.subr.bf16.mxu0 0
      %1787 = vmatpush1.bf16.msra.mxu0 0
      %1788 = vmatprep.subr.bf16.mxu0 0
      %1789 = vmatpush1.bf16.msra.mxu0 0
      %1790 = vmatprep.subr.bf16.mxu0 0
      %1791 = vmatpush1.bf16.msra.mxu0 0
      %1792 = vmatprep.subr.bf16.mxu0 0
      %1793 = vmatpush1.bf16.msra.mxu0 0
      %1794 = vmatprep.subr.bf16.mxu0 0
      %1795 = vmatpush1.bf16.msra.mxu0 0
      %1796 = vmatprep.subr.bf16.mxu0 0
      %1797 = vmatpush1.bf16.msra.mxu0 0
      %1798 = vmatprep.subr.bf16.mxu0 0
      %1799 = vmatpush1.bf16.msra.mxu0 0
      %1800 = vmatprep.subr.bf16.mxu0 0
      %1801 = vmatpush1.bf16.msra.mxu0 0
      %1802 = vmatprep.subr.bf16.mxu0 0
      %1803 = vmatpush1.bf16.msra.mxu0 0
      %1804 = vmatprep.subr.bf16.mxu0 0
      %1805 = vmatpush1.bf16.msra.mxu0 0
      %1806 = vmatprep.subr.bf16.mxu0 0
      %1807 = vmatpush1.bf16.msra.mxu0 0
      %1808 = vmatprep.subr.bf16.mxu0 0
      %1809 = vmatpush1.bf16.msra.mxu0 0
      %1810 = vmatprep.subr.bf16.mxu0 0
      %1811 = vmatpush1.bf16.msra.mxu0 0
      %1812 = vmatprep.mubr.bf16.mxu0 0
      %1813 = vmatmul.mubr.bf16.gmra.mrb[0].mxu0 %v1778
      %v1814 = vpop.f32.mrb[0].mxu0
      %v1815 = vadd.f32 0.0, %v1814
      %v1816 = vpop.f32.mrb[0].mxu0
      %v1817 = vadd.f32 0.0, %v1816
      %v1818 = vpop.f32.mrb[0].mxu0
      %v1819 = vpop.f32.mrb[0].mxu0
      %1820 = vdwg.mxu0
      %1821 = vmatprep.subr.bf16.mxu0 0
      %1822 = vmatpush1.bf16.msra.mxu0 %v1215
      %1823 = vmatprep.subr.bf16.mxu0 0
      %1824 = vmatpush1.bf16.msra.mxu0 0
      %1825 = vmatprep.subr.bf16.mxu0 0
      %1826 = vmatpush1.bf16.msra.mxu0 0
      %1827 = vmatprep.subr.bf16.mxu0 0
      %1828 = vmatpush1.bf16.msra.mxu0 0
      %1829 = vmatprep.subr.bf16.mxu0 0
      %1830 = vmatpush1.bf16.msra.mxu0 0
      %1831 = vmatprep.subr.bf16.mxu0 0
      %1832 = vmatpush1.bf16.msra.mxu0 0
      %1833 = vmatprep.subr.bf16.mxu0 0
      %1834 = vmatpush1.bf16.msra.mxu0 0
      %1835 = vmatprep.subr.bf16.mxu0 0
      %1836 = vmatpush1.bf16.msra.mxu0 0
      %1837 = vmatprep.subr.bf16.mxu0 0
      %1838 = vmatpush1.bf16.msra.mxu0 0
      %1839 = vmatprep.subr.bf16.mxu0 0
      %1840 = vmatpush1.bf16.msra.mxu0 0
      %1841 = vmatprep.subr.bf16.mxu0 0
      %1842 = vmatpush1.bf16.msra.mxu0 0
      %1843 = vmatprep.subr.bf16.mxu0 0
      %1844 = vmatpush1.bf16.msra.mxu0 0
      %1845 = vmatprep.subr.bf16.mxu0 0
      %1846 = vmatpush1.bf16.msra.mxu0 0
      %1847 = vmatprep.subr.bf16.mxu0 0
      %1848 = vmatpush1.bf16.msra.mxu0 0
      %1849 = vmatprep.subr.bf16.mxu0 0
      %1850 = vmatpush1.bf16.msra.mxu0 0
      %1851 = vmatprep.subr.bf16.mxu0 0
      %1852 = vmatpush1.bf16.msra.mxu0 0
      %1853 = vmatprep.mubr.bf16.mxu0 0
      %1854 = vmatmul.mubr.bf16.gmra.mrb[0].mxu0 %v1778
      %v1855 = vpop.f32.mrb[0].mxu0
      %v1856 = vadd.f32 0.0, %v1855
      %v1857 = vpop.f32.mrb[0].mxu0
      %v1858 = vpop.f32.mrb[0].mxu0
      %v1859 = vpop.f32.mrb[0].mxu0
      %1860 = vdwg.mxu0
      %v1862 = vsel %vm460, %v1774, 0
      %1864 = vmatprep.subr.bf16.mxu0 %v779
      %1865 = vmatpush1.bf16.msra.mxu0 %v776
      %1866 = vmatprep.subr.bf16.mxu0 0
      %1867 = vmatpush1.bf16.msra.mxu0 0
      %1868 = vmatprep.subr.bf16.mxu0 0
      %1869 = vmatpush1.bf16.msra.mxu0 0
      %1870 = vmatprep.subr.bf16.mxu0 0
      %1871 = vmatpush1.bf16.msra.mxu0 0
      %1872 = vmatprep.subr.bf16.mxu0 0
      %1873 = vmatpush1.bf16.msra.mxu0 0
      %1874 = vmatprep.subr.bf16.mxu0 0
      %1875 = vmatpush1.bf16.msra.mxu0 0
      %1876 = vmatprep.subr.bf16.mxu0 0
      %1877 = vmatpush1.bf16.msra.mxu0 0
      %1878 = vmatprep.subr.bf16.mxu0 0
      %1879 = vmatpush1.bf16.msra.mxu0 0
      %1880 = vmatprep.subr.bf16.mxu0 0
      %1881 = vmatpush1.bf16.msra.mxu0 0
      %1882 = vmatprep.subr.bf16.mxu0 0
      %1883 = vmatpush1.bf16.msra.mxu0 0
      %1884 = vmatprep.subr.bf16.mxu0 0
      %1885 = vmatpush1.bf16.msra.mxu0 0
      %1886 = vmatprep.subr.bf16.mxu0 0
      %1887 = vmatpush1.bf16.msra.mxu0 0
      %1888 = vmatprep.subr.bf16.mxu0 0
      %1889 = vmatpush1.bf16.msra.mxu0 0
      %1890 = vmatprep.subr.bf16.mxu0 0
      %1891 = vmatpush1.bf16.msra.mxu0 0
      %1892 = vmatprep.subr.bf16.mxu0 0
      %1893 = vmatpush1.bf16.msra.mxu0 0
      %1894 = vmatprep.subr.bf16.mxu0 0
      %1895 = vmatpush1.bf16.msra.mxu0 0
      %1896 = vmatprep.mubr.bf16.mxu0 0
      %1897 = vmatmul.mubr.bf16.gmra.mrb[0].mxu0 %v1862
      %v1898 = vpop.f32.mrb[0].mxu0
      %v1899 = vadd.f32 %v1815, %v1898
      %v1900 = vpop.f32.mrb[0].mxu0
      %v1901 = vadd.f32 %v1817, %v1900
      %v1902 = vpop.f32.mrb[0].mxu0
      %v1903 = vpop.f32.mrb[0].mxu0
      %1904 = vdwg.mxu0
      %1905 = vmatprep.subr.bf16.mxu0 0
      %1906 = vmatpush1.bf16.msra.mxu0 %v782
      %1907 = vmatprep.subr.bf16.mxu0 0
      %1908 = vmatpush1.bf16.msra.mxu0 0
      %1909 = vmatprep.subr.bf16.mxu0 0
      %1910 = vmatpush1.bf16.msra.mxu0 0
      %1911 = vmatprep.subr.bf16.mxu0 0
      %1912 = vmatpush1.bf16.msra.mxu0 0
      %1913 = vmatprep.subr.bf16.mxu0 0
      %1914 = vmatpush1.bf16.msra.mxu0 0
      %1915 = vmatprep.subr.bf16.mxu0 0
      %1916 = vmatpush1.bf16.msra.mxu0 0
      %1917 = vmatprep.subr.bf16.mxu0 0
      %1918 = vmatpush1.bf16.msra.mxu0 0
      %1919 = vmatprep.subr.bf16.mxu0 0
      %1920 = vmatpush1.bf16.msra.mxu0 0
      %1921 = vmatprep.subr.bf16.mxu0 0
      %1922 = vmatpush1.bf16.msra.mxu0 0
      %1923 = vmatprep.subr.bf16.mxu0 0
      %1924 = vmatpush1.bf16.msra.mxu0 0
      %1925 = vmatprep.subr.bf16.mxu0 0
      %1926 = vmatpush1.bf16.msra.mxu0 0
      %1927 = vmatprep.subr.bf16.mxu0 0
      %1928 = vmatpush1.bf16.msra.mxu0 0
      %1929 = vmatprep.subr.bf16.mxu0 0
      %1930 = vmatpush1.bf16.msra.mxu0 0
      %1931 = vmatprep.subr.bf16.mxu0 0
      %1932 = vmatpush1.bf16.msra.mxu0 0
      %1933 = vmatprep.subr.bf16.mxu0 0
      %1934 = vmatpush1.bf16.msra.mxu0 0
      %1935 = vmatprep.subr.bf16.mxu0 0
      %1936 = vmatpush1.bf16.msra.mxu0 0
      %1937 = vmatprep.mubr.bf16.mxu0 0
      %1938 = vmatmul.mubr.bf16.gmra.mrb[0].mxu0 %v1862
      %v1939 = vpop.f32.mrb[0].mxu0
      %v1940 = vadd.f32 %v1856, %v1939
      %v1941 = vpop.f32.mrb[0].mxu0
      %v1942 = vpop.f32.mrb[0].mxu0
      %v1943 = vpop.f32.mrb[0].mxu0
      %1944 = vdwg.mxu0
      %s1945 = scalar_lea.vmem %s320, 56
      %v1946 = vld [vmem:[%s1945] sm:$0xf]
      %v1948 = vsel %vm460, %v1946, 0
      %1950 = vmatprep.subr.bf16.mxu0 %v1644
      %1951 = vmatpush1.bf16.msra.mxu0 %v1641
      %1952 = vmatprep.subr.bf16.mxu0 0
      %1953 = vmatpush1.bf16.msra.mxu0 0
      %1954 = vmatprep.subr.bf16.mxu0 0
      %1955 = vmatpush1.bf16.msra.mxu0 0
      %1956 = vmatprep.subr.bf16.mxu0 0
      %1957 = vmatpush1.bf16.msra.mxu0 0
      %1958 = vmatprep.subr.bf16.mxu0 0
      %1959 = vmatpush1.bf16.msra.mxu0 0
      %1960 = vmatprep.subr.bf16.mxu0 0
      %1961 = vmatpush1.bf16.msra.mxu0 0
      %1962 = vmatprep.subr.bf16.mxu0 0
      %1963 = vmatpush1.bf16.msra.mxu0 0
      %1964 = vmatprep.subr.bf16.mxu0 0
      %1965 = vmatpush1.bf16.msra.mxu0 0
      %1966 = vmatprep.subr.bf16.mxu0 0
      %1967 = vmatpush1.bf16.msra.mxu0 0
      %1968 = vmatprep.subr.bf16.mxu0 0
      %1969 = vmatpush1.bf16.msra.mxu0 0
      %1970 = vmatprep.subr.bf16.mxu0 0
      %1971 = vmatpush1.bf16.msra.mxu0 0
      %1972 = vmatprep.subr.bf16.mxu0 0
      %1973 = vmatpush1.bf16.msra.mxu0 0
      %1974 = vmatprep.subr.bf16.mxu0 0
      %1975 = vmatpush1.bf16.msra.mxu0 0
      %1976 = vmatprep.subr.bf16.mxu0 0
      %1977 = vmatpush1.bf16.msra.mxu0 0
      %1978 = vmatprep.subr.bf16.mxu0 0
      %1979 = vmatpush1.bf16.msra.mxu0 0
      %1980 = vmatprep.subr.bf16.mxu0 0
      %1981 = vmatpush1.bf16.msra.mxu0 0
      %1982 = vmatprep.mubr.bf16.mxu0 0
      %1983 = vmatmul.mubr.bf16.gmra.mrb[0].mxu0 %v1948
      %v1984 = vpop.f32.mrb[0].mxu0
      %v1985 = vadd.f32 0.0, %v1984
      %v1986 = vpop.f32.mrb[0].mxu0
      %v1987 = vadd.f32 0.0, %v1986
      %v1988 = vpop.f32.mrb[0].mxu0
      %v1989 = vpop.f32.mrb[0].mxu0
      %1990 = vdwg.mxu0
      %1991 = vmatprep.subr.bf16.mxu0 0
      %1992 = vmatpush1.bf16.msra.mxu0 %v1647
      %1993 = vmatprep.subr.bf16.mxu0 0
      %1994 = vmatpush1.bf16.msra.mxu0 0
      %1995 = vmatprep.subr.bf16.mxu0 0
      %1996 = vmatpush1.bf16.msra.mxu0 0
      %1997 = vmatprep.subr.bf16.mxu0 0
      %1998 = vmatpush1.bf16.msra.mxu0 0
      %1999 = vmatprep.subr.bf16.mxu0 0
      %2000 = vmatpush1.bf16.msra.mxu0 0
      %2001 = vmatprep.subr.bf16.mxu0 0
      %2002 = vmatpush1.bf16.msra.mxu0 0
      %2003 = vmatprep.subr.bf16.mxu0 0
      %2004 = vmatpush1.bf16.msra.mxu0 0
      %2005 = vmatprep.subr.bf16.mxu0 0
      %2006 = vmatpush1.bf16.msra.mxu0 0
      %2007 = vmatprep.subr.bf16.mxu0 0
      %2008 = vmatpush1.bf16.msra.mxu0 0
      %2009 = vmatprep.subr.bf16.mxu0 0
      %2010 = vmatpush1.bf16.msra.mxu0 0
      %2011 = vmatprep.subr.bf16.mxu0 0
      %2012 = vmatpush1.bf16.msra.mxu0 0
      %2013 = vmatprep.subr.bf16.mxu0 0
      %2014 = vmatpush1.bf16.msra.mxu0 0
      %2015 = vmatprep.subr.bf16.mxu0 0
      %2016 = vmatpush1.bf16.msra.mxu0 0
      %2017 = vmatprep.subr.bf16.mxu0 0
      %2018 = vmatpush1.bf16.msra.mxu0 0
      %2019 = vmatprep.subr.bf16.mxu0 0
      %2020 = vmatpush1.bf16.msra.mxu0 0
      %2021 = vmatprep.subr.bf16.mxu0 0
      %2022 = vmatpush1.bf16.msra.mxu0 0
      %2023 = vmatprep.mubr.bf16.mxu0 0
      %2024 = vmatmul.mubr.bf16.gmra.mrb[0].mxu0 %v1948
      %v2025 = vpop.f32.mrb[0].mxu0
      %v2026 = vadd.f32 0.0, %v2025
      %v2027 = vpop.f32.mrb[0].mxu0
      %v2028 = vpop.f32.mrb[0].mxu0
      %v2029 = vpop.f32.mrb[0].mxu0
      %2030 = vdwg.mxu0
      %v2031 = vadd.f32 %v1899, %v1985
      %v2032 = vadd.f32 %v1901, %v1987
      %v2033 = vadd.f32 %v1940, %v2026
      %s2034 = scalar_lea.vmem %s320, 60
      %v2035 = vld [vmem:[%s2034] sm:$0xf]
      %2036 = vrot.lane.b32.xlu0 %v358, 90
      %v2037 = vpop.permute.xlu0 %2036
      %2038 = vrot.lane.b32.xlu0 %v366, 90
      %v2039 = vpop.permute.xlu0 %2038
      %2040 = vrot.lane.b32.xlu0 %v365, 90
      %v2041 = vpop.permute.xlu0 %2040
      %2042 = vrot.lane.b32.xlu0 %v349, 90
      %v2043 = vpop.permute.xlu0 %2042
      %vm2044 = vcmask 736256
      %v2045 = vsel %vm2044, %v2037, %v2039
      %v2046 = vsel %vm2044, %v2039, %v2041
      %v2047 = vsel %vm2044, %v2041, %v2043
      %v2049 = vsel %vm460, %v2035, 0
      %v2052 = vsel %vm464, %v2045, 0
      %v2055 = vsel %vm464, %v2046, 0
      %v2058 = vsel %vm464, %v2047, 0
      %2060 = vmatprep.subr.bf16.mxu0 %v2055
      %2061 = vmatpush1.bf16.msra.mxu0 %v2052
      %2062 = vmatprep.subr.bf16.mxu0 0
      %2063 = vmatpush1.bf16.msra.mxu0 0
      %2064 = vmatprep.subr.bf16.mxu0 0
      %2065 = vmatpush1.bf16.msra.mxu0 0
      %2066 = vmatprep.subr.bf16.mxu0 0
      %2067 = vmatpush1.bf16.msra.mxu0 0
      %2068 = vmatprep.subr.bf16.mxu0 0
      %2069 = vmatpush1.bf16.msra.mxu0 0
      %2070 = vmatprep.subr.bf16.mxu0 0
      %2071 = vmatpush1.bf16.msra.mxu0 0
      %2072 = vmatprep.subr.bf16.mxu0 0
      %2073 = vmatpush1.bf16.msra.mxu0 0
      %2074 = vmatprep.subr.bf16.mxu0 0
      %2075 = vmatpush1.bf16.msra.mxu0 0
      %2076 = vmatprep.subr.bf16.mxu0 0
      %2077 = vmatpush1.bf16.msra.mxu0 0
      %2078 = vmatprep.subr.bf16.mxu0 0
      %2079 = vmatpush1.bf16.msra.mxu0 0
      %2080 = vmatprep.subr.bf16.mxu0 0
      %2081 = vmatpush1.bf16.msra.mxu0 0
      %2082 = vmatprep.subr.bf16.mxu0 0
      %2083 = vmatpush1.bf16.msra.mxu0 0
      %2084 = vmatprep.subr.bf16.mxu0 0
      %2085 = vmatpush1.bf16.msra.mxu0 0
      %2086 = vmatprep.subr.bf16.mxu0 0
      %2087 = vmatpush1.bf16.msra.mxu0 0
      %2088 = vmatprep.subr.bf16.mxu0 0
      %2089 = vmatpush1.bf16.msra.mxu0 0
      %2090 = vmatprep.subr.bf16.mxu0 0
      %2091 = vmatpush1.bf16.msra.mxu0 0
      %2092 = vmatprep.mubr.bf16.mxu0 0
      %2093 = vmatmul.mubr.bf16.gmra.mrb[0].mxu0 %v2049
      %v2094 = vpop.f32.mrb[0].mxu0
      %v2095 = vadd.f32 0.0, %v2094
      %v2096 = vpop.f32.mrb[0].mxu0
      %v2097 = vadd.f32 0.0, %v2096
      %v2098 = vpop.f32.mrb[0].mxu0
      %v2099 = vpop.f32.mrb[0].mxu0
      %2100 = vdwg.mxu0
      %2101 = vmatprep.subr.bf16.mxu0 0
      %2102 = vmatpush1.bf16.msra.mxu0 %v2058
      %2103 = vmatprep.subr.bf16.mxu0 0
      %2104 = vmatpush1.bf16.msra.mxu0 0
      %2105 = vmatprep.subr.bf16.mxu0 0
      %2106 = vmatpush1.bf16.msra.mxu0 0
      %2107 = vmatprep.subr.bf16.mxu0 0
      %2108 = vmatpush1.bf16.msra.mxu0 0
      %2109 = vmatprep.subr.bf16.mxu0 0
      %2110 = vmatpush1.bf16.msra.mxu0 0
      %2111 = vmatprep.subr.bf16.mxu0 0
      %2112 = vmatpush1.bf16.msra.mxu0 0
      %2113 = vmatprep.subr.bf16.mxu0 0
      %2114 = vmatpush1.bf16.msra.mxu0 0
      %2115 = vmatprep.subr.bf16.mxu0 0
      %2116 = vmatpush1.bf16.msra.mxu0 0
      %2117 = vmatprep.subr.bf16.mxu0 0
      %2118 = vmatpush1.bf16.msra.mxu0 0
      %2119 = vmatprep.subr.bf16.mxu0 0
      %2120 = vmatpush1.bf16.msra.mxu0 0
      %2121 = vmatprep.subr.bf16.mxu0 0
      %2122 = vmatpush1.bf16.msra.mxu0 0
      %2123 = vmatprep.subr.bf16.mxu0 0
      %2124 = vmatpush1.bf16.msra.mxu0 0
      %2125 = vmatprep.subr.bf16.mxu0 0
      %2126 = vmatpush1.bf16.msra.mxu0 0
      %2127 = vmatprep.subr.bf16.mxu0 0
      %2128 = vmatpush1.bf16.msra.mxu0 0
      %2129 = vmatprep.subr.bf16.mxu0 0
      %2130 = vmatpush1.bf16.msra.mxu0 0
      %2131 = vmatprep.subr.bf16.mxu0 0
      %2132 = vmatpush1.bf16.msra.mxu0 0
      %2133 = vmatprep.mubr.bf16.mxu0 0
      %2134 = vmatmul.mubr.bf16.gmra.mrb[0].mxu0 %v2049
      %v2135 = vpop.f32.mrb[0].mxu0
      %v2136 = vadd.f32 0.0, %v2135
      %v2137 = vpop.f32.mrb[0].mxu0
      %v2138 = vpop.f32.mrb[0].mxu0
      %v2139 = vpop.f32.mrb[0].mxu0
      %2140 = vdwg.mxu0
      %v2141 = vadd.f32 %v2031, %v2095
      %v2142 = vadd.f32 %v2032, %v2097
      %v2143 = vadd.f32 %v2033, %v2136
      %v2144 = vpack.c.bf16 %v2141, %v2141
      %v2145 = vpack.c.bf16 %v2142, %v2142
      %v2146 = vpack.c.bf16 %v2143, %v2143
      %v2150 = vunpack.c.l.b16 %v2144
      %v2151 = vunpack.c.l.b16 %v2145
      %v2152 = vunpack.c.l.b16 %v2146
      %v2153 = vpack.c.b16 %v2151, %v2150
      %v2154 = vpack.c.b16 %v2152, %v2152
      %s2157 = scalar_lea.vmem %s333, 36
      %2158 = vst [vmem:[%s2157] sm:$0xff] %v2153
      %2159 = vst [vmem:[%s2157 + $0x8] sm:$0xf] %v2154
      %v2160 = vmul.f32 %v2141, %v436
      %v2161 = vmul.f32 %v2142, %v437
      %v2162 = vmul.f32 %v2143, %v438
      %v2163 = vadd.f32 %v2160, %v2161
      %v2164 = vadd.f32 %v2163, %v2162
      %2165 = vadd.xlane.f32.xlu0 %v2164
      %v2166 = vpop.xlane.xlu0 %2165
      %v2167 = vmul.f32 %v2166, %v890
      %v2168 = vsub.f32 %v2141, %v2167
      %v2169 = vsub.f32 %v2142, %v2167
      %v2170 = vsub.f32 %v2143, %v2167
      %v2171 = vmul.f32 %v2168, %v436
      %v2172 = vmul.f32 %v2169, %v437
      %v2173 = vmul.f32 %v2170, %v438
      %v2174 = vmul.f32 %v2171, %v2171
      %v2175 = vmul.f32 %v2172, %v2172
      %v2176 = vmul.f32 %v2173, %v2173
      %v2177 = vadd.f32 %v2174, %v2175
      %v2178 = vadd.f32 %v2177, %v2176
      %2179 = vadd.xlane.f32.xlu0 %v2178
      %v2180 = vpop.xlane.xlu0 %2179
      %v2181 = vsel %vm905, %v2166, %v2180
      %s2182 = scalar_lea.vmem %s346, 24
      %2183 = vst.msk [vmem:[%s2182] sm:$0xff] %vm907, %v2181
      %s2184 = smul.u32 3, %s22
      %p2185 = scmp.lt.s32.totalorder %s21, 1
      %s2186 = scalar_select %p2185, %s21, 1
      %p2187 = scmp.lt.s32.totalorder %s23, 0
      %s2188 = scalar_select %p2187, %s23, 0
      %p2189 = scmp.lt.s32.totalorder %s2184, 2
      %s2190 = scalar_select %p2189, %s2184, 2
      %s2191 = smul.addr %s2188, 3
      %s2192 = sadd.s32 %s2190, %s2191
      %s2193 = smul.addr %s2186, 12
      %s2194 = sadd.s32 %s2192, %s2193
      %s2195 = smul.addr %s2194, 4
      %s2196 = scalar_lea.vmem %s3, %s2195
      %p2197 = scmp.lt.s32.totalorder %s21, 1
      %s2198 = scalar_select %p2197, %s21, 1
      %p2199 = scmp.lt.s32.totalorder %s22, 0
      %s2200 = scalar_select %p2199, %s22, 0
      %p2201 = scmp.lt.s32.totalorder %s23, 0
      %s2202 = scalar_select %p2201, %s23, 0
      %s2203 = smul.addr %s2200, 4
      %s2204 = sadd.s32 %s2202, %s2203
      %s2205 = smul.addr %s2198, 4
      %s2206 = sadd.s32 %s2204, %s2205
      %s2207 = smul.addr %s2206, 8
      %s2208 = scalar_lea.vmem %s4, %s2207
      // Predicated region
      $region33: #{decoder_block.2} parent=31 // pred_check
        %p2209 = pneg %p143
      $region34: #{decoder_block.2} parent=31 // pred_check_branch
        %2211 = sbr.rel (%p2209) target = $region36
      $region35: #{decoder_block.2} parent=31 // pred_region
        %s2212 = smul.u32 3, %s22
      $region36: #{decoder_block.2} parent=31 // pred_fallthru
        _
      // Predicated region
      $region37: #{decoder_block.2} parent=31 // pred_check
        %p2213 = pneg %p173
      $region38: #{decoder_block.2} parent=31 // pred_check_branch
        %2215 = sbr.rel (%p2213) target = $region40
      $region39: #{decoder_block.2} parent=31 // pred_region
        _
      $region40: #{decoder_block.2} parent=31 // pred_fallthru
        _
    $region32: #{decoder_block.2} parent=5 // pred_fallthru
      _
    %p2216 = scmp.le.s32.totalorder 2, %s11
    // Predicated region
    $region41: #{decoder_block.2} parent=5 // pred_check
      %p2217 = pneg %p2216
    $region42: #{decoder_block.2} parent=5 // pred_check_branch
      %2219 = sbr.rel (%p2217) target = $region44
    $region43: #{decoder_block.2} parent=5 // pred_region
      %s2220 = ssub.s32 %s11, 2
      // Predicated region
      $region45: #{decoder_block.2} parent=43 // pred_check
        %p2221 = pneg %p149
      $region46: #{decoder_block.2} parent=43 // pred_check_branch
        %2223 = sbr.rel (%p2221) target = $region48
      $region47: #{decoder_block.2} parent=43 // pred_region
        %s2224 = smul.u32 3, %s25
        %p2225 = scmp.lt.s32.totalorder %s24, 1
        %s2226 = scalar_select %p2225, %s24, 1
        %p2227 = scmp.lt.s32.totalorder %s26, 0
        %s2228 = scalar_select %p2227, %s26, 0
        %p2229 = scmp.lt.s32.totalorder %s2224, 2
        %s2230 = scalar_select %p2229, %s2224, 2
        %s2231 = smul.addr %s2228, 3
        %s2232 = sadd.s32 %s2230, %s2231
        %s2233 = smul.addr %s2226, 12
        %s2234 = sadd.s32 %s2232, %s2233
        %s2235 = smul.addr %s2234, 4
        %s2236 = scalar_lea.vmem %s3, %s2235
      $region48: #{decoder_block.2} parent=43 // pred_fallthru
        _
      // Predicated region
      $region49: #{decoder_block.2} parent=43 // pred_check
        %p2237 = pneg %p179
      $region50: #{decoder_block.2} parent=43 // pred_check_branch
        %2239 = sbr.rel (%p2237) target = $region52
      $region51: #{decoder_block.2} parent=43 // pred_region
        %p2240 = scmp.lt.s32.totalorder %s24, 1
        %s2241 = scalar_select %p2240, %s24, 1
        %p2242 = scmp.lt.s32.totalorder %s25, 0
        %s2243 = scalar_select %p2242, %s25, 0
        %p2244 = scmp.lt.s32.totalorder %s26, 0
        %s2245 = scalar_select %p2244, %s26, 0
        %s2246 = smul.addr %s2243, 4
        %s2247 = sadd.s32 %s2245, %s2246
        %s2248 = smul.addr %s2241, 4
        %s2249 = sadd.s32 %s2247, %s2248
        %s2250 = smul.addr %s2249, 8
        %s2251 = scalar_lea.vmem %s4, %s2250
      $region52: #{decoder_block.2} parent=43 // pred_fallthru
        _
    $region44: #{decoder_block.2} parent=5 // pred_fallthru
      _
  $region6: #{decoder_block.2} parent=0 // loop_footer
    %s15 = sadd.s32 1, %s11
  $region7: #{decoder_block.2} parent=0 // loop_footer_branch
    %10 = sbr.rel target = $region3
  $region8: #{decoder_block.2} parent=0 // loop_exit
    _

</llo_original>
